<compile_context>
chip_gen: v7x
topology: tpu7x:2x2x1
jax: 0.10.0
libtpu: 0.0.40
codegen_flags: <defaults>
</compile_context>

<pallas_src>
import math
import numpy as np
import jax
import jax.numpy as jnp
from jax import lax
from jax.experimental import pallas as pl
from jax.experimental.pallas import tpu as pltpu

# ----- problem sizes (small, consistent with the module) -------------------- #
N_NODES = 8
IN_CH   = 32          # must equal D_MODEL (residual x + attention_output1)
D_MODEL = 32
D_K     = 4
D_V     = 4           # must equal D_K (att_ij @ V_j needs square att)
H       = 4           # num_heads

# ----- batching / fusion ----------------------------------------------------- #
G     = 4                     # graphs fused per grid step  -> 128-row matmuls
BATCH = 8                     # total graphs
NB    = BATCH // G            # grid size (2: one step per v7x core)
GN    = G * N_NODES           # 32   fused node axis per step
GND   = GN * D_K              # 128  fused (node, d_k-slice) axis per step
QKV_C = 3 * H * D_K           # 48   compact qkv projection width

# ----- packed parameter + constant buffer: one [PACK_ROWS, 128] f32 ---------- #
OFF_R    = 0                  # R   [GND, GN]  replicate-rows-by-d_k / group-sum
OFF_RT   = OFF_R + GND        # RT  [GN, GND]  collapse rows (R transposed)
OFF_M48  = OFF_RT + GN        # M48 [GND, 48]  per-row d_k-block select mask
OFF_C48  = OFF_M48 + GND      # C48 [48, 3H]   column collapse over the d_k axis
OFF_TH   = OFF_C48 + QKV_C    # TH  [H, D_K*H] tile H head columns along lanes
MHA_ROWS = D_MODEL + QKV_C + D_V * H          # We.T(32) + Wqkv(48) + Wo(16) = 96
OFF_MHA1 = OFF_TH + 8
OFF_MHA2 = OFF_MHA1 + MHA_ROWS
OFF_WM   = OFF_MHA2 + MHA_ROWS
OFF_VEC  = OFF_WM + D_MODEL   # bo1,bo2,g1,b1,g2,b2,g3,b3,bm (one row each)
PACK_ROWS = OFF_VEC + 16                       # 584 (multiple of 8)
PACK_COLS = 128


# ------------------------------ kernel helpers ------------------------------ #
def _dot(a, b):
    return jnp.dot(a, b, preferred_element_type=jnp.float32)


def _dot_nt(a, b):
    # a @ b.T without an explicit transpose (contract last dims)
    return lax.dot_general(a, b, (((1,), (1,)), ((), ())),
                           preferred_element_type=jnp.float32)


def _layer_norm(x, g, b, eps=1e-5):
    mu = jnp.mean(x, axis=-1, keepdims=True)
    var = jnp.mean((x - mu) ** 2, axis=-1, keepdims=True)
    return (x - mu) * lax.rsqrt(var + eps) * g + b


# --------------------------------- kernel ----------------------------------- #
def decoder_layer_kernel(x_ref, a_ref, p_ref, o_ref):
    """One fused step: x [GN,C], block-diag A [GN,GN], packed [PACK_ROWS,128]."""
    # Constant 0/1 layout matrices (precomputed, resident in VMEM).
    R   = p_ref[OFF_R:OFF_R + GND, 0:GN]            # [GND, GN]
    RT  = p_ref[OFF_RT:OFF_RT + GN, 0:GND]          # [GN, GND]
    M48 = p_ref[OFF_M48:OFF_M48 + GND, 0:QKV_C]     # [GND, 48]
    SM  = M48[:, 0:D_K * H]                         # [GND, 16]
    C48 = p_ref[OFF_C48:OFF_C48 + QKV_C, 0:3 * H]   # [48, 12]
    TH  = p_ref[OFF_TH:OFF_TH + H, 0:D_K * H]       # [4, 16]

    vec = p_ref[OFF_VEC:OFF_VEC + 16, 0:D_MODEL]
    bo1, bo2 = vec[0:1, :], vec[1:2, :]
    g1, b1 = vec[2:3, :], vec[3:4, :]
    g2, b2 = vec[4:5, :], vec[5:6, :]
    g3, b3 = vec[6:7, :], vec[7:8, :]
    bm = vec[8:9, :]

    # Adjacency (block-diagonal over the fused graphs) expanded to the
    # (node, d_k-slice) row axis: a_rep[(g,i,a),(g',j)] = A[g==g'][i,j].
    a_rep = _dot(R, a_ref[...])                     # [GND, GN]

    def mha(xin, base, bo):
        we_t = p_ref[base:base + D_MODEL, 0:D_MODEL]                          # [D, D]
        w48  = p_ref[base + D_MODEL:base + D_MODEL + QKV_C, 0:D_MODEL]        # [48, D]
        wo   = p_ref[base + D_MODEL + QKV_C:base + MHA_ROWS, 0:D_MODEL]       # [16, D]

        xe = _dot(xin, we_t)                                                  # [GN, D]
        # compact QKV projection (Q pre-scaled by 1/sqrt(d_k) in the weights),
        # then row-expand by d_k, select the a-th block, collapse columns.
        qkvc = _dot_nt(xe, w48)                                               # [GN, 48]
        qkvf = _dot(_dot(R, qkvc) * M48, C48)                                 # [GND, 3H]
        qf, kf, vf = qkvf[:, 0:H], qkvf[:, H:2 * H], qkvf[:, 2 * H:3 * H]

        s = _dot_nt(qf, kf)                          # [GND, GND] scores[(i,a),(j,b)]
        e = jnp.exp(s - jnp.max(s, axis=-1, keepdims=True))   # exact for per-b softmax
        den = _dot(e, R)                                                      # [GND, GN]
        den = den * a_rep + (1.0 - a_rep)            # masked / cross-graph cols -> 1 (no inf*0)
        w = a_rep * pl.reciprocal(den, approx=True)                           # [GND, GN]
        p_att = e * _dot_nt(w, R)                    # per-edge softmax over b, adjacency-masked
        aggf = _dot(p_att, vf)                                                # [GND, H]
        comb = _dot(RT, _dot(aggf, TH) * SM)         # [GN, d_k*H]  columns a*H + h
        # TODO(synk): F.dropout(p=0.6) on the combined heads is skipped (eval mode).
        return xe + _dot(comb, wo) + bo

    x = x_ref[...]                                                            # [GN, C]
    x = _layer_norm(x + mha(x, OFF_MHA1, bo1), g1, b1)
    x = _layer_norm(x + mha(x, OFF_MHA2, bo2), g2, b2)
    mlp = _dot(x, p_ref[OFF_WM:OFF_WM + D_MODEL, 0:D_MODEL]) + bm
    o_ref[...] = _layer_norm(x + mlp, g3, b3)


@jax.jit
def decoder_layer_pallas(x_flat, a_bd, packed):
    nb = a_bd.shape[0]
    return pl.pallas_call(
        decoder_layer_kernel,
        out_shape=jax.ShapeDtypeStruct((nb * GN, D_MODEL), jnp.float32),
        grid=(nb,),
        in_specs=[
            pl.BlockSpec((GN, IN_CH), lambda b: (b, 0)),
            pl.BlockSpec((None, GN, GN), lambda b: (b, 0, 0)),
            pl.BlockSpec((PACK_ROWS, PACK_COLS), lambda b: (0, 0)),  # resident
        ],
        out_specs=pl.BlockSpec((GN, D_MODEL), lambda b: (b, 0)),
        compiler_params=pltpu.CompilerParams(
            dimension_semantics=("parallel",)),
    )(x_flat, a_bd, packed)


# --------------------- parameter init & packing (host side) ----------------- #
def init_params(key):
    ks = jax.random.split(key, 16)
    def w(k, shape):
        s = 1.0 / math.sqrt(shape[-1])
        return jax.random.uniform(k, shape, jnp.float32, -s, s)
    p, i = {}, 0
    for m in (1, 2):
        p[f'We{m}'] = w(ks[i], (D_MODEL, IN_CH)); i += 1
        p[f'Wq{m}'] = w(ks[i], (D_K * H, D_MODEL)); i += 1
        p[f'Wk{m}'] = w(ks[i], (D_K * H, D_MODEL)); i += 1
        p[f'Wv{m}'] = w(ks[i], (D_V * H, D_MODEL)); i += 1
        p[f'Wo{m}'] = w(ks[i], (D_MODEL, H * D_V)); i += 1
        p[f'bo{m}'] = w(ks[i], (D_MODEL,)); i += 1
    p['Wm'] = w(ks[i], (D_MODEL, D_MODEL)); i += 1
    p['bm'] = w(ks[i], (D_MODEL,)); i += 1
    for j in (1, 2, 3):
        p[f'g{j}'] = jnp.ones((D_MODEL,), jnp.float32)
        p[f'b{j}'] = jnp.zeros((D_MODEL,), jnp.float32)
    return p


def pack_params(p):
    """Pack weights/biases AND the constant 0/1 layout matrices into one buffer."""
    pack = np.zeros((PACK_ROWS, PACK_COLS), np.float32)

    # --- constants ---
    r = np.arange(GND)
    R = (r[:, None] // D_K == np.arange(GN)[None, :]).astype(np.float32)          # [GND, GN]
    c48 = np.arange(QKV_C)
    M48 = (((c48[None, :] % (H * D_K)) // H) == (r[:, None] % D_K)).astype(np.float32)
    c12 = np.arange(3 * H)
    C48 = ((c48[:, None] // (H * D_K) == c12[None, :] // H) &
           (c48[:, None] % H == c12[None, :] % H)).astype(np.float32)              # [48, 12]
    TH = (np.arange(H)[:, None] == (np.arange(D_K * H)[None, :] % H)).astype(np.float32)

    pack[OFF_R:OFF_R + GND, 0:GN] = R
    pack[OFF_RT:OFF_RT + GN, 0:GND] = R.T
    pack[OFF_M48:OFF_M48 + GND, 0:QKV_C] = M48
    pack[OFF_C48:OFF_C48 + QKV_C, 0:3 * H] = C48
    pack[OFF_TH:OFF_TH + H, 0:D_K * H] = TH

    # --- weights ---
    def qkv48(Wq, Wk, Wv):
        # rows c = qkv*16 + a*H + h  ->  W_{qkv}[h*d_k + a, :]; Q pre-scaled by 1/sqrt(d_k)
        def re(W, scale=1.0):
            return (np.asarray(W).reshape(H, D_K, D_MODEL).transpose(1, 0, 2)
                      .reshape(D_K * H, D_MODEL)) * scale
        return np.concatenate([re(Wq, 1.0 / math.sqrt(D_K)), re(Wk), re(Wv)], axis=0)

    def perm_o(W):
        # W_o[d, h*d_v + a]  ->  wo[a*H + h, d]
        return (np.asarray(W).reshape(D_MODEL, H, D_V).transpose(2, 1, 0)
                  .reshape(D_V * H, D_MODEL))

    for m, base in ((1, OFF_MHA1), (2, OFF_MHA2)):
        pack[base:base + D_MODEL, 0:D_MODEL] = np.asarray(p[f'We{m}']).T
        pack[base + D_MODEL:base + D_MODEL + QKV_C, 0:D_MODEL] = \
            qkv48(p[f'Wq{m}'], p[f'Wk{m}'], p[f'Wv{m}'])
        pack[base + D_MODEL + QKV_C:base + MHA_ROWS, 0:D_MODEL] = perm_o(p[f'Wo{m}'])
    pack[OFF_WM:OFF_WM + D_MODEL, 0:D_MODEL] = np.asarray(p['Wm']).T
    for i, k in enumerate(('bo1', 'bo2', 'g1', 'b1', 'g2', 'b2', 'g3', 'b3', 'bm')):
        pack[OFF_VEC + i, 0:D_MODEL] = np.asarray(p[k])
    return jnp.asarray(pack)


# ------------------------------ pure-JAX reference -------------------------- #
def _mha_ref(x, A, We, Wq, Wk, Wv, Wo, bo):
    xe = x @ We.T
    split = lambda z, d: z.reshape(z.shape[0], H, d).transpose(0, 2, 1)   # [N, d, H]
    Q, K, V = split(xe @ Wq.T, D_K), split(xe @ Wk.T, D_K), split(xe @ Wv.T, D_V)
    S = jnp.einsum('iah,jbh->ijab', Q, K) / math.sqrt(D_K)
    P = jax.nn.softmax(S, axis=-1)
    M = jnp.einsum('ijab,jbh->ijah', P, V)
    agg = jnp.einsum('ij,ijah->iah', A, M)
    comb = agg.transpose(0, 2, 1).reshape(x.shape[0], H * D_V)
    return xe + comb @ Wo.T + bo


def decoder_ref(x, A, p):
    h1 = _mha_ref(x, A, p['We1'], p['Wq1'], p['Wk1'], p['Wv1'], p['Wo1'], p['bo1'])
    x = _layer_norm(x + h1, p['g1'], p['b1'])
    h2 = _mha_ref(x, A, p['We2'], p['Wq2'], p['Wk2'], p['Wv2'], p['Wo2'], p['bo2'])
    x = _layer_norm(x + h2, p['g2'], p['b2'])
    mlp = x @ p['Wm'].T + p['bm']
    return _layer_norm(x + mlp, p['g3'], p['b3'])


# ------------------------------------ main ----------------------------------- #
if __name__ == "__main__":
    key = jax.random.PRNGKey(0)
    kx, kp, ka = jax.random.split(key, 3)

    x = jax.random.normal(kx, (BATCH, N_NODES, IN_CH), jnp.float32)

    # Random directed graphs (dense adjacency A[i, j] = 1 iff edge j -> i) + self-loops.
    A = (jax.random.uniform(ka, (BATCH, N_NODES, N_NODES)) < 0.4).astype(jnp.float32)
    A = jnp.maximum(A, jnp.eye(N_NODES, dtype=jnp.float32)[None])

    params = init_params(kp)
    packed = pack_params(params)

    # Fused-batch inputs: stacked node features + per-step block-diagonal adjacency.
    x_flat = x.reshape(BATCH * N_NODES, IN_CH)
    A_np = np.asarray(A).reshape(NB, G, N_NODES, N_NODES)
    A_bd = np.zeros((NB, GN, GN), np.float32)
    for b in range(NB):
        for g in range(G):
            A_bd[b, g * N_NODES:(g + 1) * N_NODES,
                 g * N_NODES:(g + 1) * N_NODES] = A_np[b, g]
    A_bd = jnp.asarray(A_bd)

    out = decoder_layer_pallas(x_flat, A_bd, packed)
    out = jax.block_until_ready(out).reshape(BATCH, N_NODES, D_MODEL)

    ref = jax.vmap(lambda xb, ab: decoder_ref(xb, ab, params))(x, A)
    assert out.shape == (BATCH, N_NODES, D_MODEL)
    err = float(jnp.abs(out - ref).max())
    assert jnp.allclose(out, ref, atol=2e-3, rtol=2e-3), f"max abs err {err}"
    print("KERNEL_OK")
</pallas_src>

<mosaic_0001>
module attributes {stable_mosaic.version = 11 : i64} {
  func.func @decoder_layer_kernel(%arg0: i32, %arg1: memref<32x32xf32, #tpu.memory_space<vmem>>, %arg2: memref<1x32x32xf32, #tpu.memory_space<vmem>>, %arg3: memref<584x128xf32, #tpu.memory_space<vmem>>, %arg4: memref<32x32xf32, #tpu.memory_space<vmem>>) attributes {dimension_semantics = [#tpu.dimension_semantics<parallel>], iteration_bounds = array<i64: 2>, scalar_prefetch = 0 : i64, scratch_operands = 0 : i64, tpu.core_type = #tpu.core_type<tc>, window_params = [{transform_indices = @transform_0, window_bounds = array<i64: 32, 32>}, {transform_indices = @transform_1, window_bounds = array<i64: 1, 32, 32>}, {pipeline_mode = #tpu.pipeline_mode<synchronous>, transform_indices = @transform_2, window_bounds = array<i64: 584, 128>}, {transform_indices = @transform_3, window_bounds = array<i64: 32, 32>}]} {
    %c0 = arith.constant 0 : index
    %c0_0 = arith.constant 0 : index
    %0 = vector.load %arg3[%c0, %c0_0] : memref<584x128xf32, #tpu.memory_space<vmem>>, vector<128x32xf32>
    %c128 = arith.constant 128 : index
    %c0_1 = arith.constant 0 : index
    %1 = vector.load %arg3[%c128, %c0_1] : memref<584x128xf32, #tpu.memory_space<vmem>>, vector<32x128xf32>
    %c160 = arith.constant 160 : index
    %c0_2 = arith.constant 0 : index
    %2 = vector.load %arg3[%c160, %c0_2] : memref<584x128xf32, #tpu.memory_space<vmem>>, vector<128x48xf32>
    %3 = vector.extract_strided_slice %2 {offsets = [0, 0], sizes = [128, 16], strides = [1, 1]} : vector<128x48xf32> to vector<128x16xf32>
    %c288 = arith.constant 288 : index
    %c0_3 = arith.constant 0 : index
    %4 = vector.load %arg3[%c288, %c0_3] : memref<584x128xf32, #tpu.memory_space<vmem>>, vector<48x12xf32>
    %c336 = arith.constant 336 : index
    %c0_4 = arith.constant 0 : index
    %5 = vector.load %arg3[%c336, %c0_4] : memref<584x128xf32, #tpu.memory_space<vmem>>, vector<4x16xf32>
    %c568 = arith.constant 568 : index
    %c0_5 = arith.constant 0 : index
    %6 = vector.load %arg3[%c568, %c0_5] : memref<584x128xf32, #tpu.memory_space<vmem>>, vector<16x32xf32>
    %7 = vector.extract_strided_slice %6 {offsets = [0, 0], sizes = [1, 32], strides = [1, 1]} : vector<16x32xf32> to vector<1x32xf32>
    %8 = vector.extract_strided_slice %6 {offsets = [1, 0], sizes = [1, 32], strides = [1, 1]} : vector<16x32xf32> to vector<1x32xf32>
    %9 = vector.extract_strided_slice %6 {offsets = [2, 0], sizes = [1, 32], strides = [1, 1]} : vector<16x32xf32> to vector<1x32xf32>
    %10 = vector.extract_strided_slice %6 {offsets = [3, 0], sizes = [1, 32], strides = [1, 1]} : vector<16x32xf32> to vector<1x32xf32>
    %11 = vector.extract_strided_slice %6 {offsets = [4, 0], sizes = [1, 32], strides = [1, 1]} : vector<16x32xf32> to vector<1x32xf32>
    %12 = vector.extract_strided_slice %6 {offsets = [5, 0], sizes = [1, 32], strides = [1, 1]} : vector<16x32xf32> to vector<1x32xf32>
    %13 = vector.extract_strided_slice %6 {offsets = [6, 0], sizes = [1, 32], strides = [1, 1]} : vector<16x32xf32> to vector<1x32xf32>
    %14 = vector.extract_strided_slice %6 {offsets = [7, 0], sizes = [1, 32], strides = [1, 1]} : vector<16x32xf32> to vector<1x32xf32>
    %15 = vector.extract_strided_slice %6 {offsets = [8, 0], sizes = [1, 32], strides = [1, 1]} : vector<16x32xf32> to vector<1x32xf32>
    %c0_6 = arith.constant 0 : index
    %c0_7 = arith.constant 0 : index
    %c0_8 = arith.constant 0 : index
    %16 = vector.load %arg2[%c0_6, %c0_7, %c0_8] : memref<1x32x32xf32, #tpu.memory_space<vmem>>, vector<1x32x32xf32>
    %17 = vector.shape_cast %16 : vector<1x32x32xf32> to vector<32x32xf32>
    %cst = arith.constant dense<0.000000e+00> : vector<128x32xf32>
    %18 = tpu.matmul %0, %17, %cst {dimension_numbers = #tpu.dot_dimension_numbers<[1], [0], [0], [1], [0, 0, 1, 1], [], []>} : vector<128x32xf32>, vector<32x32xf32>, vector<128x32xf32> -> vector<128x32xf32>
    %c0_9 = arith.constant 0 : index
    %c0_10 = arith.constant 0 : index
    %19 = vector.load %arg1[%c0_9, %c0_10] : memref<32x32xf32, #tpu.memory_space<vmem>>, vector<32x32xf32>
    %c344 = arith.constant 344 : index
    %c0_11 = arith.constant 0 : index
    %20 = vector.load %arg3[%c344, %c0_11] : memref<584x128xf32, #tpu.memory_space<vmem>>, vector<32x32xf32>
    %c376 = arith.constant 376 : index
    %c0_12 = arith.constant 0 : index
    %21 = vector.load %arg3[%c376, %c0_12] : memref<584x128xf32, #tpu.memory_space<vmem>>, vector<48x32xf32>
    %c424 = arith.constant 424 : index
    %c0_13 = arith.constant 0 : index
    %22 = vector.load %arg3[%c424, %c0_13] : memref<584x128xf32, #tpu.memory_space<vmem>>, vector<16x32xf32>
    %cst_14 = arith.constant dense<0.000000e+00> : vector<32x32xf32>
    %23 = tpu.matmul %19, %20, %cst_14 {dimension_numbers = #tpu.dot_dimension_numbers<[1], [0], [0], [1], [0, 0, 1, 1], [], []>} : vector<32x32xf32>, vector<32x32xf32>, vector<32x32xf32> -> vector<32x32xf32>
    %cst_15 = arith.constant dense<0.000000e+00> : vector<32x48xf32>
    %24 = tpu.matmul %23, %21, %cst_15 {dimension_numbers = #tpu.dot_dimension_numbers<[1], [1], [0], [0], [0, 0, 1, 0], [], []>} : vector<32x32xf32>, vector<48x32xf32>, vector<32x48xf32> -> vector<32x48xf32>
    %cst_16 = arith.constant dense<0.000000e+00> : vector<128x48xf32>
    %25 = tpu.matmul %0, %24, %cst_16 {dimension_numbers = #tpu.dot_dimension_numbers<[1], [0], [0], [1], [0, 0, 1, 1], [], []>} : vector<128x32xf32>, vector<32x48xf32>, vector<128x48xf32> -> vector<128x48xf32>
    %26 = arith.mulf %25, %2 : vector<128x48xf32>
    %cst_17 = arith.constant dense<0.000000e+00> : vector<128x12xf32>
    %27 = tpu.matmul %26, %4, %cst_17 {dimension_numbers = #tpu.dot_dimension_numbers<[1], [0], [0], [1], [0, 0, 1, 1], [], []>} : vector<128x48xf32>, vector<48x12xf32>, vector<128x12xf32> -> vector<128x12xf32>
    %28 = vector.extract_strided_slice %27 {offsets = [0, 0], sizes = [128, 4], strides = [1, 1]} : vector<128x12xf32> to vector<128x4xf32>
    %29 = vector.extract_strided_slice %27 {offsets = [0, 4], sizes = [128, 4], strides = [1, 1]} : vector<128x12xf32> to vector<128x4xf32>
    %30 = vector.extract_strided_slice %27 {offsets = [0, 8], sizes = [128, 4], strides = [1, 1]} : vector<128x12xf32> to vector<128x4xf32>
    %cst_18 = arith.constant dense<0.000000e+00> : vector<128x128xf32>
    %31 = tpu.matmul %28, %29, %cst_18 {dimension_numbers = #tpu.dot_dimension_numbers<[1], [1], [0], [0], [0, 0, 1, 0], [], []>} : vector<128x4xf32>, vector<128x4xf32>, vector<128x128xf32> -> vector<128x128xf32>
    %cst_19 = arith.constant dense<0xFF800000> : vector<128xf32>
    %32 = vector.multi_reduction <maximumf>, %31, %cst_19 [1] : vector<128x128xf32> to vector<128xf32>
    %33 = vector.shape_cast %32 : vector<128xf32> to vector<128x1xf32>
    %34 = vector.broadcast %33 : vector<128x1xf32> to vector<128x128xf32>
    %35 = arith.subf %31, %34 : vector<128x128xf32>
    %36 = math.exp %35 : vector<128x128xf32>
    %cst_20 = arith.constant dense<0.000000e+00> : vector<128x32xf32>
    %37 = tpu.matmul %36, %0, %cst_20 {dimension_numbers = #tpu.dot_dimension_numbers<[1], [0], [0], [1], [0, 0, 1, 1], [], []>} : vector<128x128xf32>, vector<128x32xf32>, vector<128x32xf32> -> vector<128x32xf32>
    %38 = arith.mulf %37, %18 : vector<128x32xf32>
    %cst_21 = arith.constant 1.000000e+00 : f32
    %39 = vector.broadcast %cst_21 : f32 to vector<128x32xf32>
    %40 = arith.subf %39, %18 : vector<128x32xf32>
    %41 = arith.addf %38, %40 : vector<128x32xf32>
    %42 = tpu.reciprocal %41 {approx = true} : vector<128x32xf32> -> vector<128x32xf32>
    %43 = arith.mulf %18, %42 : vector<128x32xf32>
    %cst_22 = arith.constant dense<0.000000e+00> : vector<128x128xf32>
    %44 = tpu.matmul %43, %0, %cst_22 {dimension_numbers = #tpu.dot_dimension_numbers<[1], [1], [0], [0], [0, 0, 1, 0], [], []>} : vector<128x32xf32>, vector<128x32xf32>, vector<128x128xf32> -> vector<128x128xf32>
    %45 = arith.mulf %36, %44 : vector<128x128xf32>
    %cst_23 = arith.constant dense<0.000000e+00> : vector<128x4xf32>
    %46 = tpu.matmul %45, %30, %cst_23 {dimension_numbers = #tpu.dot_dimension_numbers<[1], [0], [0], [1], [0, 0, 1, 1], [], []>} : vector<128x128xf32>, vector<128x4xf32>, vector<128x4xf32> -> vector<128x4xf32>
    %cst_24 = arith.constant dense<0.000000e+00> : vector<128x16xf32>
    %47 = tpu.matmul %46, %5, %cst_24 {dimension_numbers = #tpu.dot_dimension_numbers<[1], [0], [0], [1], [0, 0, 1, 1], [], []>} : vector<128x4xf32>, vector<4x16xf32>, vector<128x16xf32> -> vector<128x16xf32>
    %48 = arith.mulf %47, %3 : vector<128x16xf32>
    %cst_25 = arith.constant dense<0.000000e+00> : vector<32x16xf32>
    %49 = tpu.matmul %1, %48, %cst_25 {dimension_numbers = #tpu.dot_dimension_numbers<[1], [0], [0], [1], [0, 0, 1, 1], [], []>} : vector<32x128xf32>, vector<128x16xf32>, vector<32x16xf32> -> vector<32x16xf32>
    %cst_26 = arith.constant dense<0.000000e+00> : vector<32x32xf32>
    %50 = tpu.matmul %49, %22, %cst_26 {dimension_numbers = #tpu.dot_dimension_numbers<[1], [0], [0], [1], [0, 0, 1, 1], [], []>} : vector<32x16xf32>, vector<16x32xf32>, vector<32x32xf32> -> vector<32x32xf32>
    %51 = arith.addf %23, %50 : vector<32x32xf32>
    %52 = vector.broadcast %7 : vector<1x32xf32> to vector<32x32xf32>
    %53 = arith.addf %51, %52 : vector<32x32xf32>
    %54 = arith.addf %19, %53 : vector<32x32xf32>
    %cst_27 = arith.constant dense<0.000000e+00> : vector<32xf32>
    %55 = vector.multi_reduction <add>, %54, %cst_27 [1] : vector<32x32xf32> to vector<32xf32>
    %56 = vector.shape_cast %55 : vector<32xf32> to vector<32x1xf32>
    %cst_28 = arith.constant 3.200000e+01 : f32
    %57 = vector.broadcast %cst_28 : f32 to vector<32x1xf32>
    %58 = arith.divf %56, %57 : vector<32x1xf32>
    %59 = vector.broadcast %58 : vector<32x1xf32> to vector<32x32xf32>
    %60 = arith.subf %54, %59 : vector<32x32xf32>
    %61 = arith.mulf %60, %60 : vector<32x32xf32>
    %cst_29 = arith.constant dense<0.000000e+00> : vector<32xf32>
    %62 = vector.multi_reduction <add>, %61, %cst_29 [1] : vector<32x32xf32> to vector<32xf32>
    %63 = vector.shape_cast %62 : vector<32xf32> to vector<32x1xf32>
    %cst_30 = arith.constant 3.200000e+01 : f32
    %64 = vector.broadcast %cst_30 : f32 to vector<32x1xf32>
    %65 = arith.divf %63, %64 : vector<32x1xf32>
    %66 = vector.broadcast %58 : vector<32x1xf32> to vector<32x32xf32>
    %67 = arith.subf %54, %66 : vector<32x32xf32>
    %cst_31 = arith.constant 9.99999974E-6 : f32
    %68 = vector.broadcast %cst_31 : f32 to vector<32x1xf32>
    %69 = arith.addf %65, %68 : vector<32x1xf32>
    %70 = math.rsqrt %69 : vector<32x1xf32>
    %71 = vector.broadcast %70 : vector<32x1xf32> to vector<32x32xf32>
    %72 = arith.mulf %67, %71 : vector<32x32xf32>
    %73 = vector.broadcast %9 : vector<1x32xf32> to vector<32x32xf32>
    %74 = arith.mulf %72, %73 : vector<32x32xf32>
    %75 = vector.broadcast %10 : vector<1x32xf32> to vector<32x32xf32>
    %76 = arith.addf %74, %75 : vector<32x32xf32>
    %c440 = arith.constant 440 : index
    %c0_32 = arith.constant 0 : index
    %77 = vector.load %arg3[%c440, %c0_32] : memref<584x128xf32, #tpu.memory_space<vmem>>, vector<32x32xf32>
    %c472 = arith.constant 472 : index
    %c0_33 = arith.constant 0 : index
    %78 = vector.load %arg3[%c472, %c0_33] : memref<584x128xf32, #tpu.memory_space<vmem>>, vector<48x32xf32>
    %c520 = arith.constant 520 : index
    %c0_34 = arith.constant 0 : index
    %79 = vector.load %arg3[%c520, %c0_34] : memref<584x128xf32, #tpu.memory_space<vmem>>, vector<16x32xf32>
    %cst_35 = arith.constant dense<0.000000e+00> : vector<32x32xf32>
    %80 = tpu.matmul %76, %77, %cst_35 {dimension_numbers = #tpu.dot_dimension_numbers<[1], [0], [0], [1], [0, 0, 1, 1], [], []>} : vector<32x32xf32>, vector<32x32xf32>, vector<32x32xf32> -> vector<32x32xf32>
    %cst_36 = arith.constant dense<0.000000e+00> : vector<32x48xf32>
    %81 = tpu.matmul %80, %78, %cst_36 {dimension_numbers = #tpu.dot_dimension_numbers<[1], [1], [0], [0], [0, 0, 1, 0], [], []>} : vector<32x32xf32>, vector<48x32xf32>, vector<32x48xf32> -> vector<32x48xf32>
    %cst_37 = arith.constant dense<0.000000e+00> : vector<128x48xf32>
    %82 = tpu.matmul %0, %81, %cst_37 {dimension_numbers = #tpu.dot_dimension_numbers<[1], [0], [0], [1], [0, 0, 1, 1], [], []>} : vector<128x32xf32>, vector<32x48xf32>, vector<128x48xf32> -> vector<128x48xf32>
    %83 = arith.mulf %82, %2 : vector<128x48xf32>
    %cst_38 = arith.constant dense<0.000000e+00> : vector<128x12xf32>
    %84 = tpu.matmul %83, %4, %cst_38 {dimension_numbers = #tpu.dot_dimension_numbers<[1], [0], [0], [1], [0, 0, 1, 1], [], []>} : vector<128x48xf32>, vector<48x12xf32>, vector<128x12xf32> -> vector<128x12xf32>
    %85 = vector.extract_strided_slice %84 {offsets = [0, 0], sizes = [128, 4], strides = [1, 1]} : vector<128x12xf32> to vector<128x4xf32>
    %86 = vector.extract_strided_slice %84 {offsets = [0, 4], sizes = [128, 4], strides = [1, 1]} : vector<128x12xf32> to vector<128x4xf32>
    %87 = vector.extract_strided_slice %84 {offsets = [0, 8], sizes = [128, 4], strides = [1, 1]} : vector<128x12xf32> to vector<128x4xf32>
    %cst_39 = arith.constant dense<0.000000e+00> : vector<128x128xf32>
    %88 = tpu.matmul %85, %86, %cst_39 {dimension_numbers = #tpu.dot_dimension_numbers<[1], [1], [0], [0], [0, 0, 1, 0], [], []>} : vector<128x4xf32>, vector<128x4xf32>, vector<128x128xf32> -> vector<128x128xf32>
    %cst_40 = arith.constant dense<0xFF800000> : vector<128xf32>
    %89 = vector.multi_reduction <maximumf>, %88, %cst_40 [1] : vector<128x128xf32> to vector<128xf32>
    %90 = vector.shape_cast %89 : vector<128xf32> to vector<128x1xf32>
    %91 = vector.broadcast %90 : vector<128x1xf32> to vector<128x128xf32>
    %92 = arith.subf %88, %91 : vector<128x128xf32>
    %93 = math.exp %92 : vector<128x128xf32>
    %cst_41 = arith.constant dense<0.000000e+00> : vector<128x32xf32>
    %94 = tpu.matmul %93, %0, %cst_41 {dimension_numbers = #tpu.dot_dimension_numbers<[1], [0], [0], [1], [0, 0, 1, 1], [], []>} : vector<128x128xf32>, vector<128x32xf32>, vector<128x32xf32> -> vector<128x32xf32>
    %95 = arith.mulf %94, %18 : vector<128x32xf32>
    %cst_42 = arith.constant 1.000000e+00 : f32
    %96 = vector.broadcast %cst_42 : f32 to vector<128x32xf32>
    %97 = arith.subf %96, %18 : vector<128x32xf32>
    %98 = arith.addf %95, %97 : vector<128x32xf32>
    %99 = tpu.reciprocal %98 {approx = true} : vector<128x32xf32> -> vector<128x32xf32>
    %100 = arith.mulf %18, %99 : vector<128x32xf32>
    %cst_43 = arith.constant dense<0.000000e+00> : vector<128x128xf32>
    %101 = tpu.matmul %100, %0, %cst_43 {dimension_numbers = #tpu.dot_dimension_numbers<[1], [1], [0], [0], [0, 0, 1, 0], [], []>} : vector<128x32xf32>, vector<128x32xf32>, vector<128x128xf32> -> vector<128x128xf32>
    %102 = arith.mulf %93, %101 : vector<128x128xf32>
    %cst_44 = arith.constant dense<0.000000e+00> : vector<128x4xf32>
    %103 = tpu.matmul %102, %87, %cst_44 {dimension_numbers = #tpu.dot_dimension_numbers<[1], [0], [0], [1], [0, 0, 1, 1], [], []>} : vector<128x128xf32>, vector<128x4xf32>, vector<128x4xf32> -> vector<128x4xf32>
    %cst_45 = arith.constant dense<0.000000e+00> : vector<128x16xf32>
    %104 = tpu.matmul %103, %5, %cst_45 {dimension_numbers = #tpu.dot_dimension_numbers<[1], [0], [0], [1], [0, 0, 1, 1], [], []>} : vector<128x4xf32>, vector<4x16xf32>, vector<128x16xf32> -> vector<128x16xf32>
    %105 = arith.mulf %104, %3 : vector<128x16xf32>
    %cst_46 = arith.constant dense<0.000000e+00> : vector<32x16xf32>
    %106 = tpu.matmul %1, %105, %cst_46 {dimension_numbers = #tpu.dot_dimension_numbers<[1], [0], [0], [1], [0, 0, 1, 1], [], []>} : vector<32x128xf32>, vector<128x16xf32>, vector<32x16xf32> -> vector<32x16xf32>
    %cst_47 = arith.constant dense<0.000000e+00> : vector<32x32xf32>
    %107 = tpu.matmul %106, %79, %cst_47 {dimension_numbers = #tpu.dot_dimension_numbers<[1], [0], [0], [1], [0, 0, 1, 1], [], []>} : vector<32x16xf32>, vector<16x32xf32>, vector<32x32xf32> -> vector<32x32xf32>
    %108 = arith.addf %80, %107 : vector<32x32xf32>
    %109 = vector.broadcast %8 : vector<1x32xf32> to vector<32x32xf32>
    %110 = arith.addf %108, %109 : vector<32x32xf32>
    %111 = arith.addf %76, %110 : vector<32x32xf32>
    %cst_48 = arith.constant dense<0.000000e+00> : vector<32xf32>
    %112 = vector.multi_reduction <add>, %111, %cst_48 [1] : vector<32x32xf32> to vector<32xf32>
    %113 = vector.shape_cast %112 : vector<32xf32> to vector<32x1xf32>
    %cst_49 = arith.constant 3.200000e+01 : f32
    %114 = vector.broadcast %cst_49 : f32 to vector<32x1xf32>
    %115 = arith.divf %113, %114 : vector<32x1xf32>
    %116 = vector.broadcast %115 : vector<32x1xf32> to vector<32x32xf32>
    %117 = arith.subf %111, %116 : vector<32x32xf32>
    %118 = arith.mulf %117, %117 : vector<32x32xf32>
    %cst_50 = arith.constant dense<0.000000e+00> : vector<32xf32>
    %119 = vector.multi_reduction <add>, %118, %cst_50 [1] : vector<32x32xf32> to vector<32xf32>
    %120 = vector.shape_cast %119 : vector<32xf32> to vector<32x1xf32>
    %cst_51 = arith.constant 3.200000e+01 : f32
    %121 = vector.broadcast %cst_51 : f32 to vector<32x1xf32>
    %122 = arith.divf %120, %121 : vector<32x1xf32>
    %123 = vector.broadcast %115 : vector<32x1xf32> to vector<32x32xf32>
    %124 = arith.subf %111, %123 : vector<32x32xf32>
    %cst_52 = arith.constant 9.99999974E-6 : f32
    %125 = vector.broadcast %cst_52 : f32 to vector<32x1xf32>
    %126 = arith.addf %122, %125 : vector<32x1xf32>
    %127 = math.rsqrt %126 : vector<32x1xf32>
    %128 = vector.broadcast %127 : vector<32x1xf32> to vector<32x32xf32>
    %129 = arith.mulf %124, %128 : vector<32x32xf32>
    %130 = vector.broadcast %11 : vector<1x32xf32> to vector<32x32xf32>
    %131 = arith.mulf %129, %130 : vector<32x32xf32>
    %132 = vector.broadcast %12 : vector<1x32xf32> to vector<32x32xf32>
    %133 = arith.addf %131, %132 : vector<32x32xf32>
    %c536 = arith.constant 536 : index
    %c0_53 = arith.constant 0 : index
    %134 = vector.load %arg3[%c536, %c0_53] : memref<584x128xf32, #tpu.memory_space<vmem>>, vector<32x32xf32>
    %cst_54 = arith.constant dense<0.000000e+00> : vector<32x32xf32>
    %135 = tpu.matmul %133, %134, %cst_54 {dimension_numbers = #tpu.dot_dimension_numbers<[1], [0], [0], [1], [0, 0, 1, 1], [], []>} : vector<32x32xf32>, vector<32x32xf32>, vector<32x32xf32> -> vector<32x32xf32>
    %136 = vector.broadcast %15 : vector<1x32xf32> to vector<32x32xf32>
    %137 = arith.addf %135, %136 : vector<32x32xf32>
    %138 = arith.addf %133, %137 : vector<32x32xf32>
    %cst_55 = arith.constant dense<0.000000e+00> : vector<32xf32>
    %139 = vector.multi_reduction <add>, %138, %cst_55 [1] : vector<32x32xf32> to vector<32xf32>
    %140 = vector.shape_cast %139 : vector<32xf32> to vector<32x1xf32>
    %cst_56 = arith.constant 3.200000e+01 : f32
    %141 = vector.broadcast %cst_56 : f32 to vector<32x1xf32>
    %142 = arith.divf %140, %141 : vector<32x1xf32>
    %143 = vector.broadcast %142 : vector<32x1xf32> to vector<32x32xf32>
    %144 = arith.subf %138, %143 : vector<32x32xf32>
    %145 = arith.mulf %144, %144 : vector<32x32xf32>
    %cst_57 = arith.constant dense<0.000000e+00> : vector<32xf32>
    %146 = vector.multi_reduction <add>, %145, %cst_57 [1] : vector<32x32xf32> to vector<32xf32>
    %147 = vector.shape_cast %146 : vector<32xf32> to vector<32x1xf32>
    %cst_58 = arith.constant 3.200000e+01 : f32
    %148 = vector.broadcast %cst_58 : f32 to vector<32x1xf32>
    %149 = arith.divf %147, %148 : vector<32x1xf32>
    %150 = vector.broadcast %142 : vector<32x1xf32> to vector<32x32xf32>
    %151 = arith.subf %138, %150 : vector<32x32xf32>
    %cst_59 = arith.constant 9.99999974E-6 : f32
    %152 = vector.broadcast %cst_59 : f32 to vector<32x1xf32>
    %153 = arith.addf %149, %152 : vector<32x1xf32>
    %154 = math.rsqrt %153 : vector<32x1xf32>
    %155 = vector.broadcast %154 : vector<32x1xf32> to vector<32x32xf32>
    %156 = arith.mulf %151, %155 : vector<32x32xf32>
    %157 = vector.broadcast %13 : vector<1x32xf32> to vector<32x32xf32>
    %158 = arith.mulf %156, %157 : vector<32x32xf32>
    %159 = vector.broadcast %14 : vector<1x32xf32> to vector<32x32xf32>
    %160 = arith.addf %158, %159 : vector<32x32xf32>
    %c0_60 = arith.constant 0 : index
    %c0_61 = arith.constant 0 : index
    %161 = vector.load %arg4[%c0_60, %c0_61] : memref<32x32xf32, #tpu.memory_space<vmem>>, vector<32x32xf32>
    tpu.vector_store %arg4[%c0_60, %c0_61], %160 {strides = array<i32>} : memref<32x32xf32, #tpu.memory_space<vmem>>, vector<32x32xf32>,
    return
  }
  func.func @transform_0(%arg0: i32) -> (i32, i32) {
    %c0_i32 = arith.constant 0 : i32
    %c0_i32_0 = arith.constant 0 : i32
    return %arg0, %c0_i32 : i32, i32
  }
  func.func @transform_1(%arg0: i32) -> (i32, i32, i32) {
    %c0_i32 = arith.constant 0 : i32
    %c0_i32_0 = arith.constant 0 : i32
    %c0_i32_1 = arith.constant 0 : i32
    return %arg0, %c0_i32, %c0_i32_0 : i32, i32, i32
  }
  func.func @transform_2(%arg0: i32) -> (i32, i32) {
    %c0_i32 = arith.constant 0 : i32
    %c0_i32_0 = arith.constant 0 : i32
    %c0_i32_1 = arith.constant 0 : i32
    return %c0_i32, %c0_i32_0 : i32, i32
  }
  func.func @transform_3(%arg0: i32) -> (i32, i32) {
    %c0_i32 = arith.constant 0 : i32
    %c0_i32_0 = arith.constant 0 : i32
    return %arg0, %c0_i32 : i32, i32
  }
}

</mosaic_0001>

<llo_original>
// kernel: decoder_layer_pallas.1
$region0: #{decoder_layer_pallas.1}
  #allocation0 [shape = 'u32[]', space=smem, size = 0x4, offset = 0x4, fixed_abs, tag = 'smem constant byte address 0x4 - core index']
  #allocation1 [shape = 'u32[144,128]{1,0:T(1,128)}', space=vmem, size = 0x12000, scoped, tag = 'internal scratch']
  %s0 = inlined_call_operand.vmem [shape: f32[64,32], index: 0, kind: input, shape index: {}]
  %s1 = inlined_call_operand.vmem [shape: f32[2,32,32], index: 1, kind: input, shape index: {}]
  %s2 = inlined_call_operand.hbm [shape: f32[584,128], index: 2, kind: input, shape index: {}]
  %s3 = inlined_call_operand.vmem [shape: f32[64,32], index: 3, kind: output, shape index: {}]
  %s4 = sld [smem:[#allocation0]]
  $region49: #{decoder_layer_pallas.1} parent=0
    _
  %s6 = ssub.s32 1, %s4
  %s7 = scalar_select 0, %s6, %s4
  $region1: #{decoder_layer_pallas.1} parent=0
    #allocation2 [shape = 'u8[299008]{0}', space=vmem, size = 0x49000, scoped, tag = 'input window, operand 2, single buffered']
    #allocation3 [shape = 's32[2]{0}', space=sflag, size = 0x8, scoped, tag = 'scoped memory for decoder_layer_pallas.1']
    %8 = vsyncpa [#allocation3], 0
    loop: start=0, step=1, limit=4
    $region2: #{decoder_layer_pallas.1} parent=1 // loop_pre_header
      _
    $region3: #{decoder_layer_pallas.1} parent=1 // loop_header
      %s10 = sphi 0, %s14
      %p11 = scmp.ge.s32.totalorder %s10, 4
      %s20 = sphi 0, %s22
      %s23 = sphi 0, %s20
      %s24 = sphi 0, %s23
      %s40 = sphi 0, %s24
      %s46 = sphi 0, %s48
      %s49 = sphi 0, %s46
      %s50 = sphi 0, %s49
      %s66 = sphi 0, %s50
      %s70 = sphi 0, %s70
      %s72 = sphi 0, %s70
      %s73 = sphi 0, %s72
      %s87 = sphi 0, %s73
      %s93 = sphi 0, %s95
      %s96 = sphi 0, %s93
      %s97 = sphi 0, %s96
      %s113 = sphi 0, %s97
    $region4: #{decoder_layer_pallas.1} parent=1 // loop_header_branch
      %13 = sbr.rel (%p11) target = $region8
    $region5: #{decoder_layer_pallas.1} parent=1 // loop_body
      %s15 = ssub.s32 %s10, 1
      %s16 = ssub.s32 %s10, 2
      %s17 = sadd.s32 %s10, 1
      %s18 = ssub.s32 %s10, %s17
      %p19 = scmp.eq.s32.totalorder %s18, 0
      %s21 = sadd.s32 %s20, 1
      %s22 = scalar_select %p19, %s20, %s21
      %p25 = pneg %p19
      %p26 = scmp.eq.s32.totalorder %s10, 1
      %p27 = por %p25, %p26
      %p28 = scmp.ne.s32.totalorder %s20, %s23
      %p29 = scmp.eq.s32.totalorder %s10, 0
      %p30 = por %p28, %p29
      %p31 = scmp.ne.s32.totalorder %s20, %s23
      %p32 = scmp.eq.s32.totalorder %s15, 1
      %p33 = por %p31, %p32
      %p34 = scmp.ne.s32.totalorder %s23, %s24
      %p35 = scmp.eq.s32.totalorder %s15, 0
      %p36 = por %p34, %p35
      %p37 = scmp.ne.s32.totalorder %s23, %s24
      %p38 = scmp.eq.s32.totalorder %s16, 1
      %p39 = por %p37, %p38
      %p41 = scmp.ne.s32.totalorder %s24, %s40
      %p42 = scmp.eq.s32.totalorder %s16, 0
      %p43 = por %p41, %p42
      %s44 = ssub.s32 %s10, %s17
      %p45 = scmp.eq.s32.totalorder %s44, 0
      %s47 = sadd.s32 %s46, 1
      %s48 = scalar_select %p45, %s46, %s47
      %p51 = pneg %p45
      %p52 = scmp.eq.s32.totalorder %s10, 1
      %p53 = por %p51, %p52
      %p54 = scmp.ne.s32.totalorder %s46, %s49
      %p55 = scmp.eq.s32.totalorder %s10, 0
      %p56 = por %p54, %p55
      %p57 = scmp.ne.s32.totalorder %s46, %s49
      %p58 = scmp.eq.s32.totalorder %s15, 1
      %p59 = por %p57, %p58
      %p60 = scmp.ne.s32.totalorder %s49, %s50
      %p61 = scmp.eq.s32.totalorder %s15, 0
      %p62 = por %p60, %p61
      %p63 = scmp.ne.s32.totalorder %s49, %s50
      %p64 = scmp.eq.s32.totalorder %s16, 1
      %p65 = por %p63, %p64
      %p67 = scmp.ne.s32.totalorder %s50, %s66
      %p68 = scmp.eq.s32.totalorder %s16, 0
      %p69 = por %p67, %p68
      %s71 = sadd.s32 %s70, 1
      %p74 = scmp.eq.s32.totalorder %s10, 1
      %p75 = scmp.ne.s32.totalorder %s70, %s72
      %p76 = scmp.eq.s32.totalorder %s10, 0
      %p77 = por %p75, %p76
      %p78 = scmp.ne.s32.totalorder %s70, %s72
      %p79 = scmp.eq.s32.totalorder %s15, 1
      %p80 = por %p78, %p79
      %p81 = scmp.ne.s32.totalorder %s72, %s73
      %p82 = scmp.eq.s32.totalorder %s15, 0
      %p83 = por %p81, %p82
      %p84 = scmp.ne.s32.totalorder %s72, %s73
      %p85 = scmp.eq.s32.totalorder %s16, 1
      %p86 = por %p84, %p85
      %p88 = scmp.ne.s32.totalorder %s73, %s87
      %p89 = scmp.eq.s32.totalorder %s16, 0
      %p90 = por %p88, %p89
      %s91 = ssub.s32 %s10, %s17
      %p92 = scmp.eq.s32.totalorder %s91, 0
      %s94 = sadd.s32 %s93, 1
      %s95 = scalar_select %p92, %s93, %s94
      %p98 = pneg %p92
      %p99 = scmp.eq.s32.totalorder %s10, 1
      %p100 = por %p98, %p99
      %p101 = scmp.ne.s32.totalorder %s93, %s96
      %p102 = scmp.eq.s32.totalorder %s10, 0
      %p103 = por %p101, %p102
      %p104 = scmp.ne.s32.totalorder %s93, %s96
      %p105 = scmp.eq.s32.totalorder %s15, 1
      %p106 = por %p104, %p105
      %p107 = scmp.ne.s32.totalorder %s96, %s97
      %p108 = scmp.eq.s32.totalorder %s15, 0
      %p109 = por %p107, %p108
      %p110 = scmp.ne.s32.totalorder %s96, %s97
      %p111 = scmp.eq.s32.totalorder %s16, 1
      %p112 = por %p110, %p111
      %p114 = scmp.ne.s32.totalorder %s97, %s113
      %p115 = scmp.eq.s32.totalorder %s16, 0
      %p116 = por %p114, %p115
      %p117 = scmp.le.s32.totalorder 1, %s10
      %p118 = scmp.lt.s32.totalorder %s10, 3
      %p119 = pnand %p117, %p118
      %p120 = pneg %p119
      // Predicated region
      $region9: #{decoder_layer_pallas.1} parent=5 // pred_check
        _
      $region10: #{decoder_layer_pallas.1} parent=5 // pred_check_branch
        %122 = sbr.rel (%p119) target = $region12
      $region11: #{decoder_layer_pallas.1} parent=5 // pred_region
        %s123 = ssub.s32 %s10, 1
        // Predicated region
        $region13: #{decoder_layer_pallas.1} parent=11 // pred_check
          %p124 = pneg %p83
        $region14: #{decoder_layer_pallas.1} parent=11 // pred_check_branch
          %126 = sbr.rel (%p124) target = $region16
        $region15: #{decoder_layer_pallas.1} parent=11 // pred_region
          %s128 = ssub.s32 9344, 9344
          %129 = vsyncadd [#allocation3], %s128
          %s130 = sshll.u32 [#allocation2], 4
          %s131 = int_to_ptr.vmem [resolvable:$true] %s130
          %136 = dma.hbm_to_vmem [thread:$0]  %s2, 9344, %s131, [#allocation3], 128, 128, 8
        $region16: #{decoder_layer_pallas.1} parent=11 // pred_fallthru
          _
      $region12: #{decoder_layer_pallas.1} parent=5 // pred_fallthru
        _
      %p137 = scmp.lt.s32.totalorder %s10, 2
      // Predicated region
      $region17: #{decoder_layer_pallas.1} parent=5 // pred_check
        %p138 = pneg %p137
      $region18: #{decoder_layer_pallas.1} parent=5 // pred_check_branch
        %140 = sbr.rel (%p138) target = $region20
      $region19: #{decoder_layer_pallas.1} parent=5 // pred_region
        // Predicated region
        $region21: #{decoder_layer_pallas.1} parent=19 // pred_check
          %p141 = pneg %p30
        $region22: #{decoder_layer_pallas.1} parent=19 // pred_check_branch
          %143 = sbr.rel (%p141) target = $region24
        $region23: #{decoder_layer_pallas.1} parent=19 // pred_region
          %s144 = smul.u32 4, %s10
          %p145 = scmp.lt.s32.totalorder %s144, 7
          %s146 = scalar_select %p145, %s144, 7
          %s147 = smul.addr %s146, 8
          %s148 = scalar_lea.vmem %s0, %s147
          %s149 = smul.u32 4, %s10
        $region24: #{decoder_layer_pallas.1} parent=19 // pred_fallthru
          _
        // Predicated region
        $region25: #{decoder_layer_pallas.1} parent=19 // pred_check
          %p150 = pneg %p56
        $region26: #{decoder_layer_pallas.1} parent=19 // pred_check_branch
          %152 = sbr.rel (%p150) target = $region28
        $region27: #{decoder_layer_pallas.1} parent=19 // pred_region
          %p153 = scmp.lt.s32.totalorder %s10, 1
          %s154 = scalar_select %p153, %s10, 1
          %s155 = smul.addr %s154, 4
          %s156 = smul.addr %s155, 8
          %s157 = scalar_lea.vmem %s1, %s156
        $region28: #{decoder_layer_pallas.1} parent=19 // pred_fallthru
          _
      $region20: #{decoder_layer_pallas.1} parent=5 // pred_fallthru
        _
      %p158 = scmp.le.s32.totalorder 1, %s10
      %p159 = scmp.lt.s32.totalorder %s10, 3
      %p160 = pnand %p158, %p159
      %p161 = pneg %p160
      // Predicated region
      $region29: #{decoder_layer_pallas.1} parent=5 // pred_check
        _
      $region30: #{decoder_layer_pallas.1} parent=5 // pred_check_branch
        %163 = sbr.rel (%p160) target = $region32
      $region31: #{decoder_layer_pallas.1} parent=5 // pred_region
        %s164 = ssub.s32 %s10, 1
        // Predicated region
        $region33: #{decoder_layer_pallas.1} parent=31 // pred_check
          %p165 = pneg %p83
        $region34: #{decoder_layer_pallas.1} parent=31 // pred_check_branch
          %167 = sbr.rel (%p165) target = $region36
        $region35: #{decoder_layer_pallas.1} parent=31 // pred_region
          %168 = dma.done [#allocation3], 9344
        $region36: #{decoder_layer_pallas.1} parent=31 // pred_fallthru
          _
        %s169 = smul.u32 4, %s15
        %p170 = scmp.lt.s32.totalorder %s169, 7
        %s171 = scalar_select %p170, %s169, 7
        %s172 = smul.addr %s171, 8
        %s173 = scalar_lea.vmem %s0, %s172
        %p174 = pneg %p36
        %p175 = pneg %p33
        %p176 = scmp.lt.s32.totalorder %s15, 1
        %s177 = scalar_select %p176, %s15, 1
        %s178 = smul.addr %s177, 4
        %s179 = smul.addr %s178, 8
        %s180 = scalar_lea.vmem %s1, %s179
        %p181 = pneg %p62
        %p182 = pneg %p59
        %p183 = pneg %p83
        %p184 = pneg %p80
        %p185 = pneg %p109
        %p186 = pneg %p106
        %s187 = smul.u32 4, %s15
        %p188 = scmp.lt.s32.totalorder %s187, 7
        %s189 = scalar_select %p188, %s187, 7
        %s190 = smul.addr %s189, 8
        %s191 = scalar_lea.vmem %s3, %s190
        %s192 = smul.u32 4, %s15
        %p193 = scmp.lt.s32.totalorder %s192, 7
        %s194 = scalar_select %p193, %s192, 7
        %s195 = smul.addr %s194, 8
        %s196 = scalar_lea.vmem %s0, %s195
        %s197 = smul.u32 4, %s15
        %p198 = scmp.lt.s32.totalorder %s15, 1
        %s199 = scalar_select %p198, %s15, 1
        %s200 = smul.addr %s199, 4
        %s201 = smul.addr %s200, 8
        %s202 = scalar_lea.vmem %s1, %s201
        %s203 = smul.u32 4, %s15
        %p204 = scmp.lt.s32.totalorder %s203, 7
        %s205 = scalar_select %p204, %s203, 7
        %s206 = smul.addr %s205, 8
        %s207 = scalar_lea.vmem %s3, %s206
        %s208 = smul.u32 4, %s15
        %v209 = vld [vmem:[#allocation2] sm:$0xff]
        %v210 = vld [vmem:[#allocation2 + $0x8] sm:$0xff]
        %v211 = vld [vmem:[#allocation2 + $0x10] sm:$0xff]
        %v212 = vld [vmem:[#allocation2 + $0x18] sm:$0xff]
        %v213 = vld [vmem:[#allocation2 + $0x20] sm:$0xff]
        %v214 = vld [vmem:[#allocation2 + $0x28] sm:$0xff]
        %v215 = vld [vmem:[#allocation2 + $0x30] sm:$0xff]
        %v216 = vld [vmem:[#allocation2 + $0x38] sm:$0xff]
        %v217 = vld [vmem:[#allocation2 + $0x40] sm:$0xff]
        %v218 = vld [vmem:[#allocation2 + $0x48] sm:$0xff]
        %v219 = vld [vmem:[#allocation2 + $0x50] sm:$0xff]
        %v220 = vld [vmem:[#allocation2 + $0x58] sm:$0xff]
        %v221 = vld [vmem:[#allocation2 + $0x60] sm:$0xff]
        %v222 = vld [vmem:[#allocation2 + $0x68] sm:$0xff]
        %v223 = vld [vmem:[#allocation2 + $0x70] sm:$0xff]
        %v224 = vld [vmem:[#allocation2 + $0x78] sm:$0xff]
        %v225 = vld [vmem:[#allocation2 + $0x80] sm:$0xff]
        %v226 = vld [vmem:[#allocation2 + $0x88] sm:$0xff]
        %v227 = vld [vmem:[#allocation2 + $0x90] sm:$0xff]
        %v228 = vld [vmem:[#allocation2 + $0x98] sm:$0xff]
        %v229 = vld [vmem:[#allocation2 + $0xa0] sm:$0xff]
        %v230 = vld [vmem:[#allocation2 + $0xa8] sm:$0xff]
        %v231 = vld [vmem:[#allocation2 + $0xb0] sm:$0xff]
        %v232 = vld [vmem:[#allocation2 + $0xb8] sm:$0xff]
        %v233 = vld [vmem:[#allocation2 + $0xc0] sm:$0xff]
        %v234 = vld [vmem:[#allocation2 + $0xc8] sm:$0xff]
        %v235 = vld [vmem:[#allocation2 + $0xd0] sm:$0xff]
        %v236 = vld [vmem:[#allocation2 + $0xd8] sm:$0xff]
        %v237 = vld [vmem:[#allocation2 + $0xe0] sm:$0xff]
        %v238 = vld [vmem:[#allocation2 + $0xe8] sm:$0xff]
        %v239 = vld [vmem:[#allocation2 + $0xf0] sm:$0xff]
        %v240 = vld [vmem:[#allocation2 + $0xf8] sm:$0xff]
        %v241 = vld [vmem:[#allocation2 + $0x100] sm:$0xff]
        %v242 = vld [vmem:[#allocation2 + $0x108] sm:$0xff]
        %v243 = vld [vmem:[#allocation2 + $0x110] sm:$0xff]
        %v244 = vld [vmem:[#allocation2 + $0x118] sm:$0xff]
        %v245 = vld [vmem:[#allocation2 + $0x120] sm:$0xff]
        %v246 = vld [vmem:[#allocation2 + $0x128] sm:$0xff]
        %v247 = vld [vmem:[#allocation2 + $0x130] sm:$0xff]
        %v248 = vld [vmem:[#allocation2 + $0x138] sm:$0xff]
        %v249 = vld [vmem:[#allocation2 + $0x140] sm:$0xff]
        %v250 = vld [vmem:[#allocation2 + $0x148] sm:$0xff]
        %v251 = vld [vmem:[#allocation2 + $0x150] sm:$0xf]
        %v252 = vld [vmem:[#allocation2 + $0x238] sm:$0xff]
        %v253 = vld [vmem:[#allocation2 + $0x240] sm:$0xff]
        %v254 = vld [vmem:[%s202] sm:$0xff]
        %v255 = vld [vmem:[%s202 + $0x8] sm:$0xff]
        %v256 = vld [vmem:[%s202 + $0x10] sm:$0xff]
        %v257 = vld [vmem:[%s202 + $0x18] sm:$0xff]
        %vm258 = vcmask 261120
        %v260 = vsel %vm258, %v209, 0
        %v263 = vsel %vm258, %v210, 0
        %v266 = vsel %vm258, %v211, 0
        %v269 = vsel %vm258, %v212, 0
        %v272 = vsel %vm258, %v213, 0
        %v275 = vsel %vm258, %v214, 0
        %v278 = vsel %vm258, %v215, 0
        %v281 = vsel %vm258, %v216, 0
        %v284 = vsel %vm258, %v217, 0
        %v287 = vsel %vm258, %v218, 0
        %v290 = vsel %vm258, %v219, 0
        %v293 = vsel %vm258, %v220, 0
        %v296 = vsel %vm258, %v221, 0
        %v299 = vsel %vm258, %v222, 0
        %v302 = vsel %vm258, %v223, 0
        %v305 = vsel %vm258, %v224, 0
        %307 = vmatprep.subr.mxu0 0.0
        %308 = vmatpush1.msra.mxu0 %v254
        %309 = vmatprep.subr.mxu0 0.0
        %310 = vmatpush1.msra.mxu0 %v255
        %311 = vmatprep.subr.mxu0 0.0
        %312 = vmatpush1.msra.mxu0 %v256
        %313 = vmatprep.subr.mxu0 0.0
        %314 = vmatpush1.msra.mxu0 %v257
        %315 = vmatprep.subr.mxu0 0.0
        %316 = vmatpush1.msra.mxu0 0.0
        %317 = vmatprep.subr.mxu0 0.0
        %318 = vmatpush1.msra.mxu0 0.0
        %319 = vmatprep.subr.mxu0 0.0
        %320 = vmatpush1.msra.mxu0 0.0
        %321 = vmatprep.subr.mxu0 0.0
        %322 = vmatpush1.msra.mxu0 0.0
        %323 = vmatprep.subr.mxu0 0.0
        %324 = vmatpush1.msra.mxu0 0.0
        %325 = vmatprep.subr.mxu0 0.0
        %326 = vmatpush1.msra.mxu0 0.0
        %327 = vmatprep.subr.mxu0 0.0
        %328 = vmatpush1.msra.mxu0 0.0
        %329 = vmatprep.subr.mxu0 0.0
        %330 = vmatpush1.msra.mxu0 0.0
        %331 = vmatprep.subr.mxu0 0.0
        %332 = vmatpush1.msra.mxu0 0.0
        %333 = vmatprep.subr.mxu0 0.0
        %334 = vmatpush1.msra.mxu0 0.0
        %335 = vmatprep.subr.mxu0 0.0
        %336 = vmatpush1.msra.mxu0 0.0
        %337 = vmatprep.subr.mxu0 0.0
        %338 = vmatpush1.msra.mxu0 0.0
        %339 = vmatprep.subr.mxu0 0.0
        %340 = vmatpush1.msra.mxu0 0.0
        %341 = vmatprep.subr.mxu0 0.0
        %342 = vmatpush1.msra.mxu0 0.0
        %343 = vmatprep.subr.mxu0 0.0
        %344 = vmatpush1.msra.mxu0 0.0
        %345 = vmatprep.subr.mxu0 0.0
        %346 = vmatpush1.msra.mxu0 0.0
        %347 = vmatprep.subr.mxu0 0.0
        %348 = vmatpush1.msra.mxu0 0.0
        %349 = vmatprep.subr.mxu0 0.0
        %350 = vmatpush1.msra.mxu0 0.0
        %351 = vmatprep.subr.mxu0 0.0
        %352 = vmatpush1.msra.mxu0 0.0
        %353 = vmatprep.subr.mxu0 0.0
        %354 = vmatpush1.msra.mxu0 0.0
        %355 = vmatprep.subr.mxu0 0.0
        %356 = vmatpush1.msra.mxu0 0.0
        %357 = vmatprep.subr.mxu0 0.0
        %358 = vmatpush1.msra.mxu0 0.0
        %359 = vmatprep.subr.mxu0 0.0
        %360 = vmatpush1.msra.mxu0 0.0
        %361 = vmatprep.subr.mxu0 0.0
        %362 = vmatpush1.msra.mxu0 0.0
        %363 = vmatprep.subr.mxu0 0.0
        %364 = vmatpush1.msra.mxu0 0.0
        %365 = vmatprep.subr.mxu0 0.0
        %366 = vmatpush1.msra.mxu0 0.0
        %367 = vmatprep.subr.mxu0 0.0
        %368 = vmatpush1.msra.mxu0 0.0
        %369 = vmatprep.subr.mxu0 0.0
        %370 = vmatpush1.msra.mxu0 0.0
        %371 = vmatprep.mubr.f32.mxu0 0.0
        %372 = vmatmul.mubr.f32.gmra.mrb[0].mxu0 %v260
        %v373 = vpop.f32.mrb[0].mxu0
        %v374 = vadd.f32 0.0, %v373
        %v375 = vpop.f32.mrb[0].mxu0
        %376 = vmatprep.mubr.f32.mxu0 0.0
        %377 = vmatmul.mubr.f32.gmra.mrb[0].mxu0 %v263
        %v378 = vpop.f32.mrb[0].mxu0
        %v379 = vadd.f32 0.0, %v378
        %v380 = vpop.f32.mrb[0].mxu0
        %381 = vmatprep.mubr.f32.mxu0 0.0
        %382 = vmatmul.mubr.f32.gmra.mrb[0].mxu0 %v266
        %v383 = vpop.f32.mrb[0].mxu0
        %v384 = vadd.f32 0.0, %v383
        %v385 = vpop.f32.mrb[0].mxu0
        %386 = vmatprep.mubr.f32.mxu0 0.0
        %387 = vmatmul.mubr.f32.gmra.mrb[0].mxu0 %v269
        %v388 = vpop.f32.mrb[0].mxu0
        %v389 = vadd.f32 0.0, %v388
        %v390 = vpop.f32.mrb[0].mxu0
        %391 = vmatprep.mubr.f32.mxu0 0.0
        %392 = vmatmul.mubr.f32.gmra.mrb[0].mxu0 %v272
        %v393 = vpop.f32.mrb[0].mxu0
        %v394 = vadd.f32 0.0, %v393
        %v395 = vpop.f32.mrb[0].mxu0
        %396 = vmatprep.mubr.f32.mxu0 0.0
        %397 = vmatmul.mubr.f32.gmra.mrb[0].mxu0 %v275
        %v398 = vpop.f32.mrb[0].mxu0
        %v399 = vadd.f32 0.0, %v398
        %v400 = vpop.f32.mrb[0].mxu0
        %401 = vmatprep.mubr.f32.mxu0 0.0
        %402 = vmatmul.mubr.f32.gmra.mrb[0].mxu0 %v278
        %v403 = vpop.f32.mrb[0].mxu0
        %v404 = vadd.f32 0.0, %v403
        %v405 = vpop.f32.mrb[0].mxu0
        %406 = vmatprep.mubr.f32.mxu0 0.0
        %407 = vmatmul.mubr.f32.gmra.mrb[0].mxu0 %v281
        %v408 = vpop.f32.mrb[0].mxu0
        %v409 = vadd.f32 0.0, %v408
        %v410 = vpop.f32.mrb[0].mxu0
        %411 = vmatprep.mubr.f32.mxu0 0.0
        %412 = vmatmul.mubr.f32.gmra.mrb[0].mxu0 %v284
        %v413 = vpop.f32.mrb[0].mxu0
        %v414 = vadd.f32 0.0, %v413
        %v415 = vpop.f32.mrb[0].mxu0
        %416 = vmatprep.mubr.f32.mxu0 0.0
        %417 = vmatmul.mubr.f32.gmra.mrb[0].mxu0 %v287
        %v418 = vpop.f32.mrb[0].mxu0
        %v419 = vadd.f32 0.0, %v418
        %v420 = vpop.f32.mrb[0].mxu0
        %421 = vmatprep.mubr.f32.mxu0 0.0
        %422 = vmatmul.mubr.f32.gmra.mrb[0].mxu0 %v290
        %v423 = vpop.f32.mrb[0].mxu0
        %v424 = vadd.f32 0.0, %v423
        %v425 = vpop.f32.mrb[0].mxu0
        %426 = vmatprep.mubr.f32.mxu0 0.0
        %427 = vmatmul.mubr.f32.gmra.mrb[0].mxu0 %v293
        %v428 = vpop.f32.mrb[0].mxu0
        %v429 = vadd.f32 0.0, %v428
        %v430 = vpop.f32.mrb[0].mxu0
        %431 = vmatprep.mubr.f32.mxu0 0.0
        %432 = vmatmul.mubr.f32.gmra.mrb[0].mxu0 %v296
        %v433 = vpop.f32.mrb[0].mxu0
        %v434 = vadd.f32 0.0, %v433
        %v435 = vpop.f32.mrb[0].mxu0
        %436 = vmatprep.mubr.f32.mxu0 0.0
        %437 = vmatmul.mubr.f32.gmra.mrb[0].mxu0 %v299
        %v438 = vpop.f32.mrb[0].mxu0
        %v439 = vadd.f32 0.0, %v438
        %v440 = vpop.f32.mrb[0].mxu0
        %441 = vmatprep.mubr.f32.mxu0 0.0
        %442 = vmatmul.mubr.f32.gmra.mrb[0].mxu0 %v302
        %v443 = vpop.f32.mrb[0].mxu0
        %v444 = vadd.f32 0.0, %v443
        %v445 = vpop.f32.mrb[0].mxu0
        %446 = vmatprep.mubr.f32.mxu0 0.0
        %447 = vmatmul.mubr.f32.gmra.mrb[0].mxu0 %v305
        %v448 = vpop.f32.mrb[0].mxu0
        %v449 = vadd.f32 0.0, %v448
        %v450 = vpop.f32.mrb[0].mxu0
        %451 = vdwg.mxu0
        %v452 = vld [vmem:[%s196] sm:$0xff]
        %v453 = vld [vmem:[%s196 + $0x8] sm:$0xff]
        %v454 = vld [vmem:[%s196 + $0x10] sm:$0xff]
        %v455 = vld [vmem:[%s196 + $0x18] sm:$0xff]
        %v456 = vld [vmem:[#allocation2 + $0x158] sm:$0xff]
        %v457 = vld [vmem:[#allocation2 + $0x160] sm:$0xff]
        %v458 = vld [vmem:[#allocation2 + $0x168] sm:$0xff]
        %v459 = vld [vmem:[#allocation2 + $0x170] sm:$0xff]
        %v460 = vld [vmem:[#allocation2 + $0x178] sm:$0xff]
        %v461 = vld [vmem:[#allocation2 + $0x180] sm:$0xff]
        %v462 = vld [vmem:[#allocation2 + $0x188] sm:$0xff]
        %v463 = vld [vmem:[#allocation2 + $0x190] sm:$0xff]
        %v464 = vld [vmem:[#allocation2 + $0x198] sm:$0xff]
        %v465 = vld [vmem:[#allocation2 + $0x1a0] sm:$0xff]
        %v466 = vld [vmem:[#allocation2 + $0x1a8] sm:$0xff]
        %v467 = vld [vmem:[#allocation2 + $0x1b0] sm:$0xff]
        %v469 = vsel %vm258, %v452, 0
        %v472 = vsel %vm258, %v453, 0
        %v475 = vsel %vm258, %v454, 0
        %v478 = vsel %vm258, %v455, 0
        %480 = vmatprep.subr.mxu0 0.0
        %481 = vmatpush1.msra.mxu0 %v456
        %482 = vmatprep.subr.mxu0 0.0
        %483 = vmatpush1.msra.mxu0 %v457
        %484 = vmatprep.subr.mxu0 0.0
        %485 = vmatpush1.msra.mxu0 %v458
        %486 = vmatprep.subr.mxu0 0.0
        %487 = vmatpush1.msra.mxu0 %v459
        %488 = vmatprep.subr.mxu0 0.0
        %489 = vmatpush1.msra.mxu0 0.0
        %490 = vmatprep.subr.mxu0 0.0
        %491 = vmatpush1.msra.mxu0 0.0
        %492 = vmatprep.subr.mxu0 0.0
        %493 = vmatpush1.msra.mxu0 0.0
        %494 = vmatprep.subr.mxu0 0.0
        %495 = vmatpush1.msra.mxu0 0.0
        %496 = vmatprep.subr.mxu0 0.0
        %497 = vmatpush1.msra.mxu0 0.0
        %498 = vmatprep.subr.mxu0 0.0
        %499 = vmatpush1.msra.mxu0 0.0
        %500 = vmatprep.subr.mxu0 0.0
        %501 = vmatpush1.msra.mxu0 0.0
        %502 = vmatprep.subr.mxu0 0.0
        %503 = vmatpush1.msra.mxu0 0.0
        %504 = vmatprep.subr.mxu0 0.0
        %505 = vmatpush1.msra.mxu0 0.0
        %506 = vmatprep.subr.mxu0 0.0
        %507 = vmatpush1.msra.mxu0 0.0
        %508 = vmatprep.subr.mxu0 0.0
        %509 = vmatpush1.msra.mxu0 0.0
        %510 = vmatprep.subr.mxu0 0.0
        %511 = vmatpush1.msra.mxu0 0.0
        %512 = vmatprep.subr.mxu0 0.0
        %513 = vmatpush1.msra.mxu0 0.0
        %514 = vmatprep.subr.mxu0 0.0
        %515 = vmatpush1.msra.mxu0 0.0
        %516 = vmatprep.subr.mxu0 0.0
        %517 = vmatpush1.msra.mxu0 0.0
        %518 = vmatprep.subr.mxu0 0.0
        %519 = vmatpush1.msra.mxu0 0.0
        %520 = vmatprep.subr.mxu0 0.0
        %521 = vmatpush1.msra.mxu0 0.0
        %522 = vmatprep.subr.mxu0 0.0
        %523 = vmatpush1.msra.mxu0 0.0
        %524 = vmatprep.subr.mxu0 0.0
        %525 = vmatpush1.msra.mxu0 0.0
        %526 = vmatprep.subr.mxu0 0.0
        %527 = vmatpush1.msra.mxu0 0.0
        %528 = vmatprep.subr.mxu0 0.0
        %529 = vmatpush1.msra.mxu0 0.0
        %530 = vmatprep.subr.mxu0 0.0
        %531 = vmatpush1.msra.mxu0 0.0
        %532 = vmatprep.subr.mxu0 0.0
        %533 = vmatpush1.msra.mxu0 0.0
        %534 = vmatprep.subr.mxu0 0.0
        %535 = vmatpush1.msra.mxu0 0.0
        %536 = vmatprep.subr.mxu0 0.0
        %537 = vmatpush1.msra.mxu0 0.0
        %538 = vmatprep.subr.mxu0 0.0
        %539 = vmatpush1.msra.mxu0 0.0
        %540 = vmatprep.subr.mxu0 0.0
        %541 = vmatpush1.msra.mxu0 0.0
        %542 = vmatprep.subr.mxu0 0.0
        %543 = vmatpush1.msra.mxu0 0.0
        %544 = vmatprep.mubr.f32.mxu0 0.0
        %545 = vmatmul.mubr.f32.gmra.mrb[0].mxu0 %v469
        %v546 = vpop.f32.mrb[0].mxu0
        %v547 = vadd.f32 0.0, %v546
        %v548 = vpop.f32.mrb[0].mxu0
        %549 = vmatprep.mubr.f32.mxu0 0.0
        %550 = vmatmul.mubr.f32.gmra.mrb[0].mxu0 %v472
        %v551 = vpop.f32.mrb[0].mxu0
        %v552 = vadd.f32 0.0, %v551
        %v553 = vpop.f32.mrb[0].mxu0
        %554 = vmatprep.mubr.f32.mxu0 0.0
        %555 = vmatmul.mubr.f32.gmra.mrb[0].mxu0 %v475
        %v556 = vpop.f32.mrb[0].mxu0
        %v557 = vadd.f32 0.0, %v556
        %v558 = vpop.f32.mrb[0].mxu0
        %559 = vmatprep.mubr.f32.mxu0 0.0
        %560 = vmatmul.mubr.f32.gmra.mrb[0].mxu0 %v478
        %v561 = vpop.f32.mrb[0].mxu0
        %v562 = vadd.f32 0.0, %v561
        %v563 = vpop.f32.mrb[0].mxu0
        %564 = vdwg.mxu0
        %v566 = vsel %vm258, %v547, 0
        %v569 = vsel %vm258, %v552, 0
        %v572 = vsel %vm258, %v557, 0
        %v575 = vsel %vm258, %v562, 0
        %v578 = vsel %vm258, %v460, 0
        %v581 = vsel %vm258, %v461, 0
        %v584 = vsel %vm258, %v462, 0
        %v587 = vsel %vm258, %v463, 0
        %v590 = vsel %vm258, %v464, 0
        %v593 = vsel %vm258, %v465, 0
        %595 = vmatprep.subr.mxu0 0.0
        %596 = vmatpush1.xpose.msra.mxu0 %v578
        %597 = vmatprep.subr.mxu0 0.0
        %598 = vmatpush1.xpose.msra.mxu0 %v581
        %599 = vmatprep.subr.mxu0 0.0
        %600 = vmatpush1.xpose.msra.mxu0 %v584
        %601 = vmatprep.subr.mxu0 0.0
        %602 = vmatpush1.xpose.msra.mxu0 %v587
        %603 = vmatprep.subr.mxu0 0.0
        %604 = vmatpush1.xpose.msra.mxu0 %v590
        %605 = vmatprep.subr.mxu0 0.0
        %606 = vmatpush1.xpose.msra.mxu0 %v593
        %607 = vmatprep.subr.mxu0 0.0
        %608 = vmatpush1.xpose.msra.mxu0 0.0
        %609 = vmatprep.subr.mxu0 0.0
        %610 = vmatpush1.xpose.msra.mxu0 0.0
        %611 = vmatprep.subr.mxu0 0.0
        %612 = vmatpush1.xpose.msra.mxu0 0.0
        %613 = vmatprep.subr.mxu0 0.0
        %614 = vmatpush1.xpose.msra.mxu0 0.0
        %615 = vmatprep.subr.mxu0 0.0
        %616 = vmatpush1.xpose.msra.mxu0 0.0
        %617 = vmatprep.subr.mxu0 0.0
        %618 = vmatpush1.xpose.msra.mxu0 0.0
        %619 = vmatprep.subr.mxu0 0.0
        %620 = vmatpush1.xpose.msra.mxu0 0.0
        %621 = vmatprep.subr.mxu0 0.0
        %622 = vmatpush1.xpose.msra.mxu0 0.0
        %623 = vmatprep.subr.mxu0 0.0
        %624 = vmatpush1.xpose.msra.mxu0 0.0
        %625 = vmatprep.subr.mxu0 0.0
        %626 = vmatpush1.xpose.msra.mxu0 0.0
        %627 = vmatprep.subr.mxu0 0.0
        %628 = vmatpush1.xpose.msra.mxu0 0.0
        %629 = vmatprep.subr.mxu0 0.0
        %630 = vmatpush1.xpose.msra.mxu0 0.0
        %631 = vmatprep.subr.mxu0 0.0
        %632 = vmatpush1.xpose.msra.mxu0 0.0
        %633 = vmatprep.subr.mxu0 0.0
        %634 = vmatpush1.xpose.msra.mxu0 0.0
        %635 = vmatprep.subr.mxu0 0.0
        %636 = vmatpush1.xpose.msra.mxu0 0.0
        %637 = vmatprep.subr.mxu0 0.0
        %638 = vmatpush1.xpose.msra.mxu0 0.0
        %639 = vmatprep.subr.mxu0 0.0
        %640 = vmatpush1.xpose.msra.mxu0 0.0
        %641 = vmatprep.subr.mxu0 0.0
        %642 = vmatpush1.xpose.msra.mxu0 0.0
        %643 = vmatprep.subr.mxu0 0.0
        %644 = vmatpush1.xpose.msra.mxu0 0.0
        %645 = vmatprep.subr.mxu0 0.0
        %646 = vmatpush1.xpose.msra.mxu0 0.0
        %647 = vmatprep.subr.mxu0 0.0
        %648 = vmatpush1.xpose.msra.mxu0 0.0
        %649 = vmatprep.subr.mxu0 0.0
        %650 = vmatpush1.xpose.msra.mxu0 0.0
        %651 = vmatprep.subr.mxu0 0.0
        %652 = vmatpush1.xpose.msra.mxu0 0.0
        %653 = vmatprep.subr.mxu0 0.0
        %654 = vmatpush1.xpose.msra.mxu0 0.0
        %655 = vmatprep.subr.mxu0 0.0
        %656 = vmatpush1.xpose.msra.mxu0 0.0
        %657 = vmatprep.subr.mxu0 0.0
        %658 = vmatpush1.xpose.msra.mxu0 0.0
        %659 = vmatprep.mubr.f32.mxu0 0.0
        %660 = vmatmul.mubr.f32.gmra.mrb[0].mxu0 %v566
        %v661 = vpop.f32.mrb[0].mxu0
        %v662 = vadd.f32 0.0, %v661
        %v663 = vpop.f32.mrb[0].mxu0
        %664 = vmatprep.mubr.f32.mxu0 0.0
        %665 = vmatmul.mubr.f32.gmra.mrb[0].mxu0 %v569
        %v666 = vpop.f32.mrb[0].mxu0
        %v667 = vadd.f32 0.0, %v666
        %v668 = vpop.f32.mrb[0].mxu0
        %669 = vmatprep.mubr.f32.mxu0 0.0
        %670 = vmatmul.mubr.f32.gmra.mrb[0].mxu0 %v572
        %v671 = vpop.f32.mrb[0].mxu0
        %v672 = vadd.f32 0.0, %v671
        %v673 = vpop.f32.mrb[0].mxu0
        %674 = vmatprep.mubr.f32.mxu0 0.0
        %675 = vmatmul.mubr.f32.gmra.mrb[0].mxu0 %v575
        %v676 = vpop.f32.mrb[0].mxu0
        %v677 = vadd.f32 0.0, %v676
        %v678 = vpop.f32.mrb[0].mxu0
        %679 = vdwg.mxu0
        %680 = vmatprep.subr.mxu0 0.0
        %681 = vmatpush1.msra.mxu0 %v662
        %682 = vmatprep.subr.mxu0 0.0
        %683 = vmatpush1.msra.mxu0 %v667
        %684 = vmatprep.subr.mxu0 0.0
        %685 = vmatpush1.msra.mxu0 %v672
        %686 = vmatprep.subr.mxu0 0.0
        %687 = vmatpush1.msra.mxu0 %v677
        %688 = vmatprep.subr.mxu0 0.0
        %689 = vmatpush1.msra.mxu0 0.0
        %690 = vmatprep.subr.mxu0 0.0
        %691 = vmatpush1.msra.mxu0 0.0
        %692 = vmatprep.subr.mxu0 0.0
        %693 = vmatpush1.msra.mxu0 0.0
        %694 = vmatprep.subr.mxu0 0.0
        %695 = vmatpush1.msra.mxu0 0.0
        %696 = vmatprep.subr.mxu0 0.0
        %697 = vmatpush1.msra.mxu0 0.0
        %698 = vmatprep.subr.mxu0 0.0
        %699 = vmatpush1.msra.mxu0 0.0
        %700 = vmatprep.subr.mxu0 0.0
        %701 = vmatpush1.msra.mxu0 0.0
        %702 = vmatprep.subr.mxu0 0.0
        %703 = vmatpush1.msra.mxu0 0.0
        %704 = vmatprep.subr.mxu0 0.0
        %705 = vmatpush1.msra.mxu0 0.0
        %706 = vmatprep.subr.mxu0 0.0
        %707 = vmatpush1.msra.mxu0 0.0
        %708 = vmatprep.subr.mxu0 0.0
        %709 = vmatpush1.msra.mxu0 0.0
        %710 = vmatprep.subr.mxu0 0.0
        %711 = vmatpush1.msra.mxu0 0.0
        %712 = vmatprep.subr.mxu0 0.0
        %713 = vmatpush1.msra.mxu0 0.0
        %714 = vmatprep.subr.mxu0 0.0
        %715 = vmatpush1.msra.mxu0 0.0
        %716 = vmatprep.subr.mxu0 0.0
        %717 = vmatpush1.msra.mxu0 0.0
        %718 = vmatprep.subr.mxu0 0.0
        %719 = vmatpush1.msra.mxu0 0.0
        %720 = vmatprep.subr.mxu0 0.0
        %721 = vmatpush1.msra.mxu0 0.0
        %722 = vmatprep.subr.mxu0 0.0
        %723 = vmatpush1.msra.mxu0 0.0
        %724 = vmatprep.subr.mxu0 0.0
        %725 = vmatpush1.msra.mxu0 0.0
        %726 = vmatprep.subr.mxu0 0.0
        %727 = vmatpush1.msra.mxu0 0.0
        %728 = vmatprep.subr.mxu0 0.0
        %729 = vmatpush1.msra.mxu0 0.0
        %730 = vmatprep.subr.mxu0 0.0
        %731 = vmatpush1.msra.mxu0 0.0
        %732 = vmatprep.subr.mxu0 0.0
        %733 = vmatpush1.msra.mxu0 0.0
        %734 = vmatprep.subr.mxu0 0.0
        %735 = vmatpush1.msra.mxu0 0.0
        %736 = vmatprep.subr.mxu0 0.0
        %737 = vmatpush1.msra.mxu0 0.0
        %738 = vmatprep.subr.mxu0 0.0
        %739 = vmatpush1.msra.mxu0 0.0
        %740 = vmatprep.subr.mxu0 0.0
        %741 = vmatpush1.msra.mxu0 0.0
        %742 = vmatprep.subr.mxu0 0.0
        %743 = vmatpush1.msra.mxu0 0.0
        %744 = vmatprep.mubr.f32.mxu0 0.0
        %745 = vmatmul.mubr.f32.gmra.mrb[0].mxu0 %v260
        %v746 = vpop.f32.mrb[0].mxu0
        %v747 = vadd.f32 0.0, %v746
        %v748 = vpop.f32.mrb[0].mxu0
        %749 = vmatprep.mubr.f32.mxu0 0.0
        %750 = vmatmul.mubr.f32.gmra.mrb[0].mxu0 %v263
        %v751 = vpop.f32.mrb[0].mxu0
        %v752 = vadd.f32 0.0, %v751
        %v753 = vpop.f32.mrb[0].mxu0
        %754 = vmatprep.mubr.f32.mxu0 0.0
        %755 = vmatmul.mubr.f32.gmra.mrb[0].mxu0 %v266
        %v756 = vpop.f32.mrb[0].mxu0
        %v757 = vadd.f32 0.0, %v756
        %v758 = vpop.f32.mrb[0].mxu0
        %759 = vmatprep.mubr.f32.mxu0 0.0
        %760 = vmatmul.mubr.f32.gmra.mrb[0].mxu0 %v269
        %v761 = vpop.f32.mrb[0].mxu0
        %v762 = vadd.f32 0.0, %v761
        %v763 = vpop.f32.mrb[0].mxu0
        %764 = vmatprep.mubr.f32.mxu0 0.0
        %765 = vmatmul.mubr.f32.gmra.mrb[0].mxu0 %v272
        %v766 = vpop.f32.mrb[0].mxu0
        %v767 = vadd.f32 0.0, %v766
        %v768 = vpop.f32.mrb[0].mxu0
        %769 = vmatprep.mubr.f32.mxu0 0.0
        %770 = vmatmul.mubr.f32.gmra.mrb[0].mxu0 %v275
        %v771 = vpop.f32.mrb[0].mxu0
        %v772 = vadd.f32 0.0, %v771
        %v773 = vpop.f32.mrb[0].mxu0
        %774 = vmatprep.mubr.f32.mxu0 0.0
        %775 = vmatmul.mubr.f32.gmra.mrb[0].mxu0 %v278
        %v776 = vpop.f32.mrb[0].mxu0
        %v777 = vadd.f32 0.0, %v776
        %v778 = vpop.f32.mrb[0].mxu0
        %779 = vmatprep.mubr.f32.mxu0 0.0
        %780 = vmatmul.mubr.f32.gmra.mrb[0].mxu0 %v281
        %v781 = vpop.f32.mrb[0].mxu0
        %v782 = vadd.f32 0.0, %v781
        %v783 = vpop.f32.mrb[0].mxu0
        %784 = vmatprep.mubr.f32.mxu0 0.0
        %785 = vmatmul.mubr.f32.gmra.mrb[0].mxu0 %v284
        %v786 = vpop.f32.mrb[0].mxu0
        %v787 = vadd.f32 0.0, %v786
        %v788 = vpop.f32.mrb[0].mxu0
        %789 = vmatprep.mubr.f32.mxu0 0.0
        %790 = vmatmul.mubr.f32.gmra.mrb[0].mxu0 %v287
        %v791 = vpop.f32.mrb[0].mxu0
        %v792 = vadd.f32 0.0, %v791
        %v793 = vpop.f32.mrb[0].mxu0
        %794 = vmatprep.mubr.f32.mxu0 0.0
        %795 = vmatmul.mubr.f32.gmra.mrb[0].mxu0 %v290
        %v796 = vpop.f32.mrb[0].mxu0
        %v797 = vadd.f32 0.0, %v796
        %v798 = vpop.f32.mrb[0].mxu0
        %799 = vmatprep.mubr.f32.mxu0 0.0
        %800 = vmatmul.mubr.f32.gmra.mrb[0].mxu0 %v293
        %v801 = vpop.f32.mrb[0].mxu0
        %v802 = vadd.f32 0.0, %v801
        %v803 = vpop.f32.mrb[0].mxu0
        %804 = vmatprep.mubr.f32.mxu0 0.0
        %805 = vmatmul.mubr.f32.gmra.mrb[0].mxu0 %v296
        %v806 = vpop.f32.mrb[0].mxu0
        %v807 = vadd.f32 0.0, %v806
        %v808 = vpop.f32.mrb[0].mxu0
        %809 = vmatprep.mubr.f32.mxu0 0.0
        %810 = vmatmul.mubr.f32.gmra.mrb[0].mxu0 %v299
        %v811 = vpop.f32.mrb[0].mxu0
        %v812 = vadd.f32 0.0, %v811
        %v813 = vpop.f32.mrb[0].mxu0
        %814 = vmatprep.mubr.f32.mxu0 0.0
        %815 = vmatmul.mubr.f32.gmra.mrb[0].mxu0 %v302
        %v816 = vpop.f32.mrb[0].mxu0
        %v817 = vadd.f32 0.0, %v816
        %v818 = vpop.f32.mrb[0].mxu0
        %819 = vmatprep.mubr.f32.mxu0 0.0
        %820 = vmatmul.mubr.f32.gmra.mrb[0].mxu0 %v305
        %v821 = vpop.f32.mrb[0].mxu0
        %v822 = vadd.f32 0.0, %v821
        %v823 = vpop.f32.mrb[0].mxu0
        %824 = vdwg.mxu0
        %v825 = vmul.f32 %v747, %v229
        %v826 = vmul.f32 %v752, %v230
        %v827 = vmul.f32 %v757, %v231
        %v828 = vmul.f32 %v762, %v232
        %v829 = vmul.f32 %v767, %v233
        %v830 = vmul.f32 %v772, %v234
        %v831 = vmul.f32 %v777, %v235
        %v832 = vmul.f32 %v782, %v236
        %v833 = vmul.f32 %v787, %v237
        %v834 = vmul.f32 %v792, %v238
        %v835 = vmul.f32 %v797, %v239
        %v836 = vmul.f32 %v802, %v240
        %v837 = vmul.f32 %v807, %v241
        %v838 = vmul.f32 %v812, %v242
        %v839 = vmul.f32 %v817, %v243
        %v840 = vmul.f32 %v822, %v244
        %vm841 = vcmask 392192
        %v843 = vsel %vm841, %v825, 0
        %v846 = vsel %vm841, %v826, 0
        %v849 = vsel %vm841, %v827, 0
        %v852 = vsel %vm841, %v828, 0
        %v855 = vsel %vm841, %v829, 0
        %v858 = vsel %vm841, %v830, 0
        %v861 = vsel %vm841, %v831, 0
        %v864 = vsel %vm841, %v832, 0
        %v867 = vsel %vm841, %v833, 0
        %v870 = vsel %vm841, %v834, 0
        %v873 = vsel %vm841, %v835, 0
        %v876 = vsel %vm841, %v836, 0
        %v879 = vsel %vm841, %v837, 0
        %v882 = vsel %vm841, %v838, 0
        %v885 = vsel %vm841, %v839, 0
        %v888 = vsel %vm841, %v840, 0
        %890 = vmatprep.subr.mxu0 0.0
        %891 = vmatpush1.msra.mxu0 %v245
        %892 = vmatprep.subr.mxu0 0.0
        %893 = vmatpush1.msra.mxu0 %v246
        %894 = vmatprep.subr.mxu0 0.0
        %895 = vmatpush1.msra.mxu0 %v247
        %896 = vmatprep.subr.mxu0 0.0
        %897 = vmatpush1.msra.mxu0 %v248
        %898 = vmatprep.subr.mxu0 0.0
        %899 = vmatpush1.msra.mxu0 %v249
        %900 = vmatprep.subr.mxu0 0.0
        %901 = vmatpush1.msra.mxu0 %v250
        %902 = vmatprep.subr.mxu0 0.0
        %903 = vmatpush1.msra.mxu0 0.0
        %904 = vmatprep.subr.mxu0 0.0
        %905 = vmatpush1.msra.mxu0 0.0
        %906 = vmatprep.subr.mxu0 0.0
        %907 = vmatpush1.msra.mxu0 0.0
        %908 = vmatprep.subr.mxu0 0.0
        %909 = vmatpush1.msra.mxu0 0.0
        %910 = vmatprep.subr.mxu0 0.0
        %911 = vmatpush1.msra.mxu0 0.0
        %912 = vmatprep.subr.mxu0 0.0
        %913 = vmatpush1.msra.mxu0 0.0
        %914 = vmatprep.subr.mxu0 0.0
        %915 = vmatpush1.msra.mxu0 0.0
        %916 = vmatprep.subr.mxu0 0.0
        %917 = vmatpush1.msra.mxu0 0.0
        %918 = vmatprep.subr.mxu0 0.0
        %919 = vmatpush1.msra.mxu0 0.0
        %920 = vmatprep.subr.mxu0 0.0
        %921 = vmatpush1.msra.mxu0 0.0
        %922 = vmatprep.subr.mxu0 0.0
        %923 = vmatpush1.msra.mxu0 0.0
        %924 = vmatprep.subr.mxu0 0.0
        %925 = vmatpush1.msra.mxu0 0.0
        %926 = vmatprep.subr.mxu0 0.0
        %927 = vmatpush1.msra.mxu0 0.0
        %928 = vmatprep.subr.mxu0 0.0
        %929 = vmatpush1.msra.mxu0 0.0
        %930 = vmatprep.subr.mxu0 0.0
        %931 = vmatpush1.msra.mxu0 0.0
        %932 = vmatprep.subr.mxu0 0.0
        %933 = vmatpush1.msra.mxu0 0.0
        %934 = vmatprep.subr.mxu0 0.0
        %935 = vmatpush1.msra.mxu0 0.0
        %936 = vmatprep.subr.mxu0 0.0
        %937 = vmatpush1.msra.mxu0 0.0
        %938 = vmatprep.subr.mxu0 0.0
        %939 = vmatpush1.msra.mxu0 0.0
        %940 = vmatprep.subr.mxu0 0.0
        %941 = vmatpush1.msra.mxu0 0.0
        %942 = vmatprep.subr.mxu0 0.0
        %943 = vmatpush1.msra.mxu0 0.0
        %944 = vmatprep.subr.mxu0 0.0
        %945 = vmatpush1.msra.mxu0 0.0
        %946 = vmatprep.subr.mxu0 0.0
        %947 = vmatpush1.msra.mxu0 0.0
        %948 = vmatprep.subr.mxu0 0.0
        %949 = vmatpush1.msra.mxu0 0.0
        %950 = vmatprep.subr.mxu0 0.0
        %951 = vmatpush1.msra.mxu0 0.0
        %952 = vmatprep.subr.mxu0 0.0
        %953 = vmatpush1.msra.mxu0 0.0
        %954 = vmatprep.mubr.f32.mxu0 0.0
        %955 = vmatmul.mubr.f32.gmra.mrb[0].mxu0 %v843
        %v956 = vpop.f32.mrb[0].mxu0
        %v957 = vadd.f32 0.0, %v956
        %v958 = vpop.f32.mrb[0].mxu0
        %959 = vmatprep.mubr.f32.mxu0 0.0
        %960 = vmatmul.mubr.f32.gmra.mrb[0].mxu0 %v846
        %v961 = vpop.f32.mrb[0].mxu0
        %v962 = vadd.f32 0.0, %v961
        %v963 = vpop.f32.mrb[0].mxu0
        %964 = vmatprep.mubr.f32.mxu0 0.0
        %965 = vmatmul.mubr.f32.gmra.mrb[0].mxu0 %v849
        %v966 = vpop.f32.mrb[0].mxu0
        %v967 = vadd.f32 0.0, %v966
        %v968 = vpop.f32.mrb[0].mxu0
        %969 = vmatprep.mubr.f32.mxu0 0.0
        %970 = vmatmul.mubr.f32.gmra.mrb[0].mxu0 %v852
        %v971 = vpop.f32.mrb[0].mxu0
        %v972 = vadd.f32 0.0, %v971
        %v973 = vpop.f32.mrb[0].mxu0
        %974 = vmatprep.mubr.f32.mxu0 0.0
        %975 = vmatmul.mubr.f32.gmra.mrb[0].mxu0 %v855
        %v976 = vpop.f32.mrb[0].mxu0
        %v977 = vadd.f32 0.0, %v976
        %v978 = vpop.f32.mrb[0].mxu0
        %979 = vmatprep.mubr.f32.mxu0 0.0
        %980 = vmatmul.mubr.f32.gmra.mrb[0].mxu0 %v858
        %v981 = vpop.f32.mrb[0].mxu0
        %v982 = vadd.f32 0.0, %v981
        %v983 = vpop.f32.mrb[0].mxu0
        %984 = vmatprep.mubr.f32.mxu0 0.0
        %985 = vmatmul.mubr.f32.gmra.mrb[0].mxu0 %v861
        %v986 = vpop.f32.mrb[0].mxu0
        %v987 = vadd.f32 0.0, %v986
        %v988 = vpop.f32.mrb[0].mxu0
        %989 = vmatprep.mubr.f32.mxu0 0.0
        %990 = vmatmul.mubr.f32.gmra.mrb[0].mxu0 %v864
        %v991 = vpop.f32.mrb[0].mxu0
        %v992 = vadd.f32 0.0, %v991
        %v993 = vpop.f32.mrb[0].mxu0
        %994 = vmatprep.mubr.f32.mxu0 0.0
        %995 = vmatmul.mubr.f32.gmra.mrb[0].mxu0 %v867
        %v996 = vpop.f32.mrb[0].mxu0
        %v997 = vadd.f32 0.0, %v996
        %v998 = vpop.f32.mrb[0].mxu0
        %999 = vmatprep.mubr.f32.mxu0 0.0
        %1000 = vmatmul.mubr.f32.gmra.mrb[0].mxu0 %v870
        %v1001 = vpop.f32.mrb[0].mxu0
        %v1002 = vadd.f32 0.0, %v1001
        %v1003 = vpop.f32.mrb[0].mxu0
        %1004 = vmatprep.mubr.f32.mxu0 0.0
        %1005 = vmatmul.mubr.f32.gmra.mrb[0].mxu0 %v873
        %v1006 = vpop.f32.mrb[0].mxu0
        %v1007 = vadd.f32 0.0, %v1006
        %v1008 = vpop.f32.mrb[0].mxu0
        %1009 = vmatprep.mubr.f32.mxu0 0.0
        %1010 = vmatmul.mubr.f32.gmra.mrb[0].mxu0 %v876
        %v1011 = vpop.f32.mrb[0].mxu0
        %v1012 = vadd.f32 0.0, %v1011
        %v1013 = vpop.f32.mrb[0].mxu0
        %1014 = vmatprep.mubr.f32.mxu0 0.0
        %1015 = vmatmul.mubr.f32.gmra.mrb[0].mxu0 %v879
        %v1016 = vpop.f32.mrb[0].mxu0
        %v1017 = vadd.f32 0.0, %v1016
        %v1018 = vpop.f32.mrb[0].mxu0
        %1019 = vmatprep.mubr.f32.mxu0 0.0
        %1020 = vmatmul.mubr.f32.gmra.mrb[0].mxu0 %v882
        %v1021 = vpop.f32.mrb[0].mxu0
        %v1022 = vadd.f32 0.0, %v1021
        %v1023 = vpop.f32.mrb[0].mxu0
        %1024 = vmatprep.mubr.f32.mxu0 0.0
        %1025 = vmatmul.mubr.f32.gmra.mrb[0].mxu0 %v885
        %v1026 = vpop.f32.mrb[0].mxu0
        %v1027 = vadd.f32 0.0, %v1026
        %v1028 = vpop.f32.mrb[0].mxu0
        %1029 = vmatprep.mubr.f32.mxu0 0.0
        %1030 = vmatmul.mubr.f32.gmra.mrb[0].mxu0 %v888
        %v1031 = vpop.f32.mrb[0].mxu0
        %v1032 = vadd.f32 0.0, %v1031
        %v1033 = vpop.f32.mrb[0].mxu0
        %1034 = vdwg.mxu0
        %1051 = vrot.lane.b32.xlu0 %v957, 124
        %v1052 = vpop.permute.xlu0 %1051
        %1053 = vrot.lane.b32.xlu0 %v962, 124
        %v1054 = vpop.permute.xlu0 %1053
        %1055 = vrot.lane.b32.xlu0 %v967, 124
        %v1056 = vpop.permute.xlu0 %1055
        %1057 = vrot.lane.b32.xlu0 %v972, 124
        %v1058 = vpop.permute.xlu0 %1057
        %1059 = vrot.lane.b32.xlu0 %v977, 124
        %v1060 = vpop.permute.xlu0 %1059
        %1061 = vrot.lane.b32.xlu0 %v982, 124
        %v1062 = vpop.permute.xlu0 %1061
        %1063 = vrot.lane.b32.xlu0 %v987, 124
        %v1064 = vpop.permute.xlu0 %1063
        %1065 = vrot.lane.b32.xlu0 %v992, 124
        %v1066 = vpop.permute.xlu0 %1065
        %1067 = vrot.lane.b32.xlu0 %v997, 124
        %v1068 = vpop.permute.xlu0 %1067
        %1069 = vrot.lane.b32.xlu0 %v1002, 124
        %v1070 = vpop.permute.xlu0 %1069
        %1071 = vrot.lane.b32.xlu0 %v1007, 124
        %v1072 = vpop.permute.xlu0 %1071
        %1073 = vrot.lane.b32.xlu0 %v1012, 124
        %v1074 = vpop.permute.xlu0 %1073
        %1075 = vrot.lane.b32.xlu0 %v1017, 124
        %v1076 = vpop.permute.xlu0 %1075
        %1077 = vrot.lane.b32.xlu0 %v1022, 124
        %v1078 = vpop.permute.xlu0 %1077
        %1079 = vrot.lane.b32.xlu0 %v1027, 124
        %v1080 = vpop.permute.xlu0 %1079
        %1081 = vrot.lane.b32.xlu0 %v1032, 124
        %v1082 = vpop.permute.xlu0 %1081
        %vm1083 = vcmask 31744
        %v1084 = vsel %vm1083, %v957, 0
        %v1086 = vsel %vm1083, %v962, 0
        %v1088 = vsel %vm1083, %v967, 0
        %v1090 = vsel %vm1083, %v972, 0
        %v1092 = vsel %vm1083, %v977, 0
        %v1094 = vsel %vm1083, %v982, 0
        %v1096 = vsel %vm1083, %v987, 0
        %v1098 = vsel %vm1083, %v992, 0
        %v1100 = vsel %vm1083, %v997, 0
        %v1102 = vsel %vm1083, %v1002, 0
        %v1104 = vsel %vm1083, %v1007, 0
        %v1106 = vsel %vm1083, %v1012, 0
        %v1108 = vsel %vm1083, %v1017, 0
        %v1110 = vsel %vm1083, %v1022, 0
        %v1112 = vsel %vm1083, %v1027, 0
        %v1114 = vsel %vm1083, %v1032, 0
        %v1116 = vsel %vm1083, %v1052, 0
        %v1118 = vsel %vm1083, %v1054, 0
        %v1120 = vsel %vm1083, %v1056, 0
        %v1122 = vsel %vm1083, %v1058, 0
        %v1124 = vsel %vm1083, %v1060, 0
        %v1126 = vsel %vm1083, %v1062, 0
        %v1128 = vsel %vm1083, %v1064, 0
        %v1130 = vsel %vm1083, %v1066, 0
        %v1132 = vsel %vm1083, %v1068, 0
        %v1134 = vsel %vm1083, %v1070, 0
        %v1136 = vsel %vm1083, %v1072, 0
        %v1138 = vsel %vm1083, %v1074, 0
        %v1140 = vsel %vm1083, %v1076, 0
        %v1142 = vsel %vm1083, %v1078, 0
        %v1144 = vsel %vm1083, %v1080, 0
        %v1146 = vsel %vm1083, %v1082, 0
        %1148 = vmatprep.subr.mxu0 0.0
        %1149 = vmatpush1.xpose.msra.mxu0 %v1116
        %1150 = vmatprep.subr.mxu0 0.0
        %1151 = vmatpush1.xpose.msra.mxu0 %v1118
        %1152 = vmatprep.subr.mxu0 0.0
        %1153 = vmatpush1.xpose.msra.mxu0 %v1120
        %1154 = vmatprep.subr.mxu0 0.0
        %1155 = vmatpush1.xpose.msra.mxu0 %v1122
        %1156 = vmatprep.subr.mxu0 0.0
        %1157 = vmatpush1.xpose.msra.mxu0 %v1124
        %1158 = vmatprep.subr.mxu0 0.0
        %1159 = vmatpush1.xpose.msra.mxu0 %v1126
        %1160 = vmatprep.subr.mxu0 0.0
        %1161 = vmatpush1.xpose.msra.mxu0 %v1128
        %1162 = vmatprep.subr.mxu0 0.0
        %1163 = vmatpush1.xpose.msra.mxu0 %v1130
        %1164 = vmatprep.subr.mxu0 0.0
        %1165 = vmatpush1.xpose.msra.mxu0 %v1132
        %1166 = vmatprep.subr.mxu0 0.0
        %1167 = vmatpush1.xpose.msra.mxu0 %v1134
        %1168 = vmatprep.subr.mxu0 0.0
        %1169 = vmatpush1.xpose.msra.mxu0 %v1136
        %1170 = vmatprep.subr.mxu0 0.0
        %1171 = vmatpush1.xpose.msra.mxu0 %v1138
        %1172 = vmatprep.subr.mxu0 0.0
        %1173 = vmatpush1.xpose.msra.mxu0 %v1140
        %1174 = vmatprep.subr.mxu0 0.0
        %1175 = vmatpush1.xpose.msra.mxu0 %v1142
        %1176 = vmatprep.subr.mxu0 0.0
        %1177 = vmatpush1.xpose.msra.mxu0 %v1144
        %1178 = vmatprep.subr.mxu0 0.0
        %1179 = vmatpush1.xpose.msra.mxu0 %v1146
        %1180 = vmatprep.subr.mxu0 0.0
        %1181 = vmatpush1.xpose.msra.mxu0 0.0
        %1182 = vmatprep.subr.mxu0 0.0
        %1183 = vmatpush1.xpose.msra.mxu0 0.0
        %1184 = vmatprep.subr.mxu0 0.0
        %1185 = vmatpush1.xpose.msra.mxu0 0.0
        %1186 = vmatprep.subr.mxu0 0.0
        %1187 = vmatpush1.xpose.msra.mxu0 0.0
        %1188 = vmatprep.subr.mxu0 0.0
        %1189 = vmatpush1.xpose.msra.mxu0 0.0
        %1190 = vmatprep.subr.mxu0 0.0
        %1191 = vmatpush1.xpose.msra.mxu0 0.0
        %1192 = vmatprep.subr.mxu0 0.0
        %1193 = vmatpush1.xpose.msra.mxu0 0.0
        %1194 = vmatprep.subr.mxu0 0.0
        %1195 = vmatpush1.xpose.msra.mxu0 0.0
        %1196 = vmatprep.subr.mxu0 0.0
        %1197 = vmatpush1.xpose.msra.mxu0 0.0
        %1198 = vmatprep.subr.mxu0 0.0
        %1199 = vmatpush1.xpose.msra.mxu0 0.0
        %1200 = vmatprep.subr.mxu0 0.0
        %1201 = vmatpush1.xpose.msra.mxu0 0.0
        %1202 = vmatprep.subr.mxu0 0.0
        %1203 = vmatpush1.xpose.msra.mxu0 0.0
        %1204 = vmatprep.subr.mxu0 0.0
        %1205 = vmatpush1.xpose.msra.mxu0 0.0
        %1206 = vmatprep.subr.mxu0 0.0
        %1207 = vmatpush1.xpose.msra.mxu0 0.0
        %1208 = vmatprep.subr.mxu0 0.0
        %1209 = vmatpush1.xpose.msra.mxu0 0.0
        %1210 = vmatprep.subr.mxu0 0.0
        %1211 = vmatpush1.xpose.msra.mxu0 0.0
        %1212 = vmatprep.mubr.f32.mxu0 0.0
        %1213 = vmatmul.mubr.f32.gmra.mrb[0].mxu0 %v1084
        %v1214 = vpop.f32.mrb[0].mxu0
        %v1215 = vadd.f32 0.0, %v1214
        %v1216 = vpop.f32.mrb[0].mxu0
        %1217 = vmatprep.mubr.f32.mxu0 0.0
        %1218 = vmatmul.mubr.f32.gmra.mrb[0].mxu0 %v1086
        %v1219 = vpop.f32.mrb[0].mxu0
        %v1220 = vadd.f32 0.0, %v1219
        %v1221 = vpop.f32.mrb[0].mxu0
        %1222 = vmatprep.mubr.f32.mxu0 0.0
        %1223 = vmatmul.mubr.f32.gmra.mrb[0].mxu0 %v1088
        %v1224 = vpop.f32.mrb[0].mxu0
        %v1225 = vadd.f32 0.0, %v1224
        %v1226 = vpop.f32.mrb[0].mxu0
        %1227 = vmatprep.mubr.f32.mxu0 0.0
        %1228 = vmatmul.mubr.f32.gmra.mrb[0].mxu0 %v1090
        %v1229 = vpop.f32.mrb[0].mxu0
        %v1230 = vadd.f32 0.0, %v1229
        %v1231 = vpop.f32.mrb[0].mxu0
        %1232 = vmatprep.mubr.f32.mxu0 0.0
        %1233 = vmatmul.mubr.f32.gmra.mrb[0].mxu0 %v1092
        %v1234 = vpop.f32.mrb[0].mxu0
        %v1235 = vadd.f32 0.0, %v1234
        %v1236 = vpop.f32.mrb[0].mxu0
        %1237 = vmatprep.mubr.f32.mxu0 0.0
        %1238 = vmatmul.mubr.f32.gmra.mrb[0].mxu0 %v1094
        %v1239 = vpop.f32.mrb[0].mxu0
        %v1240 = vadd.f32 0.0, %v1239
        %v1241 = vpop.f32.mrb[0].mxu0
        %1242 = vmatprep.mubr.f32.mxu0 0.0
        %1243 = vmatmul.mubr.f32.gmra.mrb[0].mxu0 %v1096
        %v1244 = vpop.f32.mrb[0].mxu0
        %v1245 = vadd.f32 0.0, %v1244
        %v1246 = vpop.f32.mrb[0].mxu0
        %1247 = vmatprep.mubr.f32.mxu0 0.0
        %1248 = vmatmul.mubr.f32.gmra.mrb[0].mxu0 %v1098
        %v1249 = vpop.f32.mrb[0].mxu0
        %v1250 = vadd.f32 0.0, %v1249
        %v1251 = vpop.f32.mrb[0].mxu0
        %1252 = vmatprep.mubr.f32.mxu0 0.0
        %1253 = vmatmul.mubr.f32.gmra.mrb[0].mxu0 %v1100
        %v1254 = vpop.f32.mrb[0].mxu0
        %v1255 = vadd.f32 0.0, %v1254
        %v1256 = vpop.f32.mrb[0].mxu0
        %1257 = vmatprep.mubr.f32.mxu0 0.0
        %1258 = vmatmul.mubr.f32.gmra.mrb[0].mxu0 %v1102
        %v1259 = vpop.f32.mrb[0].mxu0
        %v1260 = vadd.f32 0.0, %v1259
        %v1261 = vpop.f32.mrb[0].mxu0
        %1262 = vmatprep.mubr.f32.mxu0 0.0
        %1263 = vmatmul.mubr.f32.gmra.mrb[0].mxu0 %v1104
        %v1264 = vpop.f32.mrb[0].mxu0
        %v1265 = vadd.f32 0.0, %v1264
        %v1266 = vpop.f32.mrb[0].mxu0
        %1267 = vmatprep.mubr.f32.mxu0 0.0
        %1268 = vmatmul.mubr.f32.gmra.mrb[0].mxu0 %v1106
        %v1269 = vpop.f32.mrb[0].mxu0
        %v1270 = vadd.f32 0.0, %v1269
        %v1271 = vpop.f32.mrb[0].mxu0
        %1272 = vmatprep.mubr.f32.mxu0 0.0
        %1273 = vmatmul.mubr.f32.gmra.mrb[0].mxu0 %v1108
        %v1274 = vpop.f32.mrb[0].mxu0
        %v1275 = vadd.f32 0.0, %v1274
        %v1276 = vpop.f32.mrb[0].mxu0
        %1277 = vmatprep.mubr.f32.mxu0 0.0
        %1278 = vmatmul.mubr.f32.gmra.mrb[0].mxu0 %v1110
        %v1279 = vpop.f32.mrb[0].mxu0
        %v1280 = vadd.f32 0.0, %v1279
        %v1281 = vpop.f32.mrb[0].mxu0
        %1282 = vmatprep.mubr.f32.mxu0 0.0
        %1283 = vmatmul.mubr.f32.gmra.mrb[0].mxu0 %v1112
        %v1284 = vpop.f32.mrb[0].mxu0
        %v1285 = vadd.f32 0.0, %v1284
        %v1286 = vpop.f32.mrb[0].mxu0
        %1287 = vmatprep.mubr.f32.mxu0 0.0
        %1288 = vmatmul.mubr.f32.gmra.mrb[0].mxu0 %v1114
        %v1289 = vpop.f32.mrb[0].mxu0
        %v1290 = vadd.f32 0.0, %v1289
        %v1291 = vpop.f32.mrb[0].mxu0
        %1292 = vdwg.mxu0
        %1293 = vmax.xlane.f32.xlu0 %v1215
        %v1294 = vpop.xlane.xlu0 %1293
        %1295 = vmax.xlane.f32.xlu0 %v1220
        %v1296 = vpop.xlane.xlu0 %1295
        %1297 = vmax.xlane.f32.xlu0 %v1225
        %v1298 = vpop.xlane.xlu0 %1297
        %1299 = vmax.xlane.f32.xlu0 %v1230
        %v1300 = vpop.xlane.xlu0 %1299
        %1301 = vmax.xlane.f32.xlu0 %v1235
        %v1302 = vpop.xlane.xlu0 %1301
        %1303 = vmax.xlane.f32.xlu0 %v1240
        %v1304 = vpop.xlane.xlu0 %1303
        %1305 = vmax.xlane.f32.xlu0 %v1245
        %v1306 = vpop.xlane.xlu0 %1305
        %1307 = vmax.xlane.f32.xlu0 %v1250
        %v1308 = vpop.xlane.xlu0 %1307
        %1309 = vmax.xlane.f32.xlu0 %v1255
        %v1310 = vpop.xlane.xlu0 %1309
        %1311 = vmax.xlane.f32.xlu0 %v1260
        %v1312 = vpop.xlane.xlu0 %1311
        %1313 = vmax.xlane.f32.xlu0 %v1265
        %v1314 = vpop.xlane.xlu0 %1313
        %1315 = vmax.xlane.f32.xlu0 %v1270
        %v1316 = vpop.xlane.xlu0 %1315
        %1317 = vmax.xlane.f32.xlu0 %v1275
        %v1318 = vpop.xlane.xlu0 %1317
        %1319 = vmax.xlane.f32.xlu0 %v1280
        %v1320 = vpop.xlane.xlu0 %1319
        %1321 = vmax.xlane.f32.xlu0 %v1285
        %v1322 = vpop.xlane.xlu0 %1321
        %1323 = vmax.xlane.f32.xlu0 %v1290
        %v1324 = vpop.xlane.xlu0 %1323
        %v1325 = vsub.f32 %v1215, %v1294
        %v1326 = vsub.f32 %v1220, %v1296
        %v1327 = vsub.f32 %v1225, %v1298
        %v1328 = vsub.f32 %v1230, %v1300
        %v1329 = vsub.f32 %v1235, %v1302
        %v1330 = vsub.f32 %v1240, %v1304
        %v1331 = vsub.f32 %v1245, %v1306
        %v1332 = vsub.f32 %v1250, %v1308
        %v1333 = vsub.f32 %v1255, %v1310
        %v1334 = vsub.f32 %v1260, %v1312
        %v1335 = vsub.f32 %v1265, %v1314
        %v1336 = vsub.f32 %v1270, %v1316
        %v1337 = vsub.f32 %v1275, %v1318
        %v1338 = vsub.f32 %v1280, %v1320
        %v1339 = vsub.f32 %v1285, %v1322
        %v1340 = vsub.f32 %v1290, %v1324
        %v1341 = vmul.f32 %v1325, 1.442695
        %v1342 = vpow.pop %v1341
        %v1343 = vmul.f32 %v1326, 1.442695
        %v1344 = vpow.pop %v1343
        %v1345 = vmul.f32 %v1327, 1.442695
        %v1346 = vpow.pop %v1345
        %v1347 = vmul.f32 %v1328, 1.442695
        %v1348 = vpow.pop %v1347
        %v1349 = vmul.f32 %v1329, 1.442695
        %v1350 = vpow.pop %v1349
        %v1351 = vmul.f32 %v1330, 1.442695
        %v1352 = vpow.pop %v1351
        %v1353 = vmul.f32 %v1331, 1.442695
        %v1354 = vpow.pop %v1353
        %v1355 = vmul.f32 %v1332, 1.442695
        %v1356 = vpow.pop %v1355
        %v1357 = vmul.f32 %v1333, 1.442695
        %v1358 = vpow.pop %v1357
        %v1359 = vmul.f32 %v1334, 1.442695
        %v1360 = vpow.pop %v1359
        %v1361 = vmul.f32 %v1335, 1.442695
        %v1362 = vpow.pop %v1361
        %v1363 = vmul.f32 %v1336, 1.442695
        %v1364 = vpow.pop %v1363
        %v1365 = vmul.f32 %v1337, 1.442695
        %v1366 = vpow.pop %v1365
        %v1367 = vmul.f32 %v1338, 1.442695
        %v1368 = vpow.pop %v1367
        %v1369 = vmul.f32 %v1339, 1.442695
        %v1370 = vpow.pop %v1369
        %v1371 = vmul.f32 %v1340, 1.442695
        %v1372 = vpow.pop %v1371
        %1373 = vmatprep.subr.mxu0 0.0
        %1374 = vmatpush1.msra.mxu0 %v209
        %1375 = vmatprep.subr.mxu0 0.0
        %1376 = vmatpush1.msra.mxu0 %v210
        %1377 = vmatprep.subr.mxu0 0.0
        %1378 = vmatpush1.msra.mxu0 %v211
        %1379 = vmatprep.subr.mxu0 0.0
        %1380 = vmatpush1.msra.mxu0 %v212
        %1381 = vmatprep.subr.mxu0 0.0
        %1382 = vmatpush1.msra.mxu0 %v213
        %1383 = vmatprep.subr.mxu0 0.0
        %1384 = vmatpush1.msra.mxu0 %v214
        %1385 = vmatprep.subr.mxu0 0.0
        %1386 = vmatpush1.msra.mxu0 %v215
        %1387 = vmatprep.subr.mxu0 0.0
        %1388 = vmatpush1.msra.mxu0 %v216
        %1389 = vmatprep.subr.mxu0 0.0
        %1390 = vmatpush1.msra.mxu0 %v217
        %1391 = vmatprep.subr.mxu0 0.0
        %1392 = vmatpush1.msra.mxu0 %v218
        %1393 = vmatprep.subr.mxu0 0.0
        %1394 = vmatpush1.msra.mxu0 %v219
        %1395 = vmatprep.subr.mxu0 0.0
        %1396 = vmatpush1.msra.mxu0 %v220
        %1397 = vmatprep.subr.mxu0 0.0
        %1398 = vmatpush1.msra.mxu0 %v221
        %1399 = vmatprep.subr.mxu0 0.0
        %1400 = vmatpush1.msra.mxu0 %v222
        %1401 = vmatprep.subr.mxu0 0.0
        %1402 = vmatpush1.msra.mxu0 %v223
        %1403 = vmatprep.subr.mxu0 0.0
        %1404 = vmatpush1.msra.mxu0 %v224
        %1405 = vmatprep.subr.mxu0 0.0
        %1406 = vmatpush1.msra.mxu0 0.0
        %1407 = vmatprep.subr.mxu0 0.0
        %1408 = vmatpush1.msra.mxu0 0.0
        %1409 = vmatprep.subr.mxu0 0.0
        %1410 = vmatpush1.msra.mxu0 0.0
        %1411 = vmatprep.subr.mxu0 0.0
        %1412 = vmatpush1.msra.mxu0 0.0
        %1413 = vmatprep.subr.mxu0 0.0
        %1414 = vmatpush1.msra.mxu0 0.0
        %1415 = vmatprep.subr.mxu0 0.0
        %1416 = vmatpush1.msra.mxu0 0.0
        %1417 = vmatprep.subr.mxu0 0.0
        %1418 = vmatpush1.msra.mxu0 0.0
        %1419 = vmatprep.subr.mxu0 0.0
        %1420 = vmatpush1.msra.mxu0 0.0
        %1421 = vmatprep.subr.mxu0 0.0
        %1422 = vmatpush1.msra.mxu0 0.0
        %1423 = vmatprep.subr.mxu0 0.0
        %1424 = vmatpush1.msra.mxu0 0.0
        %1425 = vmatprep.subr.mxu0 0.0
        %1426 = vmatpush1.msra.mxu0 0.0
        %1427 = vmatprep.subr.mxu0 0.0
        %1428 = vmatpush1.msra.mxu0 0.0
        %1429 = vmatprep.subr.mxu0 0.0
        %1430 = vmatpush1.msra.mxu0 0.0
        %1431 = vmatprep.subr.mxu0 0.0
        %1432 = vmatpush1.msra.mxu0 0.0
        %1433 = vmatprep.subr.mxu0 0.0
        %1434 = vmatpush1.msra.mxu0 0.0
        %1435 = vmatprep.subr.mxu0 0.0
        %1436 = vmatpush1.msra.mxu0 0.0
        %1437 = vmatprep.mubr.f32.mxu0 0.0
        %1438 = vmatmul.mubr.f32.gmra.mrb[0].mxu0 %v1342
        %v1439 = vpop.f32.mrb[0].mxu0
        %v1440 = vadd.f32 0.0, %v1439
        %v1441 = vpop.f32.mrb[0].mxu0
        %1442 = vmatprep.mubr.f32.mxu0 0.0
        %1443 = vmatmul.mubr.f32.gmra.mrb[0].mxu0 %v1344
        %v1444 = vpop.f32.mrb[0].mxu0
        %v1445 = vadd.f32 0.0, %v1444
        %v1446 = vpop.f32.mrb[0].mxu0
        %1447 = vmatprep.mubr.f32.mxu0 0.0
        %1448 = vmatmul.mubr.f32.gmra.mrb[0].mxu0 %v1346
        %v1449 = vpop.f32.mrb[0].mxu0
        %v1450 = vadd.f32 0.0, %v1449
        %v1451 = vpop.f32.mrb[0].mxu0
        %1452 = vmatprep.mubr.f32.mxu0 0.0
        %1453 = vmatmul.mubr.f32.gmra.mrb[0].mxu0 %v1348
        %v1454 = vpop.f32.mrb[0].mxu0
        %v1455 = vadd.f32 0.0, %v1454
        %v1456 = vpop.f32.mrb[0].mxu0
        %1457 = vmatprep.mubr.f32.mxu0 0.0
        %1458 = vmatmul.mubr.f32.gmra.mrb[0].mxu0 %v1350
        %v1459 = vpop.f32.mrb[0].mxu0
        %v1460 = vadd.f32 0.0, %v1459
        %v1461 = vpop.f32.mrb[0].mxu0
        %1462 = vmatprep.mubr.f32.mxu0 0.0
        %1463 = vmatmul.mubr.f32.gmra.mrb[0].mxu0 %v1352
        %v1464 = vpop.f32.mrb[0].mxu0
        %v1465 = vadd.f32 0.0, %v1464
        %v1466 = vpop.f32.mrb[0].mxu0
        %1467 = vmatprep.mubr.f32.mxu0 0.0
        %1468 = vmatmul.mubr.f32.gmra.mrb[0].mxu0 %v1354
        %v1469 = vpop.f32.mrb[0].mxu0
        %v1470 = vadd.f32 0.0, %v1469
        %v1471 = vpop.f32.mrb[0].mxu0
        %1472 = vmatprep.mubr.f32.mxu0 0.0
        %1473 = vmatmul.mubr.f32.gmra.mrb[0].mxu0 %v1356
        %v1474 = vpop.f32.mrb[0].mxu0
        %v1475 = vadd.f32 0.0, %v1474
        %v1476 = vpop.f32.mrb[0].mxu0
        %1477 = vmatprep.mubr.f32.mxu0 0.0
        %1478 = vmatmul.mubr.f32.gmra.mrb[0].mxu0 %v1358
        %v1479 = vpop.f32.mrb[0].mxu0
        %v1480 = vadd.f32 0.0, %v1479
        %v1481 = vpop.f32.mrb[0].mxu0
        %1482 = vmatprep.mubr.f32.mxu0 0.0
        %1483 = vmatmul.mubr.f32.gmra.mrb[0].mxu0 %v1360
        %v1484 = vpop.f32.mrb[0].mxu0
        %v1485 = vadd.f32 0.0, %v1484
        %v1486 = vpop.f32.mrb[0].mxu0
        %1487 = vmatprep.mubr.f32.mxu0 0.0
        %1488 = vmatmul.mubr.f32.gmra.mrb[0].mxu0 %v1362
        %v1489 = vpop.f32.mrb[0].mxu0
        %v1490 = vadd.f32 0.0, %v1489
        %v1491 = vpop.f32.mrb[0].mxu0
        %1492 = vmatprep.mubr.f32.mxu0 0.0
        %1493 = vmatmul.mubr.f32.gmra.mrb[0].mxu0 %v1364
        %v1494 = vpop.f32.mrb[0].mxu0
        %v1495 = vadd.f32 0.0, %v1494
        %v1496 = vpop.f32.mrb[0].mxu0
        %1497 = vmatprep.mubr.f32.mxu0 0.0
        %1498 = vmatmul.mubr.f32.gmra.mrb[0].mxu0 %v1366
        %v1499 = vpop.f32.mrb[0].mxu0
        %v1500 = vadd.f32 0.0, %v1499
        %v1501 = vpop.f32.mrb[0].mxu0
        %1502 = vmatprep.mubr.f32.mxu0 0.0
        %1503 = vmatmul.mubr.f32.gmra.mrb[0].mxu0 %v1368
        %v1504 = vpop.f32.mrb[0].mxu0
        %v1505 = vadd.f32 0.0, %v1504
        %v1506 = vpop.f32.mrb[0].mxu0
        %1507 = vmatprep.mubr.f32.mxu0 0.0
        %1508 = vmatmul.mubr.f32.gmra.mrb[0].mxu0 %v1370
        %v1509 = vpop.f32.mrb[0].mxu0
        %v1510 = vadd.f32 0.0, %v1509
        %v1511 = vpop.f32.mrb[0].mxu0
        %1512 = vmatprep.mubr.f32.mxu0 0.0
        %1513 = vmatmul.mubr.f32.gmra.mrb[0].mxu0 %v1372
        %v1514 = vpop.f32.mrb[0].mxu0
        %v1515 = vadd.f32 0.0, %v1514
        %v1516 = vpop.f32.mrb[0].mxu0
        %1517 = vdwg.mxu0
        %v1518 = vmul.f32 %v1440, %v374
        %v1519 = vmul.f32 %v1445, %v379
        %v1520 = vmul.f32 %v1450, %v384
        %v1521 = vmul.f32 %v1455, %v389
        %v1522 = vmul.f32 %v1460, %v394
        %v1523 = vmul.f32 %v1465, %v399
        %v1524 = vmul.f32 %v1470, %v404
        %v1525 = vmul.f32 %v1475, %v409
        %v1526 = vmul.f32 %v1480, %v414
        %v1527 = vmul.f32 %v1485, %v419
        %v1528 = vmul.f32 %v1490, %v424
        %v1529 = vmul.f32 %v1495, %v429
        %v1530 = vmul.f32 %v1500, %v434
        %v1531 = vmul.f32 %v1505, %v439
        %v1532 = vmul.f32 %v1510, %v444
        %v1533 = vmul.f32 %v1515, %v449
        %v1534 = vsub.f32 1.0, %v374
        %v1535 = vsub.f32 1.0, %v379
        %v1536 = vsub.f32 1.0, %v384
        %v1537 = vsub.f32 1.0, %v389
        %v1538 = vsub.f32 1.0, %v394
        %v1539 = vsub.f32 1.0, %v399
        %v1540 = vsub.f32 1.0, %v404
        %v1541 = vsub.f32 1.0, %v409
        %v1542 = vsub.f32 1.0, %v414
        %v1543 = vsub.f32 1.0, %v419
        %v1544 = vsub.f32 1.0, %v424
        %v1545 = vsub.f32 1.0, %v429
        %v1546 = vsub.f32 1.0, %v434
        %v1547 = vsub.f32 1.0, %v439
        %v1548 = vsub.f32 1.0, %v444
        %v1549 = vsub.f32 1.0, %v449
        %v1550 = vadd.f32 %v1518, %v1534
        %v1551 = vadd.f32 %v1519, %v1535
        %v1552 = vadd.f32 %v1520, %v1536
        %v1553 = vadd.f32 %v1521, %v1537
        %v1554 = vadd.f32 %v1522, %v1538
        %v1555 = vadd.f32 %v1523, %v1539
        %v1556 = vadd.f32 %v1524, %v1540
        %v1557 = vadd.f32 %v1525, %v1541
        %v1558 = vadd.f32 %v1526, %v1542
        %v1559 = vadd.f32 %v1527, %v1543
        %v1560 = vadd.f32 %v1528, %v1544
        %v1561 = vadd.f32 %v1529, %v1545
        %v1562 = vadd.f32 %v1530, %v1546
        %v1563 = vadd.f32 %v1531, %v1547
        %v1564 = vadd.f32 %v1532, %v1548
        %v1565 = vadd.f32 %v1533, %v1549
        %v1566 = vrcp.pop %v1550
        %v1567 = vrcp.pop %v1551
        %v1568 = vrcp.pop %v1552
        %v1569 = vrcp.pop %v1553
        %v1570 = vrcp.pop %v1554
        %v1571 = vrcp.pop %v1555
        %v1572 = vrcp.pop %v1556
        %v1573 = vrcp.pop %v1557
        %v1574 = vrcp.pop %v1558
        %v1575 = vrcp.pop %v1559
        %v1576 = vrcp.pop %v1560
        %v1577 = vrcp.pop %v1561
        %v1578 = vrcp.pop %v1562
        %v1579 = vrcp.pop %v1563
        %v1580 = vrcp.pop %v1564
        %v1581 = vrcp.pop %v1565
        %v1582 = vmul.f32 %v374, %v1566
        %v1583 = vmul.f32 %v379, %v1567
        %v1584 = vmul.f32 %v384, %v1568
        %v1585 = vmul.f32 %v389, %v1569
        %v1586 = vmul.f32 %v394, %v1570
        %v1587 = vmul.f32 %v399, %v1571
        %v1588 = vmul.f32 %v404, %v1572
        %v1589 = vmul.f32 %v409, %v1573
        %v1590 = vmul.f32 %v414, %v1574
        %v1591 = vmul.f32 %v419, %v1575
        %v1592 = vmul.f32 %v424, %v1576
        %v1593 = vmul.f32 %v429, %v1577
        %v1594 = vmul.f32 %v434, %v1578
        %v1595 = vmul.f32 %v439, %v1579
        %v1596 = vmul.f32 %v444, %v1580
        %v1597 = vmul.f32 %v449, %v1581
        %v1599 = vsel %vm258, %v1582, 0
        %v1602 = vsel %vm258, %v1583, 0
        %v1605 = vsel %vm258, %v1584, 0
        %v1608 = vsel %vm258, %v1585, 0
        %v1611 = vsel %vm258, %v1586, 0
        %v1614 = vsel %vm258, %v1587, 0
        %v1617 = vsel %vm258, %v1588, 0
        %v1620 = vsel %vm258, %v1589, 0
        %v1623 = vsel %vm258, %v1590, 0
        %v1626 = vsel %vm258, %v1591, 0
        %v1629 = vsel %vm258, %v1592, 0
        %v1632 = vsel %vm258, %v1593, 0
        %v1635 = vsel %vm258, %v1594, 0
        %v1638 = vsel %vm258, %v1595, 0
        %v1641 = vsel %vm258, %v1596, 0
        %v1644 = vsel %vm258, %v1597, 0
        %1646 = vmatprep.subr.mxu0 0.0
        %1647 = vmatpush1.xpose.msra.mxu0 %v260
        %1648 = vmatprep.subr.mxu0 0.0
        %1649 = vmatpush1.xpose.msra.mxu0 %v263
        %1650 = vmatprep.subr.mxu0 0.0
        %1651 = vmatpush1.xpose.msra.mxu0 %v266
        %1652 = vmatprep.subr.mxu0 0.0
        %1653 = vmatpush1.xpose.msra.mxu0 %v269
        %1654 = vmatprep.subr.mxu0 0.0
        %1655 = vmatpush1.xpose.msra.mxu0 %v272
        %1656 = vmatprep.subr.mxu0 0.0
        %1657 = vmatpush1.xpose.msra.mxu0 %v275
        %1658 = vmatprep.subr.mxu0 0.0
        %1659 = vmatpush1.xpose.msra.mxu0 %v278
        %1660 = vmatprep.subr.mxu0 0.0
        %1661 = vmatpush1.xpose.msra.mxu0 %v281
        %1662 = vmatprep.subr.mxu0 0.0
        %1663 = vmatpush1.xpose.msra.mxu0 %v284
        %1664 = vmatprep.subr.mxu0 0.0
        %1665 = vmatpush1.xpose.msra.mxu0 %v287
        %1666 = vmatprep.subr.mxu0 0.0
        %1667 = vmatpush1.xpose.msra.mxu0 %v290
        %1668 = vmatprep.subr.mxu0 0.0
        %1669 = vmatpush1.xpose.msra.mxu0 %v293
        %1670 = vmatprep.subr.mxu0 0.0
        %1671 = vmatpush1.xpose.msra.mxu0 %v296
        %1672 = vmatprep.subr.mxu0 0.0
        %1673 = vmatpush1.xpose.msra.mxu0 %v299
        %1674 = vmatprep.subr.mxu0 0.0
        %1675 = vmatpush1.xpose.msra.mxu0 %v302
        %1676 = vmatprep.subr.mxu0 0.0
        %1677 = vmatpush1.xpose.msra.mxu0 %v305
        %1678 = vmatprep.subr.mxu0 0.0
        %1679 = vmatpush1.xpose.msra.mxu0 0.0
        %1680 = vmatprep.subr.mxu0 0.0
        %1681 = vmatpush1.xpose.msra.mxu0 0.0
        %1682 = vmatprep.subr.mxu0 0.0
        %1683 = vmatpush1.xpose.msra.mxu0 0.0
        %1684 = vmatprep.subr.mxu0 0.0
        %1685 = vmatpush1.xpose.msra.mxu0 0.0
        %1686 = vmatprep.subr.mxu0 0.0
        %1687 = vmatpush1.xpose.msra.mxu0 0.0
        %1688 = vmatprep.subr.mxu0 0.0
        %1689 = vmatpush1.xpose.msra.mxu0 0.0
        %1690 = vmatprep.subr.mxu0 0.0
        %1691 = vmatpush1.xpose.msra.mxu0 0.0
        %1692 = vmatprep.subr.mxu0 0.0
        %1693 = vmatpush1.xpose.msra.mxu0 0.0
        %1694 = vmatprep.subr.mxu0 0.0
        %1695 = vmatpush1.xpose.msra.mxu0 0.0
        %1696 = vmatprep.subr.mxu0 0.0
        %1697 = vmatpush1.xpose.msra.mxu0 0.0
        %1698 = vmatprep.subr.mxu0 0.0
        %1699 = vmatpush1.xpose.msra.mxu0 0.0
        %1700 = vmatprep.subr.mxu0 0.0
        %1701 = vmatpush1.xpose.msra.mxu0 0.0
        %1702 = vmatprep.subr.mxu0 0.0
        %1703 = vmatpush1.xpose.msra.mxu0 0.0
        %1704 = vmatprep.subr.mxu0 0.0
        %1705 = vmatpush1.xpose.msra.mxu0 0.0
        %1706 = vmatprep.subr.mxu0 0.0
        %1707 = vmatpush1.xpose.msra.mxu0 0.0
        %1708 = vmatprep.subr.mxu0 0.0
        %1709 = vmatpush1.xpose.msra.mxu0 0.0
        %1710 = vmatprep.mubr.f32.mxu0 0.0
        %1711 = vmatmul.mubr.f32.gmra.mrb[0].mxu0 %v1599
        %v1712 = vpop.f32.mrb[0].mxu0
        %v1713 = vadd.f32 0.0, %v1712
        %v1714 = vpop.f32.mrb[0].mxu0
        %1715 = vmatprep.mubr.f32.mxu0 0.0
        %1716 = vmatmul.mubr.f32.gmra.mrb[0].mxu0 %v1602
        %v1717 = vpop.f32.mrb[0].mxu0
        %v1718 = vadd.f32 0.0, %v1717
        %v1719 = vpop.f32.mrb[0].mxu0
        %1720 = vmatprep.mubr.f32.mxu0 0.0
        %1721 = vmatmul.mubr.f32.gmra.mrb[0].mxu0 %v1605
        %v1722 = vpop.f32.mrb[0].mxu0
        %v1723 = vadd.f32 0.0, %v1722
        %v1724 = vpop.f32.mrb[0].mxu0
        %1725 = vmatprep.mubr.f32.mxu0 0.0
        %1726 = vmatmul.mubr.f32.gmra.mrb[0].mxu0 %v1608
        %v1727 = vpop.f32.mrb[0].mxu0
        %v1728 = vadd.f32 0.0, %v1727
        %v1729 = vpop.f32.mrb[0].mxu0
        %1730 = vmatprep.mubr.f32.mxu0 0.0
        %1731 = vmatmul.mubr.f32.gmra.mrb[0].mxu0 %v1611
        %v1732 = vpop.f32.mrb[0].mxu0
        %v1733 = vadd.f32 0.0, %v1732
        %v1734 = vpop.f32.mrb[0].mxu0
        %1735 = vmatprep.mubr.f32.mxu0 0.0
        %1736 = vmatmul.mubr.f32.gmra.mrb[0].mxu0 %v1614
        %v1737 = vpop.f32.mrb[0].mxu0
        %v1738 = vadd.f32 0.0, %v1737
        %v1739 = vpop.f32.mrb[0].mxu0
        %1740 = vmatprep.mubr.f32.mxu0 0.0
        %1741 = vmatmul.mubr.f32.gmra.mrb[0].mxu0 %v1617
        %v1742 = vpop.f32.mrb[0].mxu0
        %v1743 = vadd.f32 0.0, %v1742
        %v1744 = vpop.f32.mrb[0].mxu0
        %1745 = vmatprep.mubr.f32.mxu0 0.0
        %1746 = vmatmul.mubr.f32.gmra.mrb[0].mxu0 %v1620
        %v1747 = vpop.f32.mrb[0].mxu0
        %v1748 = vadd.f32 0.0, %v1747
        %v1749 = vpop.f32.mrb[0].mxu0
        %1750 = vmatprep.mubr.f32.mxu0 0.0
        %1751 = vmatmul.mubr.f32.gmra.mrb[0].mxu0 %v1623
        %v1752 = vpop.f32.mrb[0].mxu0
        %v1753 = vadd.f32 0.0, %v1752
        %v1754 = vpop.f32.mrb[0].mxu0
        %1755 = vmatprep.mubr.f32.mxu0 0.0
        %1756 = vmatmul.mubr.f32.gmra.mrb[0].mxu0 %v1626
        %v1757 = vpop.f32.mrb[0].mxu0
        %v1758 = vadd.f32 0.0, %v1757
        %v1759 = vpop.f32.mrb[0].mxu0
        %1760 = vmatprep.mubr.f32.mxu0 0.0
        %1761 = vmatmul.mubr.f32.gmra.mrb[0].mxu0 %v1629
        %v1762 = vpop.f32.mrb[0].mxu0
        %v1763 = vadd.f32 0.0, %v1762
        %v1764 = vpop.f32.mrb[0].mxu0
        %1765 = vmatprep.mubr.f32.mxu0 0.0
        %1766 = vmatmul.mubr.f32.gmra.mrb[0].mxu0 %v1632
        %v1767 = vpop.f32.mrb[0].mxu0
        %v1768 = vadd.f32 0.0, %v1767
        %v1769 = vpop.f32.mrb[0].mxu0
        %1770 = vmatprep.mubr.f32.mxu0 0.0
        %1771 = vmatmul.mubr.f32.gmra.mrb[0].mxu0 %v1635
        %v1772 = vpop.f32.mrb[0].mxu0
        %v1773 = vadd.f32 0.0, %v1772
        %v1774 = vpop.f32.mrb[0].mxu0
        %1775 = vmatprep.mubr.f32.mxu0 0.0
        %1776 = vmatmul.mubr.f32.gmra.mrb[0].mxu0 %v1638
        %v1777 = vpop.f32.mrb[0].mxu0
        %v1778 = vadd.f32 0.0, %v1777
        %v1779 = vpop.f32.mrb[0].mxu0
        %1780 = vmatprep.mubr.f32.mxu0 0.0
        %1781 = vmatmul.mubr.f32.gmra.mrb[0].mxu0 %v1641
        %v1782 = vpop.f32.mrb[0].mxu0
        %v1783 = vadd.f32 0.0, %v1782
        %v1784 = vpop.f32.mrb[0].mxu0
        %1785 = vmatprep.mubr.f32.mxu0 0.0
        %1786 = vmatmul.mubr.f32.gmra.mrb[0].mxu0 %v1644
        %v1787 = vpop.f32.mrb[0].mxu0
        %v1788 = vadd.f32 0.0, %v1787
        %v1789 = vpop.f32.mrb[0].mxu0
        %1790 = vdwg.mxu0
        %v1791 = vmul.f32 %v1342, %v1713
        %v1792 = vmul.f32 %v1344, %v1718
        %v1793 = vmul.f32 %v1346, %v1723
        %v1794 = vmul.f32 %v1348, %v1728
        %v1795 = vmul.f32 %v1350, %v1733
        %v1796 = vmul.f32 %v1352, %v1738
        %v1797 = vmul.f32 %v1354, %v1743
        %v1798 = vmul.f32 %v1356, %v1748
        %v1799 = vmul.f32 %v1358, %v1753
        %v1800 = vmul.f32 %v1360, %v1758
        %v1801 = vmul.f32 %v1362, %v1763
        %v1802 = vmul.f32 %v1364, %v1768
        %v1803 = vmul.f32 %v1366, %v1773
        %v1804 = vmul.f32 %v1368, %v1778
        %v1805 = vmul.f32 %v1370, %v1783
        %v1806 = vmul.f32 %v1372, %v1788
        %1807 = vrot.lane.b32.xlu0 %v957, 120
        %v1808 = vpop.permute.xlu0 %1807
        %1809 = vrot.lane.b32.xlu0 %v962, 120
        %v1810 = vpop.permute.xlu0 %1809
        %1811 = vrot.lane.b32.xlu0 %v967, 120
        %v1812 = vpop.permute.xlu0 %1811
        %1813 = vrot.lane.b32.xlu0 %v972, 120
        %v1814 = vpop.permute.xlu0 %1813
        %1815 = vrot.lane.b32.xlu0 %v977, 120
        %v1816 = vpop.permute.xlu0 %1815
        %1817 = vrot.lane.b32.xlu0 %v982, 120
        %v1818 = vpop.permute.xlu0 %1817
        %1819 = vrot.lane.b32.xlu0 %v987, 120
        %v1820 = vpop.permute.xlu0 %1819
        %1821 = vrot.lane.b32.xlu0 %v992, 120
        %v1822 = vpop.permute.xlu0 %1821
        %1823 = vrot.lane.b32.xlu0 %v997, 120
        %v1824 = vpop.permute.xlu0 %1823
        %1825 = vrot.lane.b32.xlu0 %v1002, 120
        %v1826 = vpop.permute.xlu0 %1825
        %1827 = vrot.lane.b32.xlu0 %v1007, 120
        %v1828 = vpop.permute.xlu0 %1827
        %1829 = vrot.lane.b32.xlu0 %v1012, 120
        %v1830 = vpop.permute.xlu0 %1829
        %1831 = vrot.lane.b32.xlu0 %v1017, 120
        %v1832 = vpop.permute.xlu0 %1831
        %1833 = vrot.lane.b32.xlu0 %v1022, 120
        %v1834 = vpop.permute.xlu0 %1833
        %1835 = vrot.lane.b32.xlu0 %v1027, 120
        %v1836 = vpop.permute.xlu0 %1835
        %1837 = vrot.lane.b32.xlu0 %v1032, 120
        %v1838 = vpop.permute.xlu0 %1837
        %1855 = vmatprep.subr.mxu0 0.0
        %1856 = vmatpush1.msra.mxu0 %v1808
        %1857 = vmatprep.subr.mxu0 0.0
        %1858 = vmatpush1.msra.mxu0 %v1810
        %1859 = vmatprep.subr.mxu0 0.0
        %1860 = vmatpush1.msra.mxu0 %v1812
        %1861 = vmatprep.subr.mxu0 0.0
        %1862 = vmatpush1.msra.mxu0 %v1814
        %1863 = vmatprep.subr.mxu0 0.0
        %1864 = vmatpush1.msra.mxu0 %v1816
        %1865 = vmatprep.subr.mxu0 0.0
        %1866 = vmatpush1.msra.mxu0 %v1818
        %1867 = vmatprep.subr.mxu0 0.0
        %1868 = vmatpush1.msra.mxu0 %v1820
        %1869 = vmatprep.subr.mxu0 0.0
        %1870 = vmatpush1.msra.mxu0 %v1822
        %1871 = vmatprep.subr.mxu0 0.0
        %1872 = vmatpush1.msra.mxu0 %v1824
        %1873 = vmatprep.subr.mxu0 0.0
        %1874 = vmatpush1.msra.mxu0 %v1826
        %1875 = vmatprep.subr.mxu0 0.0
        %1876 = vmatpush1.msra.mxu0 %v1828
        %1877 = vmatprep.subr.mxu0 0.0
        %1878 = vmatpush1.msra.mxu0 %v1830
        %1879 = vmatprep.subr.mxu0 0.0
        %1880 = vmatpush1.msra.mxu0 %v1832
        %1881 = vmatprep.subr.mxu0 0.0
        %1882 = vmatpush1.msra.mxu0 %v1834
        %1883 = vmatprep.subr.mxu0 0.0
        %1884 = vmatpush1.msra.mxu0 %v1836
        %1885 = vmatprep.subr.mxu0 0.0
        %1886 = vmatpush1.msra.mxu0 %v1838
        %1887 = vmatprep.subr.mxu0 0.0
        %1888 = vmatpush1.msra.mxu0 0.0
        %1889 = vmatprep.subr.mxu0 0.0
        %1890 = vmatpush1.msra.mxu0 0.0
        %1891 = vmatprep.subr.mxu0 0.0
        %1892 = vmatpush1.msra.mxu0 0.0
        %1893 = vmatprep.subr.mxu0 0.0
        %1894 = vmatpush1.msra.mxu0 0.0
        %1895 = vmatprep.subr.mxu0 0.0
        %1896 = vmatpush1.msra.mxu0 0.0
        %1897 = vmatprep.subr.mxu0 0.0
        %1898 = vmatpush1.msra.mxu0 0.0
        %1899 = vmatprep.subr.mxu0 0.0
        %1900 = vmatpush1.msra.mxu0 0.0
        %1901 = vmatprep.subr.mxu0 0.0
        %1902 = vmatpush1.msra.mxu0 0.0
        %1903 = vmatprep.subr.mxu0 0.0
        %1904 = vmatpush1.msra.mxu0 0.0
        %1905 = vmatprep.subr.mxu0 0.0
        %1906 = vmatpush1.msra.mxu0 0.0
        %1907 = vmatprep.subr.mxu0 0.0
        %1908 = vmatpush1.msra.mxu0 0.0
        %1909 = vmatprep.subr.mxu0 0.0
        %1910 = vmatpush1.msra.mxu0 0.0
        %1911 = vmatprep.subr.mxu0 0.0
        %1912 = vmatpush1.msra.mxu0 0.0
        %1913 = vmatprep.subr.mxu0 0.0
        %1914 = vmatpush1.msra.mxu0 0.0
        %1915 = vmatprep.subr.mxu0 0.0
        %1916 = vmatpush1.msra.mxu0 0.0
        %1917 = vmatprep.subr.mxu0 0.0
        %1918 = vmatpush1.msra.mxu0 0.0
        %1919 = vmatprep.mubr.f32.mxu0 0.0
        %1920 = vmatmul.mubr.f32.gmra.mrb[0].mxu0 %v1791
        %v1921 = vpop.f32.mrb[0].mxu0
        %v1922 = vadd.f32 0.0, %v1921
        %v1923 = vpop.f32.mrb[0].mxu0
        %1924 = vmatprep.mubr.f32.mxu0 0.0
        %1925 = vmatmul.mubr.f32.gmra.mrb[0].mxu0 %v1792
        %v1926 = vpop.f32.mrb[0].mxu0
        %v1927 = vadd.f32 0.0, %v1926
        %v1928 = vpop.f32.mrb[0].mxu0
        %1929 = vmatprep.mubr.f32.mxu0 0.0
        %1930 = vmatmul.mubr.f32.gmra.mrb[0].mxu0 %v1793
        %v1931 = vpop.f32.mrb[0].mxu0
        %v1932 = vadd.f32 0.0, %v1931
        %v1933 = vpop.f32.mrb[0].mxu0
        %1934 = vmatprep.mubr.f32.mxu0 0.0
        %1935 = vmatmul.mubr.f32.gmra.mrb[0].mxu0 %v1794
        %v1936 = vpop.f32.mrb[0].mxu0
        %v1937 = vadd.f32 0.0, %v1936
        %v1938 = vpop.f32.mrb[0].mxu0
        %1939 = vmatprep.mubr.f32.mxu0 0.0
        %1940 = vmatmul.mubr.f32.gmra.mrb[0].mxu0 %v1795
        %v1941 = vpop.f32.mrb[0].mxu0
        %v1942 = vadd.f32 0.0, %v1941
        %v1943 = vpop.f32.mrb[0].mxu0
        %1944 = vmatprep.mubr.f32.mxu0 0.0
        %1945 = vmatmul.mubr.f32.gmra.mrb[0].mxu0 %v1796
        %v1946 = vpop.f32.mrb[0].mxu0
        %v1947 = vadd.f32 0.0, %v1946
        %v1948 = vpop.f32.mrb[0].mxu0
        %1949 = vmatprep.mubr.f32.mxu0 0.0
        %1950 = vmatmul.mubr.f32.gmra.mrb[0].mxu0 %v1797
        %v1951 = vpop.f32.mrb[0].mxu0
        %v1952 = vadd.f32 0.0, %v1951
        %v1953 = vpop.f32.mrb[0].mxu0
        %1954 = vmatprep.mubr.f32.mxu0 0.0
        %1955 = vmatmul.mubr.f32.gmra.mrb[0].mxu0 %v1798
        %v1956 = vpop.f32.mrb[0].mxu0
        %v1957 = vadd.f32 0.0, %v1956
        %v1958 = vpop.f32.mrb[0].mxu0
        %1959 = vmatprep.mubr.f32.mxu0 0.0
        %1960 = vmatmul.mubr.f32.gmra.mrb[0].mxu0 %v1799
        %v1961 = vpop.f32.mrb[0].mxu0
        %v1962 = vadd.f32 0.0, %v1961
        %v1963 = vpop.f32.mrb[0].mxu0
        %1964 = vmatprep.mubr.f32.mxu0 0.0
        %1965 = vmatmul.mubr.f32.gmra.mrb[0].mxu0 %v1800
        %v1966 = vpop.f32.mrb[0].mxu0
        %v1967 = vadd.f32 0.0, %v1966
        %v1968 = vpop.f32.mrb[0].mxu0
        %1969 = vmatprep.mubr.f32.mxu0 0.0
        %1970 = vmatmul.mubr.f32.gmra.mrb[0].mxu0 %v1801
        %v1971 = vpop.f32.mrb[0].mxu0
        %v1972 = vadd.f32 0.0, %v1971
        %v1973 = vpop.f32.mrb[0].mxu0
        %1974 = vmatprep.mubr.f32.mxu0 0.0
        %1975 = vmatmul.mubr.f32.gmra.mrb[0].mxu0 %v1802
        %v1976 = vpop.f32.mrb[0].mxu0
        %v1977 = vadd.f32 0.0, %v1976
        %v1978 = vpop.f32.mrb[0].mxu0
        %1979 = vmatprep.mubr.f32.mxu0 0.0
        %1980 = vmatmul.mubr.f32.gmra.mrb[0].mxu0 %v1803
        %v1981 = vpop.f32.mrb[0].mxu0
        %v1982 = vadd.f32 0.0, %v1981
        %v1983 = vpop.f32.mrb[0].mxu0
        %1984 = vmatprep.mubr.f32.mxu0 0.0
        %1985 = vmatmul.mubr.f32.gmra.mrb[0].mxu0 %v1804
        %v1986 = vpop.f32.mrb[0].mxu0
        %v1987 = vadd.f32 0.0, %v1986
        %v1988 = vpop.f32.mrb[0].mxu0
        %1989 = vmatprep.mubr.f32.mxu0 0.0
        %1990 = vmatmul.mubr.f32.gmra.mrb[0].mxu0 %v1805
        %v1991 = vpop.f32.mrb[0].mxu0
        %v1992 = vadd.f32 0.0, %v1991
        %v1993 = vpop.f32.mrb[0].mxu0
        %1994 = vmatprep.mubr.f32.mxu0 0.0
        %1995 = vmatmul.mubr.f32.gmra.mrb[0].mxu0 %v1806
        %v1996 = vpop.f32.mrb[0].mxu0
        %v1997 = vadd.f32 0.0, %v1996
        %v1998 = vpop.f32.mrb[0].mxu0
        %1999 = vdwg.mxu0
        %v2001 = vsel %vm1083, %v1922, 0
        %v2004 = vsel %vm1083, %v1927, 0
        %v2007 = vsel %vm1083, %v1932, 0
        %v2010 = vsel %vm1083, %v1937, 0
        %v2013 = vsel %vm1083, %v1942, 0
        %v2016 = vsel %vm1083, %v1947, 0
        %v2019 = vsel %vm1083, %v1952, 0
        %v2022 = vsel %vm1083, %v1957, 0
        %v2025 = vsel %vm1083, %v1962, 0
        %v2028 = vsel %vm1083, %v1967, 0
        %v2031 = vsel %vm1083, %v1972, 0
        %v2034 = vsel %vm1083, %v1977, 0
        %v2037 = vsel %vm1083, %v1982, 0
        %v2040 = vsel %vm1083, %v1987, 0
        %v2043 = vsel %vm1083, %v1992, 0
        %v2046 = vsel %vm1083, %v1997, 0
        %vm2048 = vcmask 1043456
        %v2050 = vsel %vm2048, %v251, 0
        %2052 = vmatprep.subr.mxu0 0.0
        %2053 = vmatpush1.msra.mxu0 %v2050
        %2054 = vmatprep.subr.mxu0 0.0
        %2055 = vmatpush1.msra.mxu0 0.0
        %2056 = vmatprep.subr.mxu0 0.0
        %2057 = vmatpush1.msra.mxu0 0.0
        %2058 = vmatprep.subr.mxu0 0.0
        %2059 = vmatpush1.msra.mxu0 0.0
        %2060 = vmatprep.subr.mxu0 0.0
        %2061 = vmatpush1.msra.mxu0 0.0
        %2062 = vmatprep.subr.mxu0 0.0
        %2063 = vmatpush1.msra.mxu0 0.0
        %2064 = vmatprep.subr.mxu0 0.0
        %2065 = vmatpush1.msra.mxu0 0.0
        %2066 = vmatprep.subr.mxu0 0.0
        %2067 = vmatpush1.msra.mxu0 0.0
        %2068 = vmatprep.subr.mxu0 0.0
        %2069 = vmatpush1.msra.mxu0 0.0
        %2070 = vmatprep.subr.mxu0 0.0
        %2071 = vmatpush1.msra.mxu0 0.0
        %2072 = vmatprep.subr.mxu0 0.0
        %2073 = vmatpush1.msra.mxu0 0.0
        %2074 = vmatprep.subr.mxu0 0.0
        %2075 = vmatpush1.msra.mxu0 0.0
        %2076 = vmatprep.subr.mxu0 0.0
        %2077 = vmatpush1.msra.mxu0 0.0
        %2078 = vmatprep.subr.mxu0 0.0
        %2079 = vmatpush1.msra.mxu0 0.0
        %2080 = vmatprep.subr.mxu0 0.0
        %2081 = vmatpush1.msra.mxu0 0.0
        %2082 = vmatprep.subr.mxu0 0.0
        %2083 = vmatpush1.msra.mxu0 0.0
        %2084 = vmatprep.subr.mxu0 0.0
        %2085 = vmatpush1.msra.mxu0 0.0
        %2086 = vmatprep.subr.mxu0 0.0
        %2087 = vmatpush1.msra.mxu0 0.0
        %2088 = vmatprep.subr.mxu0 0.0
        %2089 = vmatpush1.msra.mxu0 0.0
        %2090 = vmatprep.subr.mxu0 0.0
        %2091 = vmatpush1.msra.mxu0 0.0
        %2092 = vmatprep.subr.mxu0 0.0
        %2093 = vmatpush1.msra.mxu0 0.0
        %2094 = vmatprep.subr.mxu0 0.0
        %2095 = vmatpush1.msra.mxu0 0.0
        %2096 = vmatprep.subr.mxu0 0.0
        %2097 = vmatpush1.msra.mxu0 0.0
        %2098 = vmatprep.subr.mxu0 0.0
        %2099 = vmatpush1.msra.mxu0 0.0
        %2100 = vmatprep.subr.mxu0 0.0
        %2101 = vmatpush1.msra.mxu0 0.0
        %2102 = vmatprep.subr.mxu0 0.0
        %2103 = vmatpush1.msra.mxu0 0.0
        %2104 = vmatprep.subr.mxu0 0.0
        %2105 = vmatpush1.msra.mxu0 0.0
        %2106 = vmatprep.subr.mxu0 0.0
        %2107 = vmatpush1.msra.mxu0 0.0
        %2108 = vmatprep.subr.mxu0 0.0
        %2109 = vmatpush1.msra.mxu0 0.0
        %2110 = vmatprep.subr.mxu0 0.0
        %2111 = vmatpush1.msra.mxu0 0.0
        %2112 = vmatprep.subr.mxu0 0.0
        %2113 = vmatpush1.msra.mxu0 0.0
        %2114 = vmatprep.subr.mxu0 0.0
        %2115 = vmatpush1.msra.mxu0 0.0
        %2116 = vmatprep.mubr.f32.mxu0 0.0
        %2117 = vmatmul.mubr.f32.gmra.mrb[0].mxu0 %v2001
        %v2118 = vpop.f32.mrb[0].mxu0
        %v2119 = vadd.f32 0.0, %v2118
        %v2120 = vpop.f32.mrb[0].mxu0
        %2121 = vmatprep.mubr.f32.mxu0 0.0
        %2122 = vmatmul.mubr.f32.gmra.mrb[0].mxu0 %v2004
        %v2123 = vpop.f32.mrb[0].mxu0
        %v2124 = vadd.f32 0.0, %v2123
        %v2125 = vpop.f32.mrb[0].mxu0
        %2126 = vmatprep.mubr.f32.mxu0 0.0
        %2127 = vmatmul.mubr.f32.gmra.mrb[0].mxu0 %v2007
        %v2128 = vpop.f32.mrb[0].mxu0
        %v2129 = vadd.f32 0.0, %v2128
        %v2130 = vpop.f32.mrb[0].mxu0
        %2131 = vmatprep.mubr.f32.mxu0 0.0
        %2132 = vmatmul.mubr.f32.gmra.mrb[0].mxu0 %v2010
        %v2133 = vpop.f32.mrb[0].mxu0
        %v2134 = vadd.f32 0.0, %v2133
        %v2135 = vpop.f32.mrb[0].mxu0
        %2136 = vmatprep.mubr.f32.mxu0 0.0
        %2137 = vmatmul.mubr.f32.gmra.mrb[0].mxu0 %v2013
        %v2138 = vpop.f32.mrb[0].mxu0
        %v2139 = vadd.f32 0.0, %v2138
        %v2140 = vpop.f32.mrb[0].mxu0
        %2141 = vmatprep.mubr.f32.mxu0 0.0
        %2142 = vmatmul.mubr.f32.gmra.mrb[0].mxu0 %v2016
        %v2143 = vpop.f32.mrb[0].mxu0
        %v2144 = vadd.f32 0.0, %v2143
        %v2145 = vpop.f32.mrb[0].mxu0
        %2146 = vmatprep.mubr.f32.mxu0 0.0
        %2147 = vmatmul.mubr.f32.gmra.mrb[0].mxu0 %v2019
        %v2148 = vpop.f32.mrb[0].mxu0
        %v2149 = vadd.f32 0.0, %v2148
        %v2150 = vpop.f32.mrb[0].mxu0
        %2151 = vmatprep.mubr.f32.mxu0 0.0
        %2152 = vmatmul.mubr.f32.gmra.mrb[0].mxu0 %v2022
        %v2153 = vpop.f32.mrb[0].mxu0
        %v2154 = vadd.f32 0.0, %v2153
        %v2155 = vpop.f32.mrb[0].mxu0
        %2156 = vmatprep.mubr.f32.mxu0 0.0
        %2157 = vmatmul.mubr.f32.gmra.mrb[0].mxu0 %v2025
        %v2158 = vpop.f32.mrb[0].mxu0
        %v2159 = vadd.f32 0.0, %v2158
        %v2160 = vpop.f32.mrb[0].mxu0
        %2161 = vmatprep.mubr.f32.mxu0 0.0
        %2162 = vmatmul.mubr.f32.gmra.mrb[0].mxu0 %v2028
        %v2163 = vpop.f32.mrb[0].mxu0
        %v2164 = vadd.f32 0.0, %v2163
        %v2165 = vpop.f32.mrb[0].mxu0
        %2166 = vmatprep.mubr.f32.mxu0 0.0
        %2167 = vmatmul.mubr.f32.gmra.mrb[0].mxu0 %v2031
        %v2168 = vpop.f32.mrb[0].mxu0
        %v2169 = vadd.f32 0.0, %v2168
        %v2170 = vpop.f32.mrb[0].mxu0
        %2171 = vmatprep.mubr.f32.mxu0 0.0
        %2172 = vmatmul.mubr.f32.gmra.mrb[0].mxu0 %v2034
        %v2173 = vpop.f32.mrb[0].mxu0
        %v2174 = vadd.f32 0.0, %v2173
        %v2175 = vpop.f32.mrb[0].mxu0
        %2176 = vmatprep.mubr.f32.mxu0 0.0
        %2177 = vmatmul.mubr.f32.gmra.mrb[0].mxu0 %v2037
        %v2178 = vpop.f32.mrb[0].mxu0
        %v2179 = vadd.f32 0.0, %v2178
        %v2180 = vpop.f32.mrb[0].mxu0
        %2181 = vmatprep.mubr.f32.mxu0 0.0
        %2182 = vmatmul.mubr.f32.gmra.mrb[0].mxu0 %v2040
        %v2183 = vpop.f32.mrb[0].mxu0
        %v2184 = vadd.f32 0.0, %v2183
        %v2185 = vpop.f32.mrb[0].mxu0
        %2186 = vmatprep.mubr.f32.mxu0 0.0
        %2187 = vmatmul.mubr.f32.gmra.mrb[0].mxu0 %v2043
        %v2188 = vpop.f32.mrb[0].mxu0
        %v2189 = vadd.f32 0.0, %v2188
        %v2190 = vpop.f32.mrb[0].mxu0
        %2191 = vmatprep.mubr.f32.mxu0 0.0
        %2192 = vmatmul.mubr.f32.gmra.mrb[0].mxu0 %v2046
        %v2193 = vpop.f32.mrb[0].mxu0
        %v2194 = vadd.f32 0.0, %v2193
        %v2195 = vpop.f32.mrb[0].mxu0
        %2196 = vdwg.mxu0
        %v2197 = vmul.f32 %v2119, %v229
        %v2198 = vmul.f32 %v2124, %v230
        %v2199 = vmul.f32 %v2129, %v231
        %v2200 = vmul.f32 %v2134, %v232
        %v2201 = vmul.f32 %v2139, %v233
        %v2202 = vmul.f32 %v2144, %v234
        %v2203 = vmul.f32 %v2149, %v235
        %v2204 = vmul.f32 %v2154, %v236
        %v2205 = vmul.f32 %v2159, %v237
        %v2206 = vmul.f32 %v2164, %v238
        %v2207 = vmul.f32 %v2169, %v239
        %v2208 = vmul.f32 %v2174, %v240
        %v2209 = vmul.f32 %v2179, %v241
        %v2210 = vmul.f32 %v2184, %v242
        %v2211 = vmul.f32 %v2189, %v243
        %v2212 = vmul.f32 %v2194, %v244
        %2213 = vmatprep.subr.mxu0 0.0
        %2214 = vmatpush1.msra.mxu0 %v2197
        %2215 = vmatprep.subr.mxu0 0.0
        %2216 = vmatpush1.msra.mxu0 %v2198
        %2217 = vmatprep.subr.mxu0 0.0
        %2218 = vmatpush1.msra.mxu0 %v2199
        %2219 = vmatprep.subr.mxu0 0.0
        %2220 = vmatpush1.msra.mxu0 %v2200
        %2221 = vmatprep.subr.mxu0 0.0
        %2222 = vmatpush1.msra.mxu0 %v2201
        %2223 = vmatprep.subr.mxu0 0.0
        %2224 = vmatpush1.msra.mxu0 %v2202
        %2225 = vmatprep.subr.mxu0 0.0
        %2226 = vmatpush1.msra.mxu0 %v2203
        %2227 = vmatprep.subr.mxu0 0.0
        %2228 = vmatpush1.msra.mxu0 %v2204
        %2229 = vmatprep.subr.mxu0 0.0
        %2230 = vmatpush1.msra.mxu0 %v2205
        %2231 = vmatprep.subr.mxu0 0.0
        %2232 = vmatpush1.msra.mxu0 %v2206
        %2233 = vmatprep.subr.mxu0 0.0
        %2234 = vmatpush1.msra.mxu0 %v2207
        %2235 = vmatprep.subr.mxu0 0.0
        %2236 = vmatpush1.msra.mxu0 %v2208
        %2237 = vmatprep.subr.mxu0 0.0
        %2238 = vmatpush1.msra.mxu0 %v2209
        %2239 = vmatprep.subr.mxu0 0.0
        %2240 = vmatpush1.msra.mxu0 %v2210
        %2241 = vmatprep.subr.mxu0 0.0
        %2242 = vmatpush1.msra.mxu0 %v2211
        %2243 = vmatprep.subr.mxu0 0.0
        %2244 = vmatpush1.msra.mxu0 %v2212
        %2245 = vmatprep.subr.mxu0 0.0
        %2246 = vmatpush1.msra.mxu0 0.0
        %2247 = vmatprep.subr.mxu0 0.0
        %2248 = vmatpush1.msra.mxu0 0.0
        %2249 = vmatprep.subr.mxu0 0.0
        %2250 = vmatpush1.msra.mxu0 0.0
        %2251 = vmatprep.subr.mxu0 0.0
        %2252 = vmatpush1.msra.mxu0 0.0
        %2253 = vmatprep.subr.mxu0 0.0
        %2254 = vmatpush1.msra.mxu0 0.0
        %2255 = vmatprep.subr.mxu0 0.0
        %2256 = vmatpush1.msra.mxu0 0.0
        %2257 = vmatprep.subr.mxu0 0.0
        %2258 = vmatpush1.msra.mxu0 0.0
        %2259 = vmatprep.subr.mxu0 0.0
        %2260 = vmatpush1.msra.mxu0 0.0
        %2261 = vmatprep.subr.mxu0 0.0
        %2262 = vmatpush1.msra.mxu0 0.0
        %2263 = vmatprep.subr.mxu0 0.0
        %2264 = vmatpush1.msra.mxu0 0.0
        %2265 = vmatprep.subr.mxu0 0.0
        %2266 = vmatpush1.msra.mxu0 0.0
        %2267 = vmatprep.subr.mxu0 0.0
        %2268 = vmatpush1.msra.mxu0 0.0
        %2269 = vmatprep.subr.mxu0 0.0
        %2270 = vmatpush1.msra.mxu0 0.0
        %2271 = vmatprep.subr.mxu0 0.0
        %2272 = vmatpush1.msra.mxu0 0.0
        %2273 = vmatprep.subr.mxu0 0.0
        %2274 = vmatpush1.msra.mxu0 0.0
        %2275 = vmatprep.subr.mxu0 0.0
        %2276 = vmatpush1.msra.mxu0 0.0
        %2277 = vmatprep.mubr.f32.mxu0 0.0
        %2278 = vmatmul.mubr.f32.gmra.mrb[0].mxu0 %v225
        %v2279 = vpop.f32.mrb[0].mxu0
        %v2280 = vadd.f32 0.0, %v2279
        %v2281 = vpop.f32.mrb[0].mxu0
        %2282 = vmatprep.mubr.f32.mxu0 0.0
        %2283 = vmatmul.mubr.f32.gmra.mrb[0].mxu0 %v226
        %v2284 = vpop.f32.mrb[0].mxu0
        %v2285 = vadd.f32 0.0, %v2284
        %v2286 = vpop.f32.mrb[0].mxu0
        %2287 = vmatprep.mubr.f32.mxu0 0.0
        %2288 = vmatmul.mubr.f32.gmra.mrb[0].mxu0 %v227
        %v2289 = vpop.f32.mrb[0].mxu0
        %v2290 = vadd.f32 0.0, %v2289
        %v2291 = vpop.f32.mrb[0].mxu0
        %2292 = vmatprep.mubr.f32.mxu0 0.0
        %2293 = vmatmul.mubr.f32.gmra.mrb[0].mxu0 %v228
        %v2294 = vpop.f32.mrb[0].mxu0
        %v2295 = vadd.f32 0.0, %v2294
        %v2296 = vpop.f32.mrb[0].mxu0
        %2297 = vdwg.mxu0
        %vm2298 = vcmask 130048
        %v2300 = vsel %vm2298, %v2280, 0
        %v2303 = vsel %vm2298, %v2285, 0
        %v2306 = vsel %vm2298, %v2290, 0
        %v2309 = vsel %vm2298, %v2295, 0
        %2311 = vmatprep.subr.mxu0 0.0
        %2312 = vmatpush1.msra.mxu0 %v466
        %2313 = vmatprep.subr.mxu0 0.0
        %2314 = vmatpush1.msra.mxu0 %v467
        %2315 = vmatprep.subr.mxu0 0.0
        %2316 = vmatpush1.msra.mxu0 0.0
        %2317 = vmatprep.subr.mxu0 0.0
        %2318 = vmatpush1.msra.mxu0 0.0
        %2319 = vmatprep.subr.mxu0 0.0
        %2320 = vmatpush1.msra.mxu0 0.0
        %2321 = vmatprep.subr.mxu0 0.0
        %2322 = vmatpush1.msra.mxu0 0.0
        %2323 = vmatprep.subr.mxu0 0.0
        %2324 = vmatpush1.msra.mxu0 0.0
        %2325 = vmatprep.subr.mxu0 0.0
        %2326 = vmatpush1.msra.mxu0 0.0
        %2327 = vmatprep.subr.mxu0 0.0
        %2328 = vmatpush1.msra.mxu0 0.0
        %2329 = vmatprep.subr.mxu0 0.0
        %2330 = vmatpush1.msra.mxu0 0.0
        %2331 = vmatprep.subr.mxu0 0.0
        %2332 = vmatpush1.msra.mxu0 0.0
        %2333 = vmatprep.subr.mxu0 0.0
        %2334 = vmatpush1.msra.mxu0 0.0
        %2335 = vmatprep.subr.mxu0 0.0
        %2336 = vmatpush1.msra.mxu0 0.0
        %2337 = vmatprep.subr.mxu0 0.0
        %2338 = vmatpush1.msra.mxu0 0.0
        %2339 = vmatprep.subr.mxu0 0.0
        %2340 = vmatpush1.msra.mxu0 0.0
        %2341 = vmatprep.subr.mxu0 0.0
        %2342 = vmatpush1.msra.mxu0 0.0
        %2343 = vmatprep.subr.mxu0 0.0
        %2344 = vmatpush1.msra.mxu0 0.0
        %2345 = vmatprep.subr.mxu0 0.0
        %2346 = vmatpush1.msra.mxu0 0.0
        %2347 = vmatprep.subr.mxu0 0.0
        %2348 = vmatpush1.msra.mxu0 0.0
        %2349 = vmatprep.subr.mxu0 0.0
        %2350 = vmatpush1.msra.mxu0 0.0
        %2351 = vmatprep.subr.mxu0 0.0
        %2352 = vmatpush1.msra.mxu0 0.0
        %2353 = vmatprep.subr.mxu0 0.0
        %2354 = vmatpush1.msra.mxu0 0.0
        %2355 = vmatprep.subr.mxu0 0.0
        %2356 = vmatpush1.msra.mxu0 0.0
        %2357 = vmatprep.subr.mxu0 0.0
        %2358 = vmatpush1.msra.mxu0 0.0
        %2359 = vmatprep.subr.mxu0 0.0
        %2360 = vmatpush1.msra.mxu0 0.0
        %2361 = vmatprep.subr.mxu0 0.0
        %2362 = vmatpush1.msra.mxu0 0.0
        %2363 = vmatprep.subr.mxu0 0.0
        %2364 = vmatpush1.msra.mxu0 0.0
        %2365 = vmatprep.subr.mxu0 0.0
        %2366 = vmatpush1.msra.mxu0 0.0
        %2367 = vmatprep.subr.mxu0 0.0
        %2368 = vmatpush1.msra.mxu0 0.0
        %2369 = vmatprep.subr.mxu0 0.0
        %2370 = vmatpush1.msra.mxu0 0.0
        %2371 = vmatprep.subr.mxu0 0.0
        %2372 = vmatpush1.msra.mxu0 0.0
        %2373 = vmatprep.subr.mxu0 0.0
        %2374 = vmatpush1.msra.mxu0 0.0
        %2375 = vmatprep.mubr.f32.mxu0 0.0
        %2376 = vmatmul.mubr.f32.gmra.mrb[0].mxu0 %v2300
        %v2377 = vpop.f32.mrb[0].mxu0
        %v2378 = vadd.f32 0.0, %v2377
        %v2379 = vpop.f32.mrb[0].mxu0
        %2380 = vmatprep.mubr.f32.mxu0 0.0
        %2381 = vmatmul.mubr.f32.gmra.mrb[0].mxu0 %v2303
        %v2382 = vpop.f32.mrb[0].mxu0
        %v2383 = vadd.f32 0.0, %v2382
        %v2384 = vpop.f32.mrb[0].mxu0
        %2385 = vmatprep.mubr.f32.mxu0 0.0
        %2386 = vmatmul.mubr.f32.gmra.mrb[0].mxu0 %v2306
        %v2387 = vpop.f32.mrb[0].mxu0
        %v2388 = vadd.f32 0.0, %v2387
        %v2389 = vpop.f32.mrb[0].mxu0
        %2390 = vmatprep.mubr.f32.mxu0 0.0
        %2391 = vmatmul.mubr.f32.gmra.mrb[0].mxu0 %v2309
        %v2392 = vpop.f32.mrb[0].mxu0
        %v2393 = vadd.f32 0.0, %v2392
        %v2394 = vpop.f32.mrb[0].mxu0
        %2395 = vdwg.mxu0
        %v2396 = vadd.f32 %v547, %v2378
        %v2397 = vadd.f32 %v552, %v2383
        %v2398 = vadd.f32 %v557, %v2388
        %v2399 = vadd.f32 %v562, %v2393
        %v2400 = vlaneseq
        %v2401 = vshrl.u32 %v2400, 7
        %v2402 = vsub.s32 0, %v2401
        %v2403 = vrot.slane %v252, %v2402
        %v2404 = vadd.f32 %v2396, %v2403
        %v2405 = vadd.f32 %v2397, %v2403
        %v2406 = vadd.f32 %v2398, %v2403
        %v2407 = vadd.f32 %v2399, %v2403
        %v2408 = vadd.f32 %v452, %v2404
        %v2409 = vadd.f32 %v453, %v2405
        %v2410 = vadd.f32 %v454, %v2406
        %v2411 = vadd.f32 %v455, %v2407
        %v2412 = vsel %vm258, %v2408, 0.0
        %2413 = vadd.xlane.f32.xlu0 %v2412
        %v2414 = vpop.xlane.xlu0 %2413
        %v2415 = vsel %vm258, %v2409, 0.0
        %2416 = vadd.xlane.f32.xlu0 %v2415
        %v2417 = vpop.xlane.xlu0 %2416
        %v2418 = vsel %vm258, %v2410, 0.0
        %2419 = vadd.xlane.f32.xlu0 %v2418
        %v2420 = vpop.xlane.xlu0 %2419
        %v2421 = vsel %vm258, %v2411, 0.0
        %2422 = vadd.xlane.f32.xlu0 %v2421
        %v2423 = vpop.xlane.xlu0 %2422
        %v2424 = vrcp.pop 32.0
        %v2425 = vmul.f32 %v2414, %v2424
        %v2426 = vmul.f32 %v2417, %v2424
        %v2427 = vmul.f32 %v2420, %v2424
        %v2428 = vmul.f32 %v2423, %v2424
        %v2429 = vsub.f32 %v2408, %v2425
        %v2430 = vsub.f32 %v2409, %v2426
        %v2431 = vsub.f32 %v2410, %v2427
        %v2432 = vsub.f32 %v2411, %v2428
        %v2433 = vmul.f32 %v2429, %v2429
        %v2434 = vmul.f32 %v2430, %v2430
        %v2435 = vmul.f32 %v2431, %v2431
        %v2436 = vmul.f32 %v2432, %v2432
        %v2437 = vsel %vm258, %v2433, 0.0
        %2438 = vadd.xlane.f32.xlu0 %v2437
        %v2439 = vpop.xlane.xlu0 %2438
        %v2440 = vsel %vm258, %v2434, 0.0
        %2441 = vadd.xlane.f32.xlu0 %v2440
        %v2442 = vpop.xlane.xlu0 %2441
        %v2443 = vsel %vm258, %v2435, 0.0
        %2444 = vadd.xlane.f32.xlu0 %v2443
        %v2445 = vpop.xlane.xlu0 %2444
        %v2446 = vsel %vm258, %v2436, 0.0
        %2447 = vadd.xlane.f32.xlu0 %v2446
        %v2448 = vpop.xlane.xlu0 %2447
        %v2449 = vmul.f32 %v2439, %v2424
        %v2450 = vmul.f32 %v2442, %v2424
        %v2451 = vmul.f32 %v2445, %v2424
        %v2452 = vmul.f32 %v2448, %v2424
        %v2453 = vadd.f32 %v2449, 1e-05
        %v2454 = vadd.f32 %v2450, 1e-05
        %v2455 = vadd.f32 %v2451, 1e-05
        %v2456 = vadd.f32 %v2452, 1e-05
        %v2457 = vrsqrt.pop %v2453
        %v2458 = vrsqrt.pop %v2454
        %v2459 = vrsqrt.pop %v2455
        %v2460 = vrsqrt.pop %v2456
        %v2461 = vmul.f32 %v2429, %v2457
        %v2462 = vmul.f32 %v2430, %v2458
        %v2463 = vmul.f32 %v2431, %v2459
        %v2464 = vmul.f32 %v2432, %v2460
        %v2465 = vlaneseq
        %v2466 = vshrl.u32 %v2465, 7
        %v2467 = vsub.s32 2, %v2466
        %v2468 = vrot.slane %v252, %v2467
        %v2469 = vmul.f32 %v2461, %v2468
        %v2470 = vmul.f32 %v2462, %v2468
        %v2471 = vmul.f32 %v2463, %v2468
        %v2472 = vmul.f32 %v2464, %v2468
        %v2473 = vlaneseq
        %v2474 = vshrl.u32 %v2473, 7
        %v2475 = vsub.s32 3, %v2474
        %v2476 = vrot.slane %v252, %v2475
        %v2477 = vadd.f32 %v2469, %v2476
        %v2478 = vadd.f32 %v2470, %v2476
        %v2479 = vadd.f32 %v2471, %v2476
        %v2480 = vadd.f32 %v2472, %v2476
        %v2481 = vld [vmem:[#allocation2 + $0x1b8] sm:$0xff]
        %v2482 = vld [vmem:[#allocation2 + $0x1c0] sm:$0xff]
        %v2483 = vld [vmem:[#allocation2 + $0x1c8] sm:$0xff]
        %v2484 = vld [vmem:[#allocation2 + $0x1d0] sm:$0xff]
        %v2485 = vld [vmem:[#allocation2 + $0x1d8] sm:$0xff]
        %v2486 = vld [vmem:[#allocation2 + $0x1e0] sm:$0xff]
        %v2487 = vld [vmem:[#allocation2 + $0x1e8] sm:$0xff]
        %v2488 = vld [vmem:[#allocation2 + $0x1f0] sm:$0xff]
        %v2489 = vld [vmem:[#allocation2 + $0x1f8] sm:$0xff]
        %v2490 = vld [vmem:[#allocation2 + $0x200] sm:$0xff]
        %v2491 = vld [vmem:[#allocation2 + $0x208] sm:$0xff]
        %v2492 = vld [vmem:[#allocation2 + $0x210] sm:$0xff]
        %v2494 = vsel %vm258, %v2477, 0
        %v2497 = vsel %vm258, %v2478, 0
        %v2500 = vsel %vm258, %v2479, 0
        %v2503 = vsel %vm258, %v2480, 0
        %2505 = vmatprep.subr.mxu0 0.0
        %2506 = vmatpush1.msra.mxu0 %v2481
        %2507 = vmatprep.subr.mxu0 0.0
        %2508 = vmatpush1.msra.mxu0 %v2482
        %2509 = vmatprep.subr.mxu0 0.0
        %2510 = vmatpush1.msra.mxu0 %v2483
        %2511 = vmatprep.subr.mxu0 0.0
        %2512 = vmatpush1.msra.mxu0 %v2484
        %2513 = vmatprep.subr.mxu0 0.0
        %2514 = vmatpush1.msra.mxu0 0.0
        %2515 = vmatprep.subr.mxu0 0.0
        %2516 = vmatpush1.msra.mxu0 0.0
        %2517 = vmatprep.subr.mxu0 0.0
        %2518 = vmatpush1.msra.mxu0 0.0
        %2519 = vmatprep.subr.mxu0 0.0
        %2520 = vmatpush1.msra.mxu0 0.0
        %2521 = vmatprep.subr.mxu0 0.0
        %2522 = vmatpush1.msra.mxu0 0.0
        %2523 = vmatprep.subr.mxu0 0.0
        %2524 = vmatpush1.msra.mxu0 0.0
        %2525 = vmatprep.subr.mxu0 0.0
        %2526 = vmatpush1.msra.mxu0 0.0
        %2527 = vmatprep.subr.mxu0 0.0
        %2528 = vmatpush1.msra.mxu0 0.0
        %2529 = vmatprep.subr.mxu0 0.0
        %2530 = vmatpush1.msra.mxu0 0.0
        %2531 = vmatprep.subr.mxu0 0.0
        %2532 = vmatpush1.msra.mxu0 0.0
        %2533 = vmatprep.subr.mxu0 0.0
        %2534 = vmatpush1.msra.mxu0 0.0
        %2535 = vmatprep.subr.mxu0 0.0
        %2536 = vmatpush1.msra.mxu0 0.0
        %2537 = vmatprep.subr.mxu0 0.0
        %2538 = vmatpush1.msra.mxu0 0.0
        %2539 = vmatprep.subr.mxu0 0.0
        %2540 = vmatpush1.msra.mxu0 0.0
        %2541 = vmatprep.subr.mxu0 0.0
        %2542 = vmatpush1.msra.mxu0 0.0
        %2543 = vmatprep.subr.mxu0 0.0
        %2544 = vmatpush1.msra.mxu0 0.0
        %2545 = vmatprep.subr.mxu0 0.0
        %2546 = vmatpush1.msra.mxu0 0.0
        %2547 = vmatprep.subr.mxu0 0.0
        %2548 = vmatpush1.msra.mxu0 0.0
        %2549 = vmatprep.subr.mxu0 0.0
        %2550 = vmatpush1.msra.mxu0 0.0
        %2551 = vmatprep.subr.mxu0 0.0
        %2552 = vmatpush1.msra.mxu0 0.0
        %2553 = vmatprep.subr.mxu0 0.0
        %2554 = vmatpush1.msra.mxu0 0.0
        %2555 = vmatprep.subr.mxu0 0.0
        %2556 = vmatpush1.msra.mxu0 0.0
        %2557 = vmatprep.subr.mxu0 0.0
        %2558 = vmatpush1.msra.mxu0 0.0
        %2559 = vmatprep.subr.mxu0 0.0
        %2560 = vmatpush1.msra.mxu0 0.0
        %2561 = vmatprep.subr.mxu0 0.0
        %2562 = vmatpush1.msra.mxu0 0.0
        %2563 = vmatprep.subr.mxu0 0.0
        %2564 = vmatpush1.msra.mxu0 0.0
        %2565 = vmatprep.subr.mxu0 0.0
        %2566 = vmatpush1.msra.mxu0 0.0
        %2567 = vmatprep.subr.mxu0 0.0
        %2568 = vmatpush1.msra.mxu0 0.0
        %2569 = vmatprep.mubr.f32.mxu0 0.0
        %2570 = vmatmul.mubr.f32.gmra.mrb[0].mxu0 %v2494
        %v2571 = vpop.f32.mrb[0].mxu0
        %v2572 = vadd.f32 0.0, %v2571
        %v2573 = vpop.f32.mrb[0].mxu0
        %2574 = vmatprep.mubr.f32.mxu0 0.0
        %2575 = vmatmul.mubr.f32.gmra.mrb[0].mxu0 %v2497
        %v2576 = vpop.f32.mrb[0].mxu0
        %v2577 = vadd.f32 0.0, %v2576
        %v2578 = vpop.f32.mrb[0].mxu0
        %2579 = vmatprep.mubr.f32.mxu0 0.0
        %2580 = vmatmul.mubr.f32.gmra.mrb[0].mxu0 %v2500
        %v2581 = vpop.f32.mrb[0].mxu0
        %v2582 = vadd.f32 0.0, %v2581
        %v2583 = vpop.f32.mrb[0].mxu0
        %2584 = vmatprep.mubr.f32.mxu0 0.0
        %2585 = vmatmul.mubr.f32.gmra.mrb[0].mxu0 %v2503
        %v2586 = vpop.f32.mrb[0].mxu0
        %v2587 = vadd.f32 0.0, %v2586
        %v2588 = vpop.f32.mrb[0].mxu0
        %2589 = vdwg.mxu0
        %v2591 = vsel %vm258, %v2572, 0
        %v2594 = vsel %vm258, %v2577, 0
        %v2597 = vsel %vm258, %v2582, 0
        %v2600 = vsel %vm258, %v2587, 0
        %v2603 = vsel %vm258, %v2485, 0
        %v2606 = vsel %vm258, %v2486, 0
        %v2609 = vsel %vm258, %v2487, 0
        %v2612 = vsel %vm258, %v2488, 0
        %v2615 = vsel %vm258, %v2489, 0
        %v2618 = vsel %vm258, %v2490, 0
        %2620 = vmatprep.subr.mxu0 0.0
        %2621 = vmatpush1.xpose.msra.mxu0 %v2603
        %2622 = vmatprep.subr.mxu0 0.0
        %2623 = vmatpush1.xpose.msra.mxu0 %v2606
        %2624 = vmatprep.subr.mxu0 0.0
        %2625 = vmatpush1.xpose.msra.mxu0 %v2609
        %2626 = vmatprep.subr.mxu0 0.0
        %2627 = vmatpush1.xpose.msra.mxu0 %v2612
        %2628 = vmatprep.subr.mxu0 0.0
        %2629 = vmatpush1.xpose.msra.mxu0 %v2615
        %2630 = vmatprep.subr.mxu0 0.0
        %2631 = vmatpush1.xpose.msra.mxu0 %v2618
        %2632 = vmatprep.subr.mxu0 0.0
        %2633 = vmatpush1.xpose.msra.mxu0 0.0
        %2634 = vmatprep.subr.mxu0 0.0
        %2635 = vmatpush1.xpose.msra.mxu0 0.0
        %2636 = vmatprep.subr.mxu0 0.0
        %2637 = vmatpush1.xpose.msra.mxu0 0.0
        %2638 = vmatprep.subr.mxu0 0.0
        %2639 = vmatpush1.xpose.msra.mxu0 0.0
        %2640 = vmatprep.subr.mxu0 0.0
        %2641 = vmatpush1.xpose.msra.mxu0 0.0
        %2642 = vmatprep.subr.mxu0 0.0
        %2643 = vmatpush1.xpose.msra.mxu0 0.0
        %2644 = vmatprep.subr.mxu0 0.0
        %2645 = vmatpush1.xpose.msra.mxu0 0.0
        %2646 = vmatprep.subr.mxu0 0.0
        %2647 = vmatpush1.xpose.msra.mxu0 0.0
        %2648 = vmatprep.subr.mxu0 0.0
        %2649 = vmatpush1.xpose.msra.mxu0 0.0
        %2650 = vmatprep.subr.mxu0 0.0
        %2651 = vmatpush1.xpose.msra.mxu0 0.0
        %2652 = vmatprep.subr.mxu0 0.0
        %2653 = vmatpush1.xpose.msra.mxu0 0.0
        %2654 = vmatprep.subr.mxu0 0.0
        %2655 = vmatpush1.xpose.msra.mxu0 0.0
        %2656 = vmatprep.subr.mxu0 0.0
        %2657 = vmatpush1.xpose.msra.mxu0 0.0
        %2658 = vmatprep.subr.mxu0 0.0
        %2659 = vmatpush1.xpose.msra.mxu0 0.0
        %2660 = vmatprep.subr.mxu0 0.0
        %2661 = vmatpush1.xpose.msra.mxu0 0.0
        %2662 = vmatprep.subr.mxu0 0.0
        %2663 = vmatpush1.xpose.msra.mxu0 0.0
        %2664 = vmatprep.subr.mxu0 0.0
        %2665 = vmatpush1.xpose.msra.mxu0 0.0
        %2666 = vmatprep.subr.mxu0 0.0
        %2667 = vmatpush1.xpose.msra.mxu0 0.0
        %2668 = vmatprep.subr.mxu0 0.0
        %2669 = vmatpush1.xpose.msra.mxu0 0.0
        %2670 = vmatprep.subr.mxu0 0.0
        %2671 = vmatpush1.xpose.msra.mxu0 0.0
        %2672 = vmatprep.subr.mxu0 0.0
        %2673 = vmatpush1.xpose.msra.mxu0 0.0
        %2674 = vmatprep.subr.mxu0 0.0
        %2675 = vmatpush1.xpose.msra.mxu0 0.0
        %2676 = vmatprep.subr.mxu0 0.0
        %2677 = vmatpush1.xpose.msra.mxu0 0.0
        %2678 = vmatprep.subr.mxu0 0.0
        %2679 = vmatpush1.xpose.msra.mxu0 0.0
        %2680 = vmatprep.subr.mxu0 0.0
        %2681 = vmatpush1.xpose.msra.mxu0 0.0
        %2682 = vmatprep.subr.mxu0 0.0
        %2683 = vmatpush1.xpose.msra.mxu0 0.0
        %2684 = vmatprep.mubr.f32.mxu0 0.0
        %2685 = vmatmul.mubr.f32.gmra.mrb[0].mxu0 %v2591
        %v2686 = vpop.f32.mrb[0].mxu0
        %v2687 = vadd.f32 0.0, %v2686
        %v2688 = vpop.f32.mrb[0].mxu0
        %2689 = vmatprep.mubr.f32.mxu0 0.0
        %2690 = vmatmul.mubr.f32.gmra.mrb[0].mxu0 %v2594
        %v2691 = vpop.f32.mrb[0].mxu0
        %v2692 = vadd.f32 0.0, %v2691
        %v2693 = vpop.f32.mrb[0].mxu0
        %2694 = vmatprep.mubr.f32.mxu0 0.0
        %2695 = vmatmul.mubr.f32.gmra.mrb[0].mxu0 %v2597
        %v2696 = vpop.f32.mrb[0].mxu0
        %v2697 = vadd.f32 0.0, %v2696
        %v2698 = vpop.f32.mrb[0].mxu0
        %2699 = vmatprep.mubr.f32.mxu0 0.0
        %2700 = vmatmul.mubr.f32.gmra.mrb[0].mxu0 %v2600
        %v2701 = vpop.f32.mrb[0].mxu0
        %v2702 = vadd.f32 0.0, %v2701
        %v2703 = vpop.f32.mrb[0].mxu0
        %2704 = vdwg.mxu0
        %2705 = vmatprep.subr.mxu0 0.0
        %2706 = vmatpush1.msra.mxu0 %v2687
        %2707 = vmatprep.subr.mxu0 0.0
        %2708 = vmatpush1.msra.mxu0 %v2692
        %2709 = vmatprep.subr.mxu0 0.0
        %2710 = vmatpush1.msra.mxu0 %v2697
        %2711 = vmatprep.subr.mxu0 0.0
        %2712 = vmatpush1.msra.mxu0 %v2702
        %2713 = vmatprep.subr.mxu0 0.0
        %2714 = vmatpush1.msra.mxu0 0.0
        %2715 = vmatprep.subr.mxu0 0.0
        %2716 = vmatpush1.msra.mxu0 0.0
        %2717 = vmatprep.subr.mxu0 0.0
        %2718 = vmatpush1.msra.mxu0 0.0
        %2719 = vmatprep.subr.mxu0 0.0
        %2720 = vmatpush1.msra.mxu0 0.0
        %2721 = vmatprep.subr.mxu0 0.0
        %2722 = vmatpush1.msra.mxu0 0.0
        %2723 = vmatprep.subr.mxu0 0.0
        %2724 = vmatpush1.msra.mxu0 0.0
        %2725 = vmatprep.subr.mxu0 0.0
        %2726 = vmatpush1.msra.mxu0 0.0
        %2727 = vmatprep.subr.mxu0 0.0
        %2728 = vmatpush1.msra.mxu0 0.0
        %2729 = vmatprep.subr.mxu0 0.0
        %2730 = vmatpush1.msra.mxu0 0.0
        %2731 = vmatprep.subr.mxu0 0.0
        %2732 = vmatpush1.msra.mxu0 0.0
        %2733 = vmatprep.subr.mxu0 0.0
        %2734 = vmatpush1.msra.mxu0 0.0
        %2735 = vmatprep.subr.mxu0 0.0
        %2736 = vmatpush1.msra.mxu0 0.0
        %2737 = vmatprep.subr.mxu0 0.0
        %2738 = vmatpush1.msra.mxu0 0.0
        %2739 = vmatprep.subr.mxu0 0.0
        %2740 = vmatpush1.msra.mxu0 0.0
        %2741 = vmatprep.subr.mxu0 0.0
        %2742 = vmatpush1.msra.mxu0 0.0
        %2743 = vmatprep.subr.mxu0 0.0
        %2744 = vmatpush1.msra.mxu0 0.0
        %2745 = vmatprep.subr.mxu0 0.0
        %2746 = vmatpush1.msra.mxu0 0.0
        %2747 = vmatprep.subr.mxu0 0.0
        %2748 = vmatpush1.msra.mxu0 0.0
        %2749 = vmatprep.subr.mxu0 0.0
        %2750 = vmatpush1.msra.mxu0 0.0
        %2751 = vmatprep.subr.mxu0 0.0
        %2752 = vmatpush1.msra.mxu0 0.0
        %2753 = vmatprep.subr.mxu0 0.0
        %2754 = vmatpush1.msra.mxu0 0.0
        %2755 = vmatprep.subr.mxu0 0.0
        %2756 = vmatpush1.msra.mxu0 0.0
        %2757 = vmatprep.subr.mxu0 0.0
        %2758 = vmatpush1.msra.mxu0 0.0
        %2759 = vmatprep.subr.mxu0 0.0
        %2760 = vmatpush1.msra.mxu0 0.0
        %2761 = vmatprep.subr.mxu0 0.0
        %2762 = vmatpush1.msra.mxu0 0.0
        %2763 = vmatprep.subr.mxu0 0.0
        %2764 = vmatpush1.msra.mxu0 0.0
        %2765 = vmatprep.subr.mxu0 0.0
        %2766 = vmatpush1.msra.mxu0 0.0
        %2767 = vmatprep.subr.mxu0 0.0
        %2768 = vmatpush1.msra.mxu0 0.0
        %2769 = vmatprep.mubr.f32.mxu0 0.0
        %2770 = vmatmul.mubr.f32.gmra.mrb[0].mxu0 %v260
        %v2771 = vpop.f32.mrb[0].mxu0
        %v2772 = vadd.f32 0.0, %v2771
        %v2773 = vpop.f32.mrb[0].mxu0
        %2774 = vmatprep.mubr.f32.mxu0 0.0
        %2775 = vmatmul.mubr.f32.gmra.mrb[0].mxu0 %v263
        %v2776 = vpop.f32.mrb[0].mxu0
        %v2777 = vadd.f32 0.0, %v2776
        %v2778 = vpop.f32.mrb[0].mxu0
        %2779 = vmatprep.mubr.f32.mxu0 0.0
        %2780 = vmatmul.mubr.f32.gmra.mrb[0].mxu0 %v266
        %v2781 = vpop.f32.mrb[0].mxu0
        %v2782 = vadd.f32 0.0, %v2781
        %v2783 = vpop.f32.mrb[0].mxu0
        %2784 = vmatprep.mubr.f32.mxu0 0.0
        %2785 = vmatmul.mubr.f32.gmra.mrb[0].mxu0 %v269
        %v2786 = vpop.f32.mrb[0].mxu0
        %v2787 = vadd.f32 0.0, %v2786
        %v2788 = vpop.f32.mrb[0].mxu0
        %2789 = vmatprep.mubr.f32.mxu0 0.0
        %2790 = vmatmul.mubr.f32.gmra.mrb[0].mxu0 %v272
        %v2791 = vpop.f32.mrb[0].mxu0
        %v2792 = vadd.f32 0.0, %v2791
        %v2793 = vpop.f32.mrb[0].mxu0
        %2794 = vmatprep.mubr.f32.mxu0 0.0
        %2795 = vmatmul.mubr.f32.gmra.mrb[0].mxu0 %v275
        %v2796 = vpop.f32.mrb[0].mxu0
        %v2797 = vadd.f32 0.0, %v2796
        %v2798 = vpop.f32.mrb[0].mxu0
        %2799 = vmatprep.mubr.f32.mxu0 0.0
        %2800 = vmatmul.mubr.f32.gmra.mrb[0].mxu0 %v278
        %v2801 = vpop.f32.mrb[0].mxu0
        %v2802 = vadd.f32 0.0, %v2801
        %v2803 = vpop.f32.mrb[0].mxu0
        %2804 = vmatprep.mubr.f32.mxu0 0.0
        %2805 = vmatmul.mubr.f32.gmra.mrb[0].mxu0 %v281
        %v2806 = vpop.f32.mrb[0].mxu0
        %v2807 = vadd.f32 0.0, %v2806
        %v2808 = vpop.f32.mrb[0].mxu0
        %2809 = vmatprep.mubr.f32.mxu0 0.0
        %2810 = vmatmul.mubr.f32.gmra.mrb[0].mxu0 %v284
        %v2811 = vpop.f32.mrb[0].mxu0
        %v2812 = vadd.f32 0.0, %v2811
        %v2813 = vpop.f32.mrb[0].mxu0
        %2814 = vmatprep.mubr.f32.mxu0 0.0
        %2815 = vmatmul.mubr.f32.gmra.mrb[0].mxu0 %v287
        %v2816 = vpop.f32.mrb[0].mxu0
        %v2817 = vadd.f32 0.0, %v2816
        %v2818 = vpop.f32.mrb[0].mxu0
        %2819 = vmatprep.mubr.f32.mxu0 0.0
        %2820 = vmatmul.mubr.f32.gmra.mrb[0].mxu0 %v290
        %v2821 = vpop.f32.mrb[0].mxu0
        %v2822 = vadd.f32 0.0, %v2821
        %v2823 = vpop.f32.mrb[0].mxu0
        %2824 = vmatprep.mubr.f32.mxu0 0.0
        %2825 = vmatmul.mubr.f32.gmra.mrb[0].mxu0 %v293
        %v2826 = vpop.f32.mrb[0].mxu0
        %v2827 = vadd.f32 0.0, %v2826
        %v2828 = vpop.f32.mrb[0].mxu0
        %2829 = vmatprep.mubr.f32.mxu0 0.0
        %2830 = vmatmul.mubr.f32.gmra.mrb[0].mxu0 %v296
        %v2831 = vpop.f32.mrb[0].mxu0
        %v2832 = vadd.f32 0.0, %v2831
        %v2833 = vpop.f32.mrb[0].mxu0
        %2834 = vmatprep.mubr.f32.mxu0 0.0
        %2835 = vmatmul.mubr.f32.gmra.mrb[0].mxu0 %v299
        %v2836 = vpop.f32.mrb[0].mxu0
        %v2837 = vadd.f32 0.0, %v2836
        %v2838 = vpop.f32.mrb[0].mxu0
        %2839 = vmatprep.mubr.f32.mxu0 0.0
        %2840 = vmatmul.mubr.f32.gmra.mrb[0].mxu0 %v302
        %v2841 = vpop.f32.mrb[0].mxu0
        %v2842 = vadd.f32 0.0, %v2841
        %v2843 = vpop.f32.mrb[0].mxu0
        %2844 = vmatprep.mubr.f32.mxu0 0.0
        %2845 = vmatmul.mubr.f32.gmra.mrb[0].mxu0 %v305
        %v2846 = vpop.f32.mrb[0].mxu0
        %v2847 = vadd.f32 0.0, %v2846
        %v2848 = vpop.f32.mrb[0].mxu0
        %2849 = vdwg.mxu0
        %v2850 = vmul.f32 %v2772, %v229
        %v2851 = vmul.f32 %v2777, %v230
        %v2852 = vmul.f32 %v2782, %v231
        %v2853 = vmul.f32 %v2787, %v232
        %v2854 = vmul.f32 %v2792, %v233
        %v2855 = vmul.f32 %v2797, %v234
        %v2856 = vmul.f32 %v2802, %v235
        %v2857 = vmul.f32 %v2807, %v236
        %v2858 = vmul.f32 %v2812, %v237
        %v2859 = vmul.f32 %v2817, %v238
        %v2860 = vmul.f32 %v2822, %v239
        %v2861 = vmul.f32 %v2827, %v240
        %v2862 = vmul.f32 %v2832, %v241
        %v2863 = vmul.f32 %v2837, %v242
        %v2864 = vmul.f32 %v2842, %v243
        %v2865 = vmul.f32 %v2847, %v244
        %v2867 = vsel %vm841, %v2850, 0
        %v2870 = vsel %vm841, %v2851, 0
        %v2873 = vsel %vm841, %v2852, 0
        %v2876 = vsel %vm841, %v2853, 0
        %v2879 = vsel %vm841, %v2854, 0
        %v2882 = vsel %vm841, %v2855, 0
        %v2885 = vsel %vm841, %v2856, 0
        %v2888 = vsel %vm841, %v2857, 0
        %v2891 = vsel %vm841, %v2858, 0
        %v2894 = vsel %vm841, %v2859, 0
        %v2897 = vsel %vm841, %v2860, 0
        %v2900 = vsel %vm841, %v2861, 0
        %v2903 = vsel %vm841, %v2862, 0
        %v2906 = vsel %vm841, %v2863, 0
        %v2909 = vsel %vm841, %v2864, 0
        %v2912 = vsel %vm841, %v2865, 0
        %2914 = vmatprep.subr.mxu0 0.0
        %2915 = vmatpush1.msra.mxu0 %v245
        %2916 = vmatprep.subr.mxu0 0.0
        %2917 = vmatpush1.msra.mxu0 %v246
        %2918 = vmatprep.subr.mxu0 0.0
        %2919 = vmatpush1.msra.mxu0 %v247
        %2920 = vmatprep.subr.mxu0 0.0
        %2921 = vmatpush1.msra.mxu0 %v248
        %2922 = vmatprep.subr.mxu0 0.0
        %2923 = vmatpush1.msra.mxu0 %v249
        %2924 = vmatprep.subr.mxu0 0.0
        %2925 = vmatpush1.msra.mxu0 %v250
        %2926 = vmatprep.subr.mxu0 0.0
        %2927 = vmatpush1.msra.mxu0 0.0
        %2928 = vmatprep.subr.mxu0 0.0
        %2929 = vmatpush1.msra.mxu0 0.0
        %2930 = vmatprep.subr.mxu0 0.0
        %2931 = vmatpush1.msra.mxu0 0.0
        %2932 = vmatprep.subr.mxu0 0.0
        %2933 = vmatpush1.msra.mxu0 0.0
        %2934 = vmatprep.subr.mxu0 0.0
        %2935 = vmatpush1.msra.mxu0 0.0
        %2936 = vmatprep.subr.mxu0 0.0
        %2937 = vmatpush1.msra.mxu0 0.0
        %2938 = vmatprep.subr.mxu0 0.0
        %2939 = vmatpush1.msra.mxu0 0.0
        %2940 = vmatprep.subr.mxu0 0.0
        %2941 = vmatpush1.msra.mxu0 0.0
        %2942 = vmatprep.subr.mxu0 0.0
        %2943 = vmatpush1.msra.mxu0 0.0
        %2944 = vmatprep.subr.mxu0 0.0
        %2945 = vmatpush1.msra.mxu0 0.0
        %2946 = vmatprep.subr.mxu0 0.0
        %2947 = vmatpush1.msra.mxu0 0.0
        %2948 = vmatprep.subr.mxu0 0.0
        %2949 = vmatpush1.msra.mxu0 0.0
        %2950 = vmatprep.subr.mxu0 0.0
        %2951 = vmatpush1.msra.mxu0 0.0
        %2952 = vmatprep.subr.mxu0 0.0
        %2953 = vmatpush1.msra.mxu0 0.0
        %2954 = vmatprep.subr.mxu0 0.0
        %2955 = vmatpush1.msra.mxu0 0.0
        %2956 = vmatprep.subr.mxu0 0.0
        %2957 = vmatpush1.msra.mxu0 0.0
        %2958 = vmatprep.subr.mxu0 0.0
        %2959 = vmatpush1.msra.mxu0 0.0
        %2960 = vmatprep.subr.mxu0 0.0
        %2961 = vmatpush1.msra.mxu0 0.0
        %2962 = vmatprep.subr.mxu0 0.0
        %2963 = vmatpush1.msra.mxu0 0.0
        %2964 = vmatprep.subr.mxu0 0.0
        %2965 = vmatpush1.msra.mxu0 0.0
        %2966 = vmatprep.subr.mxu0 0.0
        %2967 = vmatpush1.msra.mxu0 0.0
        %2968 = vmatprep.subr.mxu0 0.0
        %2969 = vmatpush1.msra.mxu0 0.0
        %2970 = vmatprep.subr.mxu0 0.0
        %2971 = vmatpush1.msra.mxu0 0.0
        %2972 = vmatprep.subr.mxu0 0.0
        %2973 = vmatpush1.msra.mxu0 0.0
        %2974 = vmatprep.subr.mxu0 0.0
        %2975 = vmatpush1.msra.mxu0 0.0
        %2976 = vmatprep.subr.mxu0 0.0
        %2977 = vmatpush1.msra.mxu0 0.0
        %2978 = vmatprep.mubr.f32.mxu0 0.0
        %2979 = vmatmul.mubr.f32.gmra.mrb[0].mxu0 %v2867
        %v2980 = vpop.f32.mrb[0].mxu0
        %v2981 = vadd.f32 0.0, %v2980
        %v2982 = vpop.f32.mrb[0].mxu0
        %2983 = vmatprep.mubr.f32.mxu0 0.0
        %2984 = vmatmul.mubr.f32.gmra.mrb[0].mxu0 %v2870
        %v2985 = vpop.f32.mrb[0].mxu0
        %v2986 = vadd.f32 0.0, %v2985
        %v2987 = vpop.f32.mrb[0].mxu0
        %2988 = vmatprep.mubr.f32.mxu0 0.0
        %2989 = vmatmul.mubr.f32.gmra.mrb[0].mxu0 %v2873
        %v2990 = vpop.f32.mrb[0].mxu0
        %v2991 = vadd.f32 0.0, %v2990
        %v2992 = vpop.f32.mrb[0].mxu0
        %2993 = vmatprep.mubr.f32.mxu0 0.0
        %2994 = vmatmul.mubr.f32.gmra.mrb[0].mxu0 %v2876
        %v2995 = vpop.f32.mrb[0].mxu0
        %v2996 = vadd.f32 0.0, %v2995
        %v2997 = vpop.f32.mrb[0].mxu0
        %2998 = vmatprep.mubr.f32.mxu0 0.0
        %2999 = vmatmul.mubr.f32.gmra.mrb[0].mxu0 %v2879
        %v3000 = vpop.f32.mrb[0].mxu0
        %v3001 = vadd.f32 0.0, %v3000
        %v3002 = vpop.f32.mrb[0].mxu0
        %3003 = vmatprep.mubr.f32.mxu0 0.0
        %3004 = vmatmul.mubr.f32.gmra.mrb[0].mxu0 %v2882
        %v3005 = vpop.f32.mrb[0].mxu0
        %v3006 = vadd.f32 0.0, %v3005
        %v3007 = vpop.f32.mrb[0].mxu0
        %3008 = vmatprep.mubr.f32.mxu0 0.0
        %3009 = vmatmul.mubr.f32.gmra.mrb[0].mxu0 %v2885
        %v3010 = vpop.f32.mrb[0].mxu0
        %v3011 = vadd.f32 0.0, %v3010
        %v3012 = vpop.f32.mrb[0].mxu0
        %3013 = vmatprep.mubr.f32.mxu0 0.0
        %3014 = vmatmul.mubr.f32.gmra.mrb[0].mxu0 %v2888
        %v3015 = vpop.f32.mrb[0].mxu0
        %v3016 = vadd.f32 0.0, %v3015
        %v3017 = vpop.f32.mrb[0].mxu0
        %3018 = vmatprep.mubr.f32.mxu0 0.0
        %3019 = vmatmul.mubr.f32.gmra.mrb[0].mxu0 %v2891
        %v3020 = vpop.f32.mrb[0].mxu0
        %v3021 = vadd.f32 0.0, %v3020
        %v3022 = vpop.f32.mrb[0].mxu0
        %3023 = vmatprep.mubr.f32.mxu0 0.0
        %3024 = vmatmul.mubr.f32.gmra.mrb[0].mxu0 %v2894
        %v3025 = vpop.f32.mrb[0].mxu0
        %v3026 = vadd.f32 0.0, %v3025
        %v3027 = vpop.f32.mrb[0].mxu0
        %3028 = vmatprep.mubr.f32.mxu0 0.0
        %3029 = vmatmul.mubr.f32.gmra.mrb[0].mxu0 %v2897
        %v3030 = vpop.f32.mrb[0].mxu0
        %v3031 = vadd.f32 0.0, %v3030
        %v3032 = vpop.f32.mrb[0].mxu0
        %3033 = vmatprep.mubr.f32.mxu0 0.0
        %3034 = vmatmul.mubr.f32.gmra.mrb[0].mxu0 %v2900
        %v3035 = vpop.f32.mrb[0].mxu0
        %v3036 = vadd.f32 0.0, %v3035
        %v3037 = vpop.f32.mrb[0].mxu0
        %3038 = vmatprep.mubr.f32.mxu0 0.0
        %3039 = vmatmul.mubr.f32.gmra.mrb[0].mxu0 %v2903
        %v3040 = vpop.f32.mrb[0].mxu0
        %v3041 = vadd.f32 0.0, %v3040
        %v3042 = vpop.f32.mrb[0].mxu0
        %3043 = vmatprep.mubr.f32.mxu0 0.0
        %3044 = vmatmul.mubr.f32.gmra.mrb[0].mxu0 %v2906
        %v3045 = vpop.f32.mrb[0].mxu0
        %v3046 = vadd.f32 0.0, %v3045
        %v3047 = vpop.f32.mrb[0].mxu0
        %3048 = vmatprep.mubr.f32.mxu0 0.0
        %3049 = vmatmul.mubr.f32.gmra.mrb[0].mxu0 %v2909
        %v3050 = vpop.f32.mrb[0].mxu0
        %v3051 = vadd.f32 0.0, %v3050
        %v3052 = vpop.f32.mrb[0].mxu0
        %3053 = vmatprep.mubr.f32.mxu0 0.0
        %3054 = vmatmul.mubr.f32.gmra.mrb[0].mxu0 %v2912
        %v3055 = vpop.f32.mrb[0].mxu0
        %v3056 = vadd.f32 0.0, %v3055
        %v3057 = vpop.f32.mrb[0].mxu0
        %3058 = vdwg.mxu0
        %3075 = vrot.lane.b32.xlu0 %v2981, 124
        %v3076 = vpop.permute.xlu0 %3075
        %3077 = vrot.lane.b32.xlu0 %v2986, 124
        %v3078 = vpop.permute.xlu0 %3077
        %3079 = vrot.lane.b32.xlu0 %v2991, 124
        %v3080 = vpop.permute.xlu0 %3079
        %3081 = vrot.lane.b32.xlu0 %v2996, 124
        %v3082 = vpop.permute.xlu0 %3081
        %3083 = vrot.lane.b32.xlu0 %v3001, 124
        %v3084 = vpop.permute.xlu0 %3083
        %3085 = vrot.lane.b32.xlu0 %v3006, 124
        %v3086 = vpop.permute.xlu0 %3085
        %3087 = vrot.lane.b32.xlu0 %v3011, 124
        %v3088 = vpop.permute.xlu0 %3087
        %3089 = vrot.lane.b32.xlu0 %v3016, 124
        %v3090 = vpop.permute.xlu0 %3089
        %3091 = vrot.lane.b32.xlu0 %v3021, 124
        %v3092 = vpop.permute.xlu0 %3091
        %3093 = vrot.lane.b32.xlu0 %v3026, 124
        %v3094 = vpop.permute.xlu0 %3093
        %3095 = vrot.lane.b32.xlu0 %v3031, 124
        %v3096 = vpop.permute.xlu0 %3095
        %3097 = vrot.lane.b32.xlu0 %v3036, 124
        %v3098 = vpop.permute.xlu0 %3097
        %3099 = vrot.lane.b32.xlu0 %v3041, 124
        %v3100 = vpop.permute.xlu0 %3099
        %3101 = vrot.lane.b32.xlu0 %v3046, 124
        %v3102 = vpop.permute.xlu0 %3101
        %3103 = vrot.lane.b32.xlu0 %v3051, 124
        %v3104 = vpop.permute.xlu0 %3103
        %3105 = vrot.lane.b32.xlu0 %v3056, 124
        %v3106 = vpop.permute.xlu0 %3105
        %v3107 = vsel %vm1083, %v2981, 0
        %v3109 = vsel %vm1083, %v2986, 0
        %v3111 = vsel %vm1083, %v2991, 0
        %v3113 = vsel %vm1083, %v2996, 0
        %v3115 = vsel %vm1083, %v3001, 0
        %v3117 = vsel %vm1083, %v3006, 0
        %v3119 = vsel %vm1083, %v3011, 0
        %v3121 = vsel %vm1083, %v3016, 0
        %v3123 = vsel %vm1083, %v3021, 0
        %v3125 = vsel %vm1083, %v3026, 0
        %v3127 = vsel %vm1083, %v3031, 0
        %v3129 = vsel %vm1083, %v3036, 0
        %v3131 = vsel %vm1083, %v3041, 0
        %v3133 = vsel %vm1083, %v3046, 0
        %v3135 = vsel %vm1083, %v3051, 0
        %v3137 = vsel %vm1083, %v3056, 0
        %v3139 = vsel %vm1083, %v3076, 0
        %v3141 = vsel %vm1083, %v3078, 0
        %v3143 = vsel %vm1083, %v3080, 0
        %v3145 = vsel %vm1083, %v3082, 0
        %v3147 = vsel %vm1083, %v3084, 0
        %v3149 = vsel %vm1083, %v3086, 0
        %v3151 = vsel %vm1083, %v3088, 0
        %v3153 = vsel %vm1083, %v3090, 0
        %v3155 = vsel %vm1083, %v3092, 0
        %v3157 = vsel %vm1083, %v3094, 0
        %v3159 = vsel %vm1083, %v3096, 0
        %v3161 = vsel %vm1083, %v3098, 0
        %v3163 = vsel %vm1083, %v3100, 0
        %v3165 = vsel %vm1083, %v3102, 0
        %v3167 = vsel %vm1083, %v3104, 0
        %v3169 = vsel %vm1083, %v3106, 0
        %3171 = vmatprep.subr.mxu0 0.0
        %3172 = vmatpush1.xpose.msra.mxu0 %v3139
        %3173 = vmatprep.subr.mxu0 0.0
        %3174 = vmatpush1.xpose.msra.mxu0 %v3141
        %3175 = vmatprep.subr.mxu0 0.0
        %3176 = vmatpush1.xpose.msra.mxu0 %v3143
        %3177 = vmatprep.subr.mxu0 0.0
        %3178 = vmatpush1.xpose.msra.mxu0 %v3145
        %3179 = vmatprep.subr.mxu0 0.0
        %3180 = vmatpush1.xpose.msra.mxu0 %v3147
        %3181 = vmatprep.subr.mxu0 0.0
        %3182 = vmatpush1.xpose.msra.mxu0 %v3149
        %3183 = vmatprep.subr.mxu0 0.0
        %3184 = vmatpush1.xpose.msra.mxu0 %v3151
        %3185 = vmatprep.subr.mxu0 0.0
        %3186 = vmatpush1.xpose.msra.mxu0 %v3153
        %3187 = vmatprep.subr.mxu0 0.0
        %3188 = vmatpush1.xpose.msra.mxu0 %v3155
        %3189 = vmatprep.subr.mxu0 0.0
        %3190 = vmatpush1.xpose.msra.mxu0 %v3157
        %3191 = vmatprep.subr.mxu0 0.0
        %3192 = vmatpush1.xpose.msra.mxu0 %v3159
        %3193 = vmatprep.subr.mxu0 0.0
        %3194 = vmatpush1.xpose.msra.mxu0 %v3161
        %3195 = vmatprep.subr.mxu0 0.0
        %3196 = vmatpush1.xpose.msra.mxu0 %v3163
        %3197 = vmatprep.subr.mxu0 0.0
        %3198 = vmatpush1.xpose.msra.mxu0 %v3165
        %3199 = vmatprep.subr.mxu0 0.0
        %3200 = vmatpush1.xpose.msra.mxu0 %v3167
        %3201 = vmatprep.subr.mxu0 0.0
        %3202 = vmatpush1.xpose.msra.mxu0 %v3169
        %3203 = vmatprep.subr.mxu0 0.0
        %3204 = vmatpush1.xpose.msra.mxu0 0.0
        %3205 = vmatprep.subr.mxu0 0.0
        %3206 = vmatpush1.xpose.msra.mxu0 0.0
        %3207 = vmatprep.subr.mxu0 0.0
        %3208 = vmatpush1.xpose.msra.mxu0 0.0
        %3209 = vmatprep.subr.mxu0 0.0
        %3210 = vmatpush1.xpose.msra.mxu0 0.0
        %3211 = vmatprep.subr.mxu0 0.0
        %3212 = vmatpush1.xpose.msra.mxu0 0.0
        %3213 = vmatprep.subr.mxu0 0.0
        %3214 = vmatpush1.xpose.msra.mxu0 0.0
        %3215 = vmatprep.subr.mxu0 0.0
        %3216 = vmatpush1.xpose.msra.mxu0 0.0
        %3217 = vmatprep.subr.mxu0 0.0
        %3218 = vmatpush1.xpose.msra.mxu0 0.0
        %3219 = vmatprep.subr.mxu0 0.0
        %3220 = vmatpush1.xpose.msra.mxu0 0.0
        %3221 = vmatprep.subr.mxu0 0.0
        %3222 = vmatpush1.xpose.msra.mxu0 0.0
        %3223 = vmatprep.subr.mxu0 0.0
        %3224 = vmatpush1.xpose.msra.mxu0 0.0
        %3225 = vmatprep.subr.mxu0 0.0
        %3226 = vmatpush1.xpose.msra.mxu0 0.0
        %3227 = vmatprep.subr.mxu0 0.0
        %3228 = vmatpush1.xpose.msra.mxu0 0.0
        %3229 = vmatprep.subr.mxu0 0.0
        %3230 = vmatpush1.xpose.msra.mxu0 0.0
        %3231 = vmatprep.subr.mxu0 0.0
        %3232 = vmatpush1.xpose.msra.mxu0 0.0
        %3233 = vmatprep.subr.mxu0 0.0
        %3234 = vmatpush1.xpose.msra.mxu0 0.0
        %3235 = vmatprep.mubr.f32.mxu0 0.0
        %3236 = vmatmul.mubr.f32.gmra.mrb[0].mxu0 %v3107
        %v3237 = vpop.f32.mrb[0].mxu0
        %v3238 = vadd.f32 0.0, %v3237
        %v3239 = vpop.f32.mrb[0].mxu0
        %3240 = vmatprep.mubr.f32.mxu0 0.0
        %3241 = vmatmul.mubr.f32.gmra.mrb[0].mxu0 %v3109
        %v3242 = vpop.f32.mrb[0].mxu0
        %v3243 = vadd.f32 0.0, %v3242
        %v3244 = vpop.f32.mrb[0].mxu0
        %3245 = vmatprep.mubr.f32.mxu0 0.0
        %3246 = vmatmul.mubr.f32.gmra.mrb[0].mxu0 %v3111
        %v3247 = vpop.f32.mrb[0].mxu0
        %v3248 = vadd.f32 0.0, %v3247
        %v3249 = vpop.f32.mrb[0].mxu0
        %3250 = vmatprep.mubr.f32.mxu0 0.0
        %3251 = vmatmul.mubr.f32.gmra.mrb[0].mxu0 %v3113
        %v3252 = vpop.f32.mrb[0].mxu0
        %v3253 = vadd.f32 0.0, %v3252
        %v3254 = vpop.f32.mrb[0].mxu0
        %3255 = vmatprep.mubr.f32.mxu0 0.0
        %3256 = vmatmul.mubr.f32.gmra.mrb[0].mxu0 %v3115
        %v3257 = vpop.f32.mrb[0].mxu0
        %v3258 = vadd.f32 0.0, %v3257
        %v3259 = vpop.f32.mrb[0].mxu0
        %3260 = vmatprep.mubr.f32.mxu0 0.0
        %3261 = vmatmul.mubr.f32.gmra.mrb[0].mxu0 %v3117
        %v3262 = vpop.f32.mrb[0].mxu0
        %v3263 = vadd.f32 0.0, %v3262
        %v3264 = vpop.f32.mrb[0].mxu0
        %3265 = vmatprep.mubr.f32.mxu0 0.0
        %3266 = vmatmul.mubr.f32.gmra.mrb[0].mxu0 %v3119
        %v3267 = vpop.f32.mrb[0].mxu0
        %v3268 = vadd.f32 0.0, %v3267
        %v3269 = vpop.f32.mrb[0].mxu0
        %3270 = vmatprep.mubr.f32.mxu0 0.0
        %3271 = vmatmul.mubr.f32.gmra.mrb[0].mxu0 %v3121
        %v3272 = vpop.f32.mrb[0].mxu0
        %v3273 = vadd.f32 0.0, %v3272
        %v3274 = vpop.f32.mrb[0].mxu0
        %3275 = vmatprep.mubr.f32.mxu0 0.0
        %3276 = vmatmul.mubr.f32.gmra.mrb[0].mxu0 %v3123
        %v3277 = vpop.f32.mrb[0].mxu0
        %v3278 = vadd.f32 0.0, %v3277
        %v3279 = vpop.f32.mrb[0].mxu0
        %3280 = vmatprep.mubr.f32.mxu0 0.0
        %3281 = vmatmul.mubr.f32.gmra.mrb[0].mxu0 %v3125
        %v3282 = vpop.f32.mrb[0].mxu0
        %v3283 = vadd.f32 0.0, %v3282
        %v3284 = vpop.f32.mrb[0].mxu0
        %3285 = vmatprep.mubr.f32.mxu0 0.0
        %3286 = vmatmul.mubr.f32.gmra.mrb[0].mxu0 %v3127
        %v3287 = vpop.f32.mrb[0].mxu0
        %v3288 = vadd.f32 0.0, %v3287
        %v3289 = vpop.f32.mrb[0].mxu0
        %3290 = vmatprep.mubr.f32.mxu0 0.0
        %3291 = vmatmul.mubr.f32.gmra.mrb[0].mxu0 %v3129
        %v3292 = vpop.f32.mrb[0].mxu0
        %v3293 = vadd.f32 0.0, %v3292
        %v3294 = vpop.f32.mrb[0].mxu0
        %3295 = vmatprep.mubr.f32.mxu0 0.0
        %3296 = vmatmul.mubr.f32.gmra.mrb[0].mxu0 %v3131
        %v3297 = vpop.f32.mrb[0].mxu0
        %v3298 = vadd.f32 0.0, %v3297
        %v3299 = vpop.f32.mrb[0].mxu0
        %3300 = vmatprep.mubr.f32.mxu0 0.0
        %3301 = vmatmul.mubr.f32.gmra.mrb[0].mxu0 %v3133
        %v3302 = vpop.f32.mrb[0].mxu0
        %v3303 = vadd.f32 0.0, %v3302
        %v3304 = vpop.f32.mrb[0].mxu0
        %3305 = vmatprep.mubr.f32.mxu0 0.0
        %3306 = vmatmul.mubr.f32.gmra.mrb[0].mxu0 %v3135
        %v3307 = vpop.f32.mrb[0].mxu0
        %v3308 = vadd.f32 0.0, %v3307
        %v3309 = vpop.f32.mrb[0].mxu0
        %3310 = vmatprep.mubr.f32.mxu0 0.0
        %3311 = vmatmul.mubr.f32.gmra.mrb[0].mxu0 %v3137
        %v3312 = vpop.f32.mrb[0].mxu0
        %v3313 = vadd.f32 0.0, %v3312
        %v3314 = vpop.f32.mrb[0].mxu0
        %3315 = vdwg.mxu0
        %3316 = vmax.xlane.f32.xlu0 %v3238
        %v3317 = vpop.xlane.xlu0 %3316
        %3318 = vmax.xlane.f32.xlu0 %v3243
        %v3319 = vpop.xlane.xlu0 %3318
        %3320 = vmax.xlane.f32.xlu0 %v3248
        %v3321 = vpop.xlane.xlu0 %3320
        %3322 = vmax.xlane.f32.xlu0 %v3253
        %v3323 = vpop.xlane.xlu0 %3322
        %3324 = vmax.xlane.f32.xlu0 %v3258
        %v3325 = vpop.xlane.xlu0 %3324
        %3326 = vmax.xlane.f32.xlu0 %v3263
        %v3327 = vpop.xlane.xlu0 %3326
        %3328 = vmax.xlane.f32.xlu0 %v3268
        %v3329 = vpop.xlane.xlu0 %3328
        %3330 = vmax.xlane.f32.xlu0 %v3273
        %v3331 = vpop.xlane.xlu0 %3330
        %3332 = vmax.xlane.f32.xlu0 %v3278
        %v3333 = vpop.xlane.xlu0 %3332
        %3334 = vmax.xlane.f32.xlu0 %v3283
        %v3335 = vpop.xlane.xlu0 %3334
        %3336 = vmax.xlane.f32.xlu0 %v3288
        %v3337 = vpop.xlane.xlu0 %3336
        %3338 = vmax.xlane.f32.xlu0 %v3293
        %v3339 = vpop.xlane.xlu0 %3338
        %3340 = vmax.xlane.f32.xlu0 %v3298
        %v3341 = vpop.xlane.xlu0 %3340
        %3342 = vmax.xlane.f32.xlu0 %v3303
        %v3343 = vpop.xlane.xlu0 %3342
        %3344 = vmax.xlane.f32.xlu0 %v3308
        %v3345 = vpop.xlane.xlu0 %3344
        %3346 = vmax.xlane.f32.xlu0 %v3313
        %v3347 = vpop.xlane.xlu0 %3346
        %v3348 = vsub.f32 %v3238, %v3317
        %v3349 = vsub.f32 %v3243, %v3319
        %v3350 = vsub.f32 %v3248, %v3321
        %v3351 = vsub.f32 %v3253, %v3323
        %v3352 = vsub.f32 %v3258, %v3325
        %v3353 = vsub.f32 %v3263, %v3327
        %v3354 = vsub.f32 %v3268, %v3329
        %v3355 = vsub.f32 %v3273, %v3331
        %v3356 = vsub.f32 %v3278, %v3333
        %v3357 = vsub.f32 %v3283, %v3335
        %v3358 = vsub.f32 %v3288, %v3337
        %v3359 = vsub.f32 %v3293, %v3339
        %v3360 = vsub.f32 %v3298, %v3341
        %v3361 = vsub.f32 %v3303, %v3343
        %v3362 = vsub.f32 %v3308, %v3345
        %v3363 = vsub.f32 %v3313, %v3347
        %v3364 = vmul.f32 %v3348, 1.442695
        %v3365 = vpow.pop %v3364
        %v3366 = vmul.f32 %v3349, 1.442695
        %v3367 = vpow.pop %v3366
        %v3368 = vmul.f32 %v3350, 1.442695
        %v3369 = vpow.pop %v3368
        %v3370 = vmul.f32 %v3351, 1.442695
        %v3371 = vpow.pop %v3370
        %v3372 = vmul.f32 %v3352, 1.442695
        %v3373 = vpow.pop %v3372
        %v3374 = vmul.f32 %v3353, 1.442695
        %v3375 = vpow.pop %v3374
        %v3376 = vmul.f32 %v3354, 1.442695
        %v3377 = vpow.pop %v3376
        %v3378 = vmul.f32 %v3355, 1.442695
        %v3379 = vpow.pop %v3378
        %v3380 = vmul.f32 %v3356, 1.442695
        %v3381 = vpow.pop %v3380
        %v3382 = vmul.f32 %v3357, 1.442695
        %v3383 = vpow.pop %v3382
        %v3384 = vmul.f32 %v3358, 1.442695
        %v3385 = vpow.pop %v3384
        %v3386 = vmul.f32 %v3359, 1.442695
        %v3387 = vpow.pop %v3386
        %v3388 = vmul.f32 %v3360, 1.442695
        %v3389 = vpow.pop %v3388
        %v3390 = vmul.f32 %v3361, 1.442695
        %v3391 = vpow.pop %v3390
        %v3392 = vmul.f32 %v3362, 1.442695
        %v3393 = vpow.pop %v3392
        %v3394 = vmul.f32 %v3363, 1.442695
        %v3395 = vpow.pop %v3394
        %3396 = vmatprep.subr.mxu0 0.0
        %3397 = vmatpush1.msra.mxu0 %v209
        %3398 = vmatprep.subr.mxu0 0.0
        %3399 = vmatpush1.msra.mxu0 %v210
        %3400 = vmatprep.subr.mxu0 0.0
        %3401 = vmatpush1.msra.mxu0 %v211
        %3402 = vmatprep.subr.mxu0 0.0
        %3403 = vmatpush1.msra.mxu0 %v212
        %3404 = vmatprep.subr.mxu0 0.0
        %3405 = vmatpush1.msra.mxu0 %v213
        %3406 = vmatprep.subr.mxu0 0.0
        %3407 = vmatpush1.msra.mxu0 %v214
        %3408 = vmatprep.subr.mxu0 0.0
        %3409 = vmatpush1.msra.mxu0 %v215
        %3410 = vmatprep.subr.mxu0 0.0
        %3411 = vmatpush1.msra.mxu0 %v216
        %3412 = vmatprep.subr.mxu0 0.0
        %3413 = vmatpush1.msra.mxu0 %v217
        %3414 = vmatprep.subr.mxu0 0.0
        %3415 = vmatpush1.msra.mxu0 %v218
        %3416 = vmatprep.subr.mxu0 0.0
        %3417 = vmatpush1.msra.mxu0 %v219
        %3418 = vmatprep.subr.mxu0 0.0
        %3419 = vmatpush1.msra.mxu0 %v220
        %3420 = vmatprep.subr.mxu0 0.0
        %3421 = vmatpush1.msra.mxu0 %v221
        %3422 = vmatprep.subr.mxu0 0.0
        %3423 = vmatpush1.msra.mxu0 %v222
        %3424 = vmatprep.subr.mxu0 0.0
        %3425 = vmatpush1.msra.mxu0 %v223
        %3426 = vmatprep.subr.mxu0 0.0
        %3427 = vmatpush1.msra.mxu0 %v224
        %3428 = vmatprep.subr.mxu0 0.0
        %3429 = vmatpush1.msra.mxu0 0.0
        %3430 = vmatprep.subr.mxu0 0.0
        %3431 = vmatpush1.msra.mxu0 0.0
        %3432 = vmatprep.subr.mxu0 0.0
        %3433 = vmatpush1.msra.mxu0 0.0
        %3434 = vmatprep.subr.mxu0 0.0
        %3435 = vmatpush1.msra.mxu0 0.0
        %3436 = vmatprep.subr.mxu0 0.0
        %3437 = vmatpush1.msra.mxu0 0.0
        %3438 = vmatprep.subr.mxu0 0.0
        %3439 = vmatpush1.msra.mxu0 0.0
        %3440 = vmatprep.subr.mxu0 0.0
        %3441 = vmatpush1.msra.mxu0 0.0
        %3442 = vmatprep.subr.mxu0 0.0
        %3443 = vmatpush1.msra.mxu0 0.0
        %3444 = vmatprep.subr.mxu0 0.0
        %3445 = vmatpush1.msra.mxu0 0.0
        %3446 = vmatprep.subr.mxu0 0.0
        %3447 = vmatpush1.msra.mxu0 0.0
        %3448 = vmatprep.subr.mxu0 0.0
        %3449 = vmatpush1.msra.mxu0 0.0
        %3450 = vmatprep.subr.mxu0 0.0
        %3451 = vmatpush1.msra.mxu0 0.0
        %3452 = vmatprep.subr.mxu0 0.0
        %3453 = vmatpush1.msra.mxu0 0.0
        %3454 = vmatprep.subr.mxu0 0.0
        %3455 = vmatpush1.msra.mxu0 0.0
        %3456 = vmatprep.subr.mxu0 0.0
        %3457 = vmatpush1.msra.mxu0 0.0
        %3458 = vmatprep.subr.mxu0 0.0
        %3459 = vmatpush1.msra.mxu0 0.0
        %3460 = vmatprep.mubr.f32.mxu0 0.0
        %3461 = vmatmul.mubr.f32.gmra.mrb[0].mxu0 %v3365
        %v3462 = vpop.f32.mrb[0].mxu0
        %v3463 = vadd.f32 0.0, %v3462
        %v3464 = vpop.f32.mrb[0].mxu0
        %3465 = vmatprep.mubr.f32.mxu0 0.0
        %3466 = vmatmul.mubr.f32.gmra.mrb[0].mxu0 %v3367
        %v3467 = vpop.f32.mrb[0].mxu0
        %v3468 = vadd.f32 0.0, %v3467
        %v3469 = vpop.f32.mrb[0].mxu0
        %3470 = vmatprep.mubr.f32.mxu0 0.0
        %3471 = vmatmul.mubr.f32.gmra.mrb[0].mxu0 %v3369
        %v3472 = vpop.f32.mrb[0].mxu0
        %v3473 = vadd.f32 0.0, %v3472
        %v3474 = vpop.f32.mrb[0].mxu0
        %3475 = vmatprep.mubr.f32.mxu0 0.0
        %3476 = vmatmul.mubr.f32.gmra.mrb[0].mxu0 %v3371
        %v3477 = vpop.f32.mrb[0].mxu0
        %v3478 = vadd.f32 0.0, %v3477
        %v3479 = vpop.f32.mrb[0].mxu0
        %3480 = vmatprep.mubr.f32.mxu0 0.0
        %3481 = vmatmul.mubr.f32.gmra.mrb[0].mxu0 %v3373
        %v3482 = vpop.f32.mrb[0].mxu0
        %v3483 = vadd.f32 0.0, %v3482
        %v3484 = vpop.f32.mrb[0].mxu0
        %3485 = vmatprep.mubr.f32.mxu0 0.0
        %3486 = vmatmul.mubr.f32.gmra.mrb[0].mxu0 %v3375
        %v3487 = vpop.f32.mrb[0].mxu0
        %v3488 = vadd.f32 0.0, %v3487
        %v3489 = vpop.f32.mrb[0].mxu0
        %3490 = vmatprep.mubr.f32.mxu0 0.0
        %3491 = vmatmul.mubr.f32.gmra.mrb[0].mxu0 %v3377
        %v3492 = vpop.f32.mrb[0].mxu0
        %v3493 = vadd.f32 0.0, %v3492
        %v3494 = vpop.f32.mrb[0].mxu0
        %3495 = vmatprep.mubr.f32.mxu0 0.0
        %3496 = vmatmul.mubr.f32.gmra.mrb[0].mxu0 %v3379
        %v3497 = vpop.f32.mrb[0].mxu0
        %v3498 = vadd.f32 0.0, %v3497
        %v3499 = vpop.f32.mrb[0].mxu0
        %3500 = vmatprep.mubr.f32.mxu0 0.0
        %3501 = vmatmul.mubr.f32.gmra.mrb[0].mxu0 %v3381
        %v3502 = vpop.f32.mrb[0].mxu0
        %v3503 = vadd.f32 0.0, %v3502
        %v3504 = vpop.f32.mrb[0].mxu0
        %3505 = vmatprep.mubr.f32.mxu0 0.0
        %3506 = vmatmul.mubr.f32.gmra.mrb[0].mxu0 %v3383
        %v3507 = vpop.f32.mrb[0].mxu0
        %v3508 = vadd.f32 0.0, %v3507
        %v3509 = vpop.f32.mrb[0].mxu0
        %3510 = vmatprep.mubr.f32.mxu0 0.0
        %3511 = vmatmul.mubr.f32.gmra.mrb[0].mxu0 %v3385
        %v3512 = vpop.f32.mrb[0].mxu0
        %v3513 = vadd.f32 0.0, %v3512
        %v3514 = vpop.f32.mrb[0].mxu0
        %3515 = vmatprep.mubr.f32.mxu0 0.0
        %3516 = vmatmul.mubr.f32.gmra.mrb[0].mxu0 %v3387
        %v3517 = vpop.f32.mrb[0].mxu0
        %v3518 = vadd.f32 0.0, %v3517
        %v3519 = vpop.f32.mrb[0].mxu0
        %3520 = vmatprep.mubr.f32.mxu0 0.0
        %3521 = vmatmul.mubr.f32.gmra.mrb[0].mxu0 %v3389
        %v3522 = vpop.f32.mrb[0].mxu0
        %v3523 = vadd.f32 0.0, %v3522
        %v3524 = vpop.f32.mrb[0].mxu0
        %3525 = vmatprep.mubr.f32.mxu0 0.0
        %3526 = vmatmul.mubr.f32.gmra.mrb[0].mxu0 %v3391
        %v3527 = vpop.f32.mrb[0].mxu0
        %v3528 = vadd.f32 0.0, %v3527
        %v3529 = vpop.f32.mrb[0].mxu0
        %3530 = vmatprep.mubr.f32.mxu0 0.0
        %3531 = vmatmul.mubr.f32.gmra.mrb[0].mxu0 %v3393
        %v3532 = vpop.f32.mrb[0].mxu0
        %v3533 = vadd.f32 0.0, %v3532
        %v3534 = vpop.f32.mrb[0].mxu0
        %3535 = vmatprep.mubr.f32.mxu0 0.0
        %3536 = vmatmul.mubr.f32.gmra.mrb[0].mxu0 %v3395
        %v3537 = vpop.f32.mrb[0].mxu0
        %v3538 = vadd.f32 0.0, %v3537
        %v3539 = vpop.f32.mrb[0].mxu0
        %3540 = vdwg.mxu0
        %v3541 = vmul.f32 %v3463, %v374
        %v3542 = vmul.f32 %v3468, %v379
        %v3543 = vmul.f32 %v3473, %v384
        %v3544 = vmul.f32 %v3478, %v389
        %v3545 = vmul.f32 %v3483, %v394
        %v3546 = vmul.f32 %v3488, %v399
        %v3547 = vmul.f32 %v3493, %v404
        %v3548 = vmul.f32 %v3498, %v409
        %v3549 = vmul.f32 %v3503, %v414
        %v3550 = vmul.f32 %v3508, %v419
        %v3551 = vmul.f32 %v3513, %v424
        %v3552 = vmul.f32 %v3518, %v429
        %v3553 = vmul.f32 %v3523, %v434
        %v3554 = vmul.f32 %v3528, %v439
        %v3555 = vmul.f32 %v3533, %v444
        %v3556 = vmul.f32 %v3538, %v449
        %v3557 = vadd.f32 %v3541, %v1534
        %v3558 = vadd.f32 %v3542, %v1535
        %v3559 = vadd.f32 %v3543, %v1536
        %v3560 = vadd.f32 %v3544, %v1537
        %v3561 = vadd.f32 %v3545, %v1538
        %v3562 = vadd.f32 %v3546, %v1539
        %v3563 = vadd.f32 %v3547, %v1540
        %v3564 = vadd.f32 %v3548, %v1541
        %v3565 = vadd.f32 %v3549, %v1542
        %v3566 = vadd.f32 %v3550, %v1543
        %v3567 = vadd.f32 %v3551, %v1544
        %v3568 = vadd.f32 %v3552, %v1545
        %v3569 = vadd.f32 %v3553, %v1546
        %v3570 = vadd.f32 %v3554, %v1547
        %v3571 = vadd.f32 %v3555, %v1548
        %v3572 = vadd.f32 %v3556, %v1549
        %v3573 = vrcp.pop %v3557
        %v3574 = vrcp.pop %v3558
        %v3575 = vrcp.pop %v3559
        %v3576 = vrcp.pop %v3560
        %v3577 = vrcp.pop %v3561
        %v3578 = vrcp.pop %v3562
        %v3579 = vrcp.pop %v3563
        %v3580 = vrcp.pop %v3564
        %v3581 = vrcp.pop %v3565
        %v3582 = vrcp.pop %v3566
        %v3583 = vrcp.pop %v3567
        %v3584 = vrcp.pop %v3568
        %v3585 = vrcp.pop %v3569
        %v3586 = vrcp.pop %v3570
        %v3587 = vrcp.pop %v3571
        %v3588 = vrcp.pop %v3572
        %v3589 = vmul.f32 %v374, %v3573
        %v3590 = vmul.f32 %v379, %v3574
        %v3591 = vmul.f32 %v384, %v3575
        %v3592 = vmul.f32 %v389, %v3576
        %v3593 = vmul.f32 %v394, %v3577
        %v3594 = vmul.f32 %v399, %v3578
        %v3595 = vmul.f32 %v404, %v3579
        %v3596 = vmul.f32 %v409, %v3580
        %v3597 = vmul.f32 %v414, %v3581
        %v3598 = vmul.f32 %v419, %v3582
        %v3599 = vmul.f32 %v424, %v3583
        %v3600 = vmul.f32 %v429, %v3584
        %v3601 = vmul.f32 %v434, %v3585
        %v3602 = vmul.f32 %v439, %v3586
        %v3603 = vmul.f32 %v444, %v3587
        %v3604 = vmul.f32 %v449, %v3588
        %v3606 = vsel %vm258, %v3589, 0
        %v3609 = vsel %vm258, %v3590, 0
        %v3612 = vsel %vm258, %v3591, 0
        %v3615 = vsel %vm258, %v3592, 0
        %v3618 = vsel %vm258, %v3593, 0
        %v3621 = vsel %vm258, %v3594, 0
        %v3624 = vsel %vm258, %v3595, 0
        %v3627 = vsel %vm258, %v3596, 0
        %v3630 = vsel %vm258, %v3597, 0
        %v3633 = vsel %vm258, %v3598, 0
        %v3636 = vsel %vm258, %v3599, 0
        %v3639 = vsel %vm258, %v3600, 0
        %v3642 = vsel %vm258, %v3601, 0
        %v3645 = vsel %vm258, %v3602, 0
        %v3648 = vsel %vm258, %v3603, 0
        %v3651 = vsel %vm258, %v3604, 0
        %3653 = vmatprep.subr.mxu0 0.0
        %3654 = vmatpush1.xpose.msra.mxu0 %v260
        %3655 = vmatprep.subr.mxu0 0.0
        %3656 = vmatpush1.xpose.msra.mxu0 %v263
        %3657 = vmatprep.subr.mxu0 0.0
        %3658 = vmatpush1.xpose.msra.mxu0 %v266
        %3659 = vmatprep.subr.mxu0 0.0
        %3660 = vmatpush1.xpose.msra.mxu0 %v269
        %3661 = vmatprep.subr.mxu0 0.0
        %3662 = vmatpush1.xpose.msra.mxu0 %v272
        %3663 = vmatprep.subr.mxu0 0.0
        %3664 = vmatpush1.xpose.msra.mxu0 %v275
        %3665 = vmatprep.subr.mxu0 0.0
        %3666 = vmatpush1.xpose.msra.mxu0 %v278
        %3667 = vmatprep.subr.mxu0 0.0
        %3668 = vmatpush1.xpose.msra.mxu0 %v281
        %3669 = vmatprep.subr.mxu0 0.0
        %3670 = vmatpush1.xpose.msra.mxu0 %v284
        %3671 = vmatprep.subr.mxu0 0.0
        %3672 = vmatpush1.xpose.msra.mxu0 %v287
        %3673 = vmatprep.subr.mxu0 0.0
        %3674 = vmatpush1.xpose.msra.mxu0 %v290
        %3675 = vmatprep.subr.mxu0 0.0
        %3676 = vmatpush1.xpose.msra.mxu0 %v293
        %3677 = vmatprep.subr.mxu0 0.0
        %3678 = vmatpush1.xpose.msra.mxu0 %v296
        %3679 = vmatprep.subr.mxu0 0.0
        %3680 = vmatpush1.xpose.msra.mxu0 %v299
        %3681 = vmatprep.subr.mxu0 0.0
        %3682 = vmatpush1.xpose.msra.mxu0 %v302
        %3683 = vmatprep.subr.mxu0 0.0
        %3684 = vmatpush1.xpose.msra.mxu0 %v305
        %3685 = vmatprep.subr.mxu0 0.0
        %3686 = vmatpush1.xpose.msra.mxu0 0.0
        %3687 = vmatprep.subr.mxu0 0.0
        %3688 = vmatpush1.xpose.msra.mxu0 0.0
        %3689 = vmatprep.subr.mxu0 0.0
        %3690 = vmatpush1.xpose.msra.mxu0 0.0
        %3691 = vmatprep.subr.mxu0 0.0
        %3692 = vmatpush1.xpose.msra.mxu0 0.0
        %3693 = vmatprep.subr.mxu0 0.0
        %3694 = vmatpush1.xpose.msra.mxu0 0.0
        %3695 = vmatprep.subr.mxu0 0.0
        %3696 = vmatpush1.xpose.msra.mxu0 0.0
        %3697 = vmatprep.subr.mxu0 0.0
        %3698 = vmatpush1.xpose.msra.mxu0 0.0
        %3699 = vmatprep.subr.mxu0 0.0
        %3700 = vmatpush1.xpose.msra.mxu0 0.0
        %3701 = vmatprep.subr.mxu0 0.0
        %3702 = vmatpush1.xpose.msra.mxu0 0.0
        %3703 = vmatprep.subr.mxu0 0.0
        %3704 = vmatpush1.xpose.msra.mxu0 0.0
        %3705 = vmatprep.subr.mxu0 0.0
        %3706 = vmatpush1.xpose.msra.mxu0 0.0
        %3707 = vmatprep.subr.mxu0 0.0
        %3708 = vmatpush1.xpose.msra.mxu0 0.0
        %3709 = vmatprep.subr.mxu0 0.0
        %3710 = vmatpush1.xpose.msra.mxu0 0.0
        %3711 = vmatprep.subr.mxu0 0.0
        %3712 = vmatpush1.xpose.msra.mxu0 0.0
        %3713 = vmatprep.subr.mxu0 0.0
        %3714 = vmatpush1.xpose.msra.mxu0 0.0
        %3715 = vmatprep.subr.mxu0 0.0
        %3716 = vmatpush1.xpose.msra.mxu0 0.0
        %3717 = vmatprep.mubr.f32.mxu0 0.0
        %3718 = vmatmul.mubr.f32.gmra.mrb[0].mxu0 %v3606
        %v3719 = vpop.f32.mrb[0].mxu0
        %v3720 = vadd.f32 0.0, %v3719
        %v3721 = vpop.f32.mrb[0].mxu0
        %3722 = vmatprep.mubr.f32.mxu0 0.0
        %3723 = vmatmul.mubr.f32.gmra.mrb[0].mxu0 %v3609
        %v3724 = vpop.f32.mrb[0].mxu0
        %v3725 = vadd.f32 0.0, %v3724
        %v3726 = vpop.f32.mrb[0].mxu0
        %3727 = vmatprep.mubr.f32.mxu0 0.0
        %3728 = vmatmul.mubr.f32.gmra.mrb[0].mxu0 %v3612
        %v3729 = vpop.f32.mrb[0].mxu0
        %v3730 = vadd.f32 0.0, %v3729
        %v3731 = vpop.f32.mrb[0].mxu0
        %3732 = vmatprep.mubr.f32.mxu0 0.0
        %3733 = vmatmul.mubr.f32.gmra.mrb[0].mxu0 %v3615
        %v3734 = vpop.f32.mrb[0].mxu0
        %v3735 = vadd.f32 0.0, %v3734
        %v3736 = vpop.f32.mrb[0].mxu0
        %3737 = vmatprep.mubr.f32.mxu0 0.0
        %3738 = vmatmul.mubr.f32.gmra.mrb[0].mxu0 %v3618
        %v3739 = vpop.f32.mrb[0].mxu0
        %v3740 = vadd.f32 0.0, %v3739
        %v3741 = vpop.f32.mrb[0].mxu0
        %3742 = vmatprep.mubr.f32.mxu0 0.0
        %3743 = vmatmul.mubr.f32.gmra.mrb[0].mxu0 %v3621
        %v3744 = vpop.f32.mrb[0].mxu0
        %v3745 = vadd.f32 0.0, %v3744
        %v3746 = vpop.f32.mrb[0].mxu0
        %3747 = vmatprep.mubr.f32.mxu0 0.0
        %3748 = vmatmul.mubr.f32.gmra.mrb[0].mxu0 %v3624
        %v3749 = vpop.f32.mrb[0].mxu0
        %v3750 = vadd.f32 0.0, %v3749
        %v3751 = vpop.f32.mrb[0].mxu0
        %3752 = vmatprep.mubr.f32.mxu0 0.0
        %3753 = vmatmul.mubr.f32.gmra.mrb[0].mxu0 %v3627
        %v3754 = vpop.f32.mrb[0].mxu0
        %v3755 = vadd.f32 0.0, %v3754
        %v3756 = vpop.f32.mrb[0].mxu0
        %3757 = vmatprep.mubr.f32.mxu0 0.0
        %3758 = vmatmul.mubr.f32.gmra.mrb[0].mxu0 %v3630
        %v3759 = vpop.f32.mrb[0].mxu0
        %v3760 = vadd.f32 0.0, %v3759
        %v3761 = vpop.f32.mrb[0].mxu0
        %3762 = vmatprep.mubr.f32.mxu0 0.0
        %3763 = vmatmul.mubr.f32.gmra.mrb[0].mxu0 %v3633
        %v3764 = vpop.f32.mrb[0].mxu0
        %v3765 = vadd.f32 0.0, %v3764
        %v3766 = vpop.f32.mrb[0].mxu0
        %3767 = vmatprep.mubr.f32.mxu0 0.0
        %3768 = vmatmul.mubr.f32.gmra.mrb[0].mxu0 %v3636
        %v3769 = vpop.f32.mrb[0].mxu0
        %v3770 = vadd.f32 0.0, %v3769
        %v3771 = vpop.f32.mrb[0].mxu0
        %3772 = vmatprep.mubr.f32.mxu0 0.0
        %3773 = vmatmul.mubr.f32.gmra.mrb[0].mxu0 %v3639
        %v3774 = vpop.f32.mrb[0].mxu0
        %v3775 = vadd.f32 0.0, %v3774
        %v3776 = vpop.f32.mrb[0].mxu0
        %3777 = vmatprep.mubr.f32.mxu0 0.0
        %3778 = vmatmul.mubr.f32.gmra.mrb[0].mxu0 %v3642
        %v3779 = vpop.f32.mrb[0].mxu0
        %v3780 = vadd.f32 0.0, %v3779
        %v3781 = vpop.f32.mrb[0].mxu0
        %3782 = vmatprep.mubr.f32.mxu0 0.0
        %3783 = vmatmul.mubr.f32.gmra.mrb[0].mxu0 %v3645
        %v3784 = vpop.f32.mrb[0].mxu0
        %v3785 = vadd.f32 0.0, %v3784
        %v3786 = vpop.f32.mrb[0].mxu0
        %3787 = vmatprep.mubr.f32.mxu0 0.0
        %3788 = vmatmul.mubr.f32.gmra.mrb[0].mxu0 %v3648
        %v3789 = vpop.f32.mrb[0].mxu0
        %v3790 = vadd.f32 0.0, %v3789
        %v3791 = vpop.f32.mrb[0].mxu0
        %3792 = vmatprep.mubr.f32.mxu0 0.0
        %3793 = vmatmul.mubr.f32.gmra.mrb[0].mxu0 %v3651
        %v3794 = vpop.f32.mrb[0].mxu0
        %v3795 = vadd.f32 0.0, %v3794
        %v3796 = vpop.f32.mrb[0].mxu0
        %3797 = vdwg.mxu0
        %v3798 = vmul.f32 %v3365, %v3720
        %v3799 = vmul.f32 %v3367, %v3725
        %v3800 = vmul.f32 %v3369, %v3730
        %v3801 = vmul.f32 %v3371, %v3735
        %v3802 = vmul.f32 %v3373, %v3740
        %v3803 = vmul.f32 %v3375, %v3745
        %v3804 = vmul.f32 %v3377, %v3750
        %v3805 = vmul.f32 %v3379, %v3755
        %v3806 = vmul.f32 %v3381, %v3760
        %v3807 = vmul.f32 %v3383, %v3765
        %v3808 = vmul.f32 %v3385, %v3770
        %v3809 = vmul.f32 %v3387, %v3775
        %v3810 = vmul.f32 %v3389, %v3780
        %v3811 = vmul.f32 %v3391, %v3785
        %v3812 = vmul.f32 %v3393, %v3790
        %v3813 = vmul.f32 %v3395, %v3795
        %3814 = vrot.lane.b32.xlu0 %v2981, 120
        %v3815 = vpop.permute.xlu0 %3814
        %3816 = vrot.lane.b32.xlu0 %v2986, 120
        %v3817 = vpop.permute.xlu0 %3816
        %3818 = vrot.lane.b32.xlu0 %v2991, 120
        %v3819 = vpop.permute.xlu0 %3818
        %3820 = vrot.lane.b32.xlu0 %v2996, 120
        %v3821 = vpop.permute.xlu0 %3820
        %3822 = vrot.lane.b32.xlu0 %v3001, 120
        %v3823 = vpop.permute.xlu0 %3822
        %3824 = vrot.lane.b32.xlu0 %v3006, 120
        %v3825 = vpop.permute.xlu0 %3824
        %3826 = vrot.lane.b32.xlu0 %v3011, 120
        %v3827 = vpop.permute.xlu0 %3826
        %3828 = vrot.lane.b32.xlu0 %v3016, 120
        %v3829 = vpop.permute.xlu0 %3828
        %3830 = vrot.lane.b32.xlu0 %v3021, 120
        %v3831 = vpop.permute.xlu0 %3830
        %3832 = vrot.lane.b32.xlu0 %v3026, 120
        %v3833 = vpop.permute.xlu0 %3832
        %3834 = vrot.lane.b32.xlu0 %v3031, 120
        %v3835 = vpop.permute.xlu0 %3834
        %3836 = vrot.lane.b32.xlu0 %v3036, 120
        %v3837 = vpop.permute.xlu0 %3836
        %3838 = vrot.lane.b32.xlu0 %v3041, 120
        %v3839 = vpop.permute.xlu0 %3838
        %3840 = vrot.lane.b32.xlu0 %v3046, 120
        %v3841 = vpop.permute.xlu0 %3840
        %3842 = vrot.lane.b32.xlu0 %v3051, 120
        %v3843 = vpop.permute.xlu0 %3842
        %3844 = vrot.lane.b32.xlu0 %v3056, 120
        %v3845 = vpop.permute.xlu0 %3844
        %3862 = vmatprep.subr.mxu0 0.0
        %3863 = vmatpush1.msra.mxu0 %v3815
        %3864 = vmatprep.subr.mxu0 0.0
        %3865 = vmatpush1.msra.mxu0 %v3817
        %3866 = vmatprep.subr.mxu0 0.0
        %3867 = vmatpush1.msra.mxu0 %v3819
        %3868 = vmatprep.subr.mxu0 0.0
        %3869 = vmatpush1.msra.mxu0 %v3821
        %3870 = vmatprep.subr.mxu0 0.0
        %3871 = vmatpush1.msra.mxu0 %v3823
        %3872 = vmatprep.subr.mxu0 0.0
        %3873 = vmatpush1.msra.mxu0 %v3825
        %3874 = vmatprep.subr.mxu0 0.0
        %3875 = vmatpush1.msra.mxu0 %v3827
        %3876 = vmatprep.subr.mxu0 0.0
        %3877 = vmatpush1.msra.mxu0 %v3829
        %3878 = vmatprep.subr.mxu0 0.0
        %3879 = vmatpush1.msra.mxu0 %v3831
        %3880 = vmatprep.subr.mxu0 0.0
        %3881 = vmatpush1.msra.mxu0 %v3833
        %3882 = vmatprep.subr.mxu0 0.0
        %3883 = vmatpush1.msra.mxu0 %v3835
        %3884 = vmatprep.subr.mxu0 0.0
        %3885 = vmatpush1.msra.mxu0 %v3837
        %3886 = vmatprep.subr.mxu0 0.0
        %3887 = vmatpush1.msra.mxu0 %v3839
        %3888 = vmatprep.subr.mxu0 0.0
        %3889 = vmatpush1.msra.mxu0 %v3841
        %3890 = vmatprep.subr.mxu0 0.0
        %3891 = vmatpush1.msra.mxu0 %v3843
        %3892 = vmatprep.subr.mxu0 0.0
        %3893 = vmatpush1.msra.mxu0 %v3845
        %3894 = vmatprep.subr.mxu0 0.0
        %3895 = vmatpush1.msra.mxu0 0.0
        %3896 = vmatprep.subr.mxu0 0.0
        %3897 = vmatpush1.msra.mxu0 0.0
        %3898 = vmatprep.subr.mxu0 0.0
        %3899 = vmatpush1.msra.mxu0 0.0
        %3900 = vmatprep.subr.mxu0 0.0
        %3901 = vmatpush1.msra.mxu0 0.0
        %3902 = vmatprep.subr.mxu0 0.0
        %3903 = vmatpush1.msra.mxu0 0.0
        %3904 = vmatprep.subr.mxu0 0.0
        %3905 = vmatpush1.msra.mxu0 0.0
        %3906 = vmatprep.subr.mxu0 0.0
        %3907 = vmatpush1.msra.mxu0 0.0
        %3908 = vmatprep.subr.mxu0 0.0
        %3909 = vmatpush1.msra.mxu0 0.0
        %3910 = vmatprep.subr.mxu0 0.0
        %3911 = vmatpush1.msra.mxu0 0.0
        %3912 = vmatprep.subr.mxu0 0.0
        %3913 = vmatpush1.msra.mxu0 0.0
        %3914 = vmatprep.subr.mxu0 0.0
        %3915 = vmatpush1.msra.mxu0 0.0
        %3916 = vmatprep.subr.mxu0 0.0
        %3917 = vmatpush1.msra.mxu0 0.0
        %3918 = vmatprep.subr.mxu0 0.0
        %3919 = vmatpush1.msra.mxu0 0.0
        %3920 = vmatprep.subr.mxu0 0.0
        %3921 = vmatpush1.msra.mxu0 0.0
        %3922 = vmatprep.subr.mxu0 0.0
        %3923 = vmatpush1.msra.mxu0 0.0
        %3924 = vmatprep.subr.mxu0 0.0
        %3925 = vmatpush1.msra.mxu0 0.0
        %3926 = vmatprep.mubr.f32.mxu0 0.0
        %3927 = vmatmul.mubr.f32.gmra.mrb[0].mxu0 %v3798
        %v3928 = vpop.f32.mrb[0].mxu0
        %v3929 = vadd.f32 0.0, %v3928
        %v3930 = vpop.f32.mrb[0].mxu0
        %3931 = vmatprep.mubr.f32.mxu0 0.0
        %3932 = vmatmul.mubr.f32.gmra.mrb[0].mxu0 %v3799
        %v3933 = vpop.f32.mrb[0].mxu0
        %v3934 = vadd.f32 0.0, %v3933
        %v3935 = vpop.f32.mrb[0].mxu0
        %3936 = vmatprep.mubr.f32.mxu0 0.0
        %3937 = vmatmul.mubr.f32.gmra.mrb[0].mxu0 %v3800
        %v3938 = vpop.f32.mrb[0].mxu0
        %v3939 = vadd.f32 0.0, %v3938
        %v3940 = vpop.f32.mrb[0].mxu0
        %3941 = vmatprep.mubr.f32.mxu0 0.0
        %3942 = vmatmul.mubr.f32.gmra.mrb[0].mxu0 %v3801
        %v3943 = vpop.f32.mrb[0].mxu0
        %v3944 = vadd.f32 0.0, %v3943
        %v3945 = vpop.f32.mrb[0].mxu0
        %3946 = vmatprep.mubr.f32.mxu0 0.0
        %3947 = vmatmul.mubr.f32.gmra.mrb[0].mxu0 %v3802
        %v3948 = vpop.f32.mrb[0].mxu0
        %v3949 = vadd.f32 0.0, %v3948
        %v3950 = vpop.f32.mrb[0].mxu0
        %3951 = vmatprep.mubr.f32.mxu0 0.0
        %3952 = vmatmul.mubr.f32.gmra.mrb[0].mxu0 %v3803
        %v3953 = vpop.f32.mrb[0].mxu0
        %v3954 = vadd.f32 0.0, %v3953
        %v3955 = vpop.f32.mrb[0].mxu0
        %3956 = vmatprep.mubr.f32.mxu0 0.0
        %3957 = vmatmul.mubr.f32.gmra.mrb[0].mxu0 %v3804
        %v3958 = vpop.f32.mrb[0].mxu0
        %v3959 = vadd.f32 0.0, %v3958
        %v3960 = vpop.f32.mrb[0].mxu0
        %3961 = vmatprep.mubr.f32.mxu0 0.0
        %3962 = vmatmul.mubr.f32.gmra.mrb[0].mxu0 %v3805
        %v3963 = vpop.f32.mrb[0].mxu0
        %v3964 = vadd.f32 0.0, %v3963
        %v3965 = vpop.f32.mrb[0].mxu0
        %3966 = vmatprep.mubr.f32.mxu0 0.0
        %3967 = vmatmul.mubr.f32.gmra.mrb[0].mxu0 %v3806
        %v3968 = vpop.f32.mrb[0].mxu0
        %v3969 = vadd.f32 0.0, %v3968
        %v3970 = vpop.f32.mrb[0].mxu0
        %3971 = vmatprep.mubr.f32.mxu0 0.0
        %3972 = vmatmul.mubr.f32.gmra.mrb[0].mxu0 %v3807
        %v3973 = vpop.f32.mrb[0].mxu0
        %v3974 = vadd.f32 0.0, %v3973
        %v3975 = vpop.f32.mrb[0].mxu0
        %3976 = vmatprep.mubr.f32.mxu0 0.0
        %3977 = vmatmul.mubr.f32.gmra.mrb[0].mxu0 %v3808
        %v3978 = vpop.f32.mrb[0].mxu0
        %v3979 = vadd.f32 0.0, %v3978
        %v3980 = vpop.f32.mrb[0].mxu0
        %3981 = vmatprep.mubr.f32.mxu0 0.0
        %3982 = vmatmul.mubr.f32.gmra.mrb[0].mxu0 %v3809
        %v3983 = vpop.f32.mrb[0].mxu0
        %v3984 = vadd.f32 0.0, %v3983
        %v3985 = vpop.f32.mrb[0].mxu0
        %3986 = vmatprep.mubr.f32.mxu0 0.0
        %3987 = vmatmul.mubr.f32.gmra.mrb[0].mxu0 %v3810
        %v3988 = vpop.f32.mrb[0].mxu0
        %v3989 = vadd.f32 0.0, %v3988
        %v3990 = vpop.f32.mrb[0].mxu0
        %3991 = vmatprep.mubr.f32.mxu0 0.0
        %3992 = vmatmul.mubr.f32.gmra.mrb[0].mxu0 %v3811
        %v3993 = vpop.f32.mrb[0].mxu0
        %v3994 = vadd.f32 0.0, %v3993
        %v3995 = vpop.f32.mrb[0].mxu0
        %3996 = vmatprep.mubr.f32.mxu0 0.0
        %3997 = vmatmul.mubr.f32.gmra.mrb[0].mxu0 %v3812
        %v3998 = vpop.f32.mrb[0].mxu0
        %v3999 = vadd.f32 0.0, %v3998
        %v4000 = vpop.f32.mrb[0].mxu0
        %4001 = vmatprep.mubr.f32.mxu0 0.0
        %4002 = vmatmul.mubr.f32.gmra.mrb[0].mxu0 %v3813
        %v4003 = vpop.f32.mrb[0].mxu0
        %v4004 = vadd.f32 0.0, %v4003
        %v4005 = vpop.f32.mrb[0].mxu0
        %4006 = vdwg.mxu0
        %v4008 = vsel %vm1083, %v3929, 0
        %v4011 = vsel %vm1083, %v3934, 0
        %v4014 = vsel %vm1083, %v3939, 0
        %v4017 = vsel %vm1083, %v3944, 0
        %v4020 = vsel %vm1083, %v3949, 0
        %v4023 = vsel %vm1083, %v3954, 0
        %v4026 = vsel %vm1083, %v3959, 0
        %v4029 = vsel %vm1083, %v3964, 0
        %v4032 = vsel %vm1083, %v3969, 0
        %v4035 = vsel %vm1083, %v3974, 0
        %v4038 = vsel %vm1083, %v3979, 0
        %v4041 = vsel %vm1083, %v3984, 0
        %v4044 = vsel %vm1083, %v3989, 0
        %v4047 = vsel %vm1083, %v3994, 0
        %v4050 = vsel %vm1083, %v3999, 0
        %v4053 = vsel %vm1083, %v4004, 0
        %4055 = vmatprep.subr.mxu0 0.0
        %4056 = vmatpush1.msra.mxu0 %v2050
        %4057 = vmatprep.subr.mxu0 0.0
        %4058 = vmatpush1.msra.mxu0 0.0
        %4059 = vmatprep.subr.mxu0 0.0
        %4060 = vmatpush1.msra.mxu0 0.0
        %4061 = vmatprep.subr.mxu0 0.0
        %4062 = vmatpush1.msra.mxu0 0.0
        %4063 = vmatprep.subr.mxu0 0.0
        %4064 = vmatpush1.msra.mxu0 0.0
        %4065 = vmatprep.subr.mxu0 0.0
        %4066 = vmatpush1.msra.mxu0 0.0
        %4067 = vmatprep.subr.mxu0 0.0
        %4068 = vmatpush1.msra.mxu0 0.0
        %4069 = vmatprep.subr.mxu0 0.0
        %4070 = vmatpush1.msra.mxu0 0.0
        %4071 = vmatprep.subr.mxu0 0.0
        %4072 = vmatpush1.msra.mxu0 0.0
        %4073 = vmatprep.subr.mxu0 0.0
        %4074 = vmatpush1.msra.mxu0 0.0
        %4075 = vmatprep.subr.mxu0 0.0
        %4076 = vmatpush1.msra.mxu0 0.0
        %4077 = vmatprep.subr.mxu0 0.0
        %4078 = vmatpush1.msra.mxu0 0.0
        %4079 = vmatprep.subr.mxu0 0.0
        %4080 = vmatpush1.msra.mxu0 0.0
        %4081 = vmatprep.subr.mxu0 0.0
        %4082 = vmatpush1.msra.mxu0 0.0
        %4083 = vmatprep.subr.mxu0 0.0
        %4084 = vmatpush1.msra.mxu0 0.0
        %4085 = vmatprep.subr.mxu0 0.0
        %4086 = vmatpush1.msra.mxu0 0.0
        %4087 = vmatprep.subr.mxu0 0.0
        %4088 = vmatpush1.msra.mxu0 0.0
        %4089 = vmatprep.subr.mxu0 0.0
        %4090 = vmatpush1.msra.mxu0 0.0
        %4091 = vmatprep.subr.mxu0 0.0
        %4092 = vmatpush1.msra.mxu0 0.0
        %4093 = vmatprep.subr.mxu0 0.0
        %4094 = vmatpush1.msra.mxu0 0.0
        %4095 = vmatprep.subr.mxu0 0.0
        %4096 = vmatpush1.msra.mxu0 0.0
        %4097 = vmatprep.subr.mxu0 0.0
        %4098 = vmatpush1.msra.mxu0 0.0
        %4099 = vmatprep.subr.mxu0 0.0
        %4100 = vmatpush1.msra.mxu0 0.0
        %4101 = vmatprep.subr.mxu0 0.0
        %4102 = vmatpush1.msra.mxu0 0.0
        %4103 = vmatprep.subr.mxu0 0.0
        %4104 = vmatpush1.msra.mxu0 0.0
        %4105 = vmatprep.subr.mxu0 0.0
        %4106 = vmatpush1.msra.mxu0 0.0
        %4107 = vmatprep.subr.mxu0 0.0
        %4108 = vmatpush1.msra.mxu0 0.0
        %4109 = vmatprep.subr.mxu0 0.0
        %4110 = vmatpush1.msra.mxu0 0.0
        %4111 = vmatprep.subr.mxu0 0.0
        %4112 = vmatpush1.msra.mxu0 0.0
        %4113 = vmatprep.subr.mxu0 0.0
        %4114 = vmatpush1.msra.mxu0 0.0
        %4115 = vmatprep.subr.mxu0 0.0
        %4116 = vmatpush1.msra.mxu0 0.0
        %4117 = vmatprep.subr.mxu0 0.0
        %4118 = vmatpush1.msra.mxu0 0.0
        %4119 = vmatprep.mubr.f32.mxu0 0.0
        %4120 = vmatmul.mubr.f32.gmra.mrb[0].mxu0 %v4008
        %v4121 = vpop.f32.mrb[0].mxu0
        %v4122 = vadd.f32 0.0, %v4121
        %v4123 = vpop.f32.mrb[0].mxu0
        %4124 = vmatprep.mubr.f32.mxu0 0.0
        %4125 = vmatmul.mubr.f32.gmra.mrb[0].mxu0 %v4011
        %v4126 = vpop.f32.mrb[0].mxu0
        %v4127 = vadd.f32 0.0, %v4126
        %v4128 = vpop.f32.mrb[0].mxu0
        %4129 = vmatprep.mubr.f32.mxu0 0.0
        %4130 = vmatmul.mubr.f32.gmra.mrb[0].mxu0 %v4014
        %v4131 = vpop.f32.mrb[0].mxu0
        %v4132 = vadd.f32 0.0, %v4131
        %v4133 = vpop.f32.mrb[0].mxu0
        %4134 = vmatprep.mubr.f32.mxu0 0.0
        %4135 = vmatmul.mubr.f32.gmra.mrb[0].mxu0 %v4017
        %v4136 = vpop.f32.mrb[0].mxu0
        %v4137 = vadd.f32 0.0, %v4136
        %v4138 = vpop.f32.mrb[0].mxu0
        %4139 = vmatprep.mubr.f32.mxu0 0.0
        %4140 = vmatmul.mubr.f32.gmra.mrb[0].mxu0 %v4020
        %v4141 = vpop.f32.mrb[0].mxu0
        %v4142 = vadd.f32 0.0, %v4141
        %v4143 = vpop.f32.mrb[0].mxu0
        %4144 = vmatprep.mubr.f32.mxu0 0.0
        %4145 = vmatmul.mubr.f32.gmra.mrb[0].mxu0 %v4023
        %v4146 = vpop.f32.mrb[0].mxu0
        %v4147 = vadd.f32 0.0, %v4146
        %v4148 = vpop.f32.mrb[0].mxu0
        %4149 = vmatprep.mubr.f32.mxu0 0.0
        %4150 = vmatmul.mubr.f32.gmra.mrb[0].mxu0 %v4026
        %v4151 = vpop.f32.mrb[0].mxu0
        %v4152 = vadd.f32 0.0, %v4151
        %v4153 = vpop.f32.mrb[0].mxu0
        %4154 = vmatprep.mubr.f32.mxu0 0.0
        %4155 = vmatmul.mubr.f32.gmra.mrb[0].mxu0 %v4029
        %v4156 = vpop.f32.mrb[0].mxu0
        %v4157 = vadd.f32 0.0, %v4156
        %v4158 = vpop.f32.mrb[0].mxu0
        %4159 = vmatprep.mubr.f32.mxu0 0.0
        %4160 = vmatmul.mubr.f32.gmra.mrb[0].mxu0 %v4032
        %v4161 = vpop.f32.mrb[0].mxu0
        %v4162 = vadd.f32 0.0, %v4161
        %v4163 = vpop.f32.mrb[0].mxu0
        %4164 = vmatprep.mubr.f32.mxu0 0.0
        %4165 = vmatmul.mubr.f32.gmra.mrb[0].mxu0 %v4035
        %v4166 = vpop.f32.mrb[0].mxu0
        %v4167 = vadd.f32 0.0, %v4166
        %v4168 = vpop.f32.mrb[0].mxu0
        %4169 = vmatprep.mubr.f32.mxu0 0.0
        %4170 = vmatmul.mubr.f32.gmra.mrb[0].mxu0 %v4038
        %v4171 = vpop.f32.mrb[0].mxu0
        %v4172 = vadd.f32 0.0, %v4171
        %v4173 = vpop.f32.mrb[0].mxu0
        %4174 = vmatprep.mubr.f32.mxu0 0.0
        %4175 = vmatmul.mubr.f32.gmra.mrb[0].mxu0 %v4041
        %v4176 = vpop.f32.mrb[0].mxu0
        %v4177 = vadd.f32 0.0, %v4176
        %v4178 = vpop.f32.mrb[0].mxu0
        %4179 = vmatprep.mubr.f32.mxu0 0.0
        %4180 = vmatmul.mubr.f32.gmra.mrb[0].mxu0 %v4044
        %v4181 = vpop.f32.mrb[0].mxu0
        %v4182 = vadd.f32 0.0, %v4181
        %v4183 = vpop.f32.mrb[0].mxu0
        %4184 = vmatprep.mubr.f32.mxu0 0.0
        %4185 = vmatmul.mubr.f32.gmra.mrb[0].mxu0 %v4047
        %v4186 = vpop.f32.mrb[0].mxu0
        %v4187 = vadd.f32 0.0, %v4186
        %v4188 = vpop.f32.mrb[0].mxu0
        %4189 = vmatprep.mubr.f32.mxu0 0.0
        %4190 = vmatmul.mubr.f32.gmra.mrb[0].mxu0 %v4050
        %v4191 = vpop.f32.mrb[0].mxu0
        %v4192 = vadd.f32 0.0, %v4191
        %v4193 = vpop.f32.mrb[0].mxu0
        %4194 = vmatprep.mubr.f32.mxu0 0.0
        %4195 = vmatmul.mubr.f32.gmra.mrb[0].mxu0 %v4053
        %v4196 = vpop.f32.mrb[0].mxu0
        %v4197 = vadd.f32 0.0, %v4196
        %v4198 = vpop.f32.mrb[0].mxu0
        %4199 = vdwg.mxu0
        %v4200 = vmul.f32 %v4122, %v229
        %v4201 = vmul.f32 %v4127, %v230
        %v4202 = vmul.f32 %v4132, %v231
        %v4203 = vmul.f32 %v4137, %v232
        %v4204 = vmul.f32 %v4142, %v233
        %v4205 = vmul.f32 %v4147, %v234
        %v4206 = vmul.f32 %v4152, %v235
        %v4207 = vmul.f32 %v4157, %v236
        %v4208 = vmul.f32 %v4162, %v237
        %v4209 = vmul.f32 %v4167, %v238
        %v4210 = vmul.f32 %v4172, %v239
        %v4211 = vmul.f32 %v4177, %v240
        %v4212 = vmul.f32 %v4182, %v241
        %v4213 = vmul.f32 %v4187, %v242
        %v4214 = vmul.f32 %v4192, %v243
        %v4215 = vmul.f32 %v4197, %v244
        %4216 = vmatprep.subr.mxu0 0.0
        %4217 = vmatpush1.msra.mxu0 %v4200
        %4218 = vmatprep.subr.mxu0 0.0
        %4219 = vmatpush1.msra.mxu0 %v4201
        %4220 = vmatprep.subr.mxu0 0.0
        %4221 = vmatpush1.msra.mxu0 %v4202
        %4222 = vmatprep.subr.mxu0 0.0
        %4223 = vmatpush1.msra.mxu0 %v4203
        %4224 = vmatprep.subr.mxu0 0.0
        %4225 = vmatpush1.msra.mxu0 %v4204
        %4226 = vmatprep.subr.mxu0 0.0
        %4227 = vmatpush1.msra.mxu0 %v4205
        %4228 = vmatprep.subr.mxu0 0.0
        %4229 = vmatpush1.msra.mxu0 %v4206
        %4230 = vmatprep.subr.mxu0 0.0
        %4231 = vmatpush1.msra.mxu0 %v4207
        %4232 = vmatprep.subr.mxu0 0.0
        %4233 = vmatpush1.msra.mxu0 %v4208
        %4234 = vmatprep.subr.mxu0 0.0
        %4235 = vmatpush1.msra.mxu0 %v4209
        %4236 = vmatprep.subr.mxu0 0.0
        %4237 = vmatpush1.msra.mxu0 %v4210
        %4238 = vmatprep.subr.mxu0 0.0
        %4239 = vmatpush1.msra.mxu0 %v4211
        %4240 = vmatprep.subr.mxu0 0.0
        %4241 = vmatpush1.msra.mxu0 %v4212
        %4242 = vmatprep.subr.mxu0 0.0
        %4243 = vmatpush1.msra.mxu0 %v4213
        %4244 = vmatprep.subr.mxu0 0.0
        %4245 = vmatpush1.msra.mxu0 %v4214
        %4246 = vmatprep.subr.mxu0 0.0
        %4247 = vmatpush1.msra.mxu0 %v4215
        %4248 = vmatprep.subr.mxu0 0.0
        %4249 = vmatpush1.msra.mxu0 0.0
        %4250 = vmatprep.subr.mxu0 0.0
        %4251 = vmatpush1.msra.mxu0 0.0
        %4252 = vmatprep.subr.mxu0 0.0
        %4253 = vmatpush1.msra.mxu0 0.0
        %4254 = vmatprep.subr.mxu0 0.0
        %4255 = vmatpush1.msra.mxu0 0.0
        %4256 = vmatprep.subr.mxu0 0.0
        %4257 = vmatpush1.msra.mxu0 0.0
        %4258 = vmatprep.subr.mxu0 0.0
        %4259 = vmatpush1.msra.mxu0 0.0
        %4260 = vmatprep.subr.mxu0 0.0
        %4261 = vmatpush1.msra.mxu0 0.0
        %4262 = vmatprep.subr.mxu0 0.0
        %4263 = vmatpush1.msra.mxu0 0.0
        %4264 = vmatprep.subr.mxu0 0.0
        %4265 = vmatpush1.msra.mxu0 0.0
        %4266 = vmatprep.subr.mxu0 0.0
        %4267 = vmatpush1.msra.mxu0 0.0
        %4268 = vmatprep.subr.mxu0 0.0
        %4269 = vmatpush1.msra.mxu0 0.0
        %4270 = vmatprep.subr.mxu0 0.0
        %4271 = vmatpush1.msra.mxu0 0.0
        %4272 = vmatprep.subr.mxu0 0.0
        %4273 = vmatpush1.msra.mxu0 0.0
        %4274 = vmatprep.subr.mxu0 0.0
        %4275 = vmatpush1.msra.mxu0 0.0
        %4276 = vmatprep.subr.mxu0 0.0
        %4277 = vmatpush1.msra.mxu0 0.0
        %4278 = vmatprep.subr.mxu0 0.0
        %4279 = vmatpush1.msra.mxu0 0.0
        %4280 = vmatprep.mubr.f32.mxu0 0.0
        %4281 = vmatmul.mubr.f32.gmra.mrb[0].mxu0 %v225
        %v4282 = vpop.f32.mrb[0].mxu0
        %v4283 = vadd.f32 0.0, %v4282
        %v4284 = vpop.f32.mrb[0].mxu0
        %4285 = vmatprep.mubr.f32.mxu0 0.0
        %4286 = vmatmul.mubr.f32.gmra.mrb[0].mxu0 %v226
        %v4287 = vpop.f32.mrb[0].mxu0
        %v4288 = vadd.f32 0.0, %v4287
        %v4289 = vpop.f32.mrb[0].mxu0
        %4290 = vmatprep.mubr.f32.mxu0 0.0
        %4291 = vmatmul.mubr.f32.gmra.mrb[0].mxu0 %v227
        %v4292 = vpop.f32.mrb[0].mxu0
        %v4293 = vadd.f32 0.0, %v4292
        %v4294 = vpop.f32.mrb[0].mxu0
        %4295 = vmatprep.mubr.f32.mxu0 0.0
        %4296 = vmatmul.mubr.f32.gmra.mrb[0].mxu0 %v228
        %v4297 = vpop.f32.mrb[0].mxu0
        %v4298 = vadd.f32 0.0, %v4297
        %v4299 = vpop.f32.mrb[0].mxu0
        %4300 = vdwg.mxu0
        %v4302 = vsel %vm2298, %v4283, 0
        %v4305 = vsel %vm2298, %v4288, 0
        %v4308 = vsel %vm2298, %v4293, 0
        %v4311 = vsel %vm2298, %v4298, 0
        %4313 = vmatprep.subr.mxu0 0.0
        %4314 = vmatpush1.msra.mxu0 %v2491
        %4315 = vmatprep.subr.mxu0 0.0
        %4316 = vmatpush1.msra.mxu0 %v2492
        %4317 = vmatprep.subr.mxu0 0.0
        %4318 = vmatpush1.msra.mxu0 0.0
        %4319 = vmatprep.subr.mxu0 0.0
        %4320 = vmatpush1.msra.mxu0 0.0
        %4321 = vmatprep.subr.mxu0 0.0
        %4322 = vmatpush1.msra.mxu0 0.0
        %4323 = vmatprep.subr.mxu0 0.0
        %4324 = vmatpush1.msra.mxu0 0.0
        %4325 = vmatprep.subr.mxu0 0.0
        %4326 = vmatpush1.msra.mxu0 0.0
        %4327 = vmatprep.subr.mxu0 0.0
        %4328 = vmatpush1.msra.mxu0 0.0
        %4329 = vmatprep.subr.mxu0 0.0
        %4330 = vmatpush1.msra.mxu0 0.0
        %4331 = vmatprep.subr.mxu0 0.0
        %4332 = vmatpush1.msra.mxu0 0.0
        %4333 = vmatprep.subr.mxu0 0.0
        %4334 = vmatpush1.msra.mxu0 0.0
        %4335 = vmatprep.subr.mxu0 0.0
        %4336 = vmatpush1.msra.mxu0 0.0
        %4337 = vmatprep.subr.mxu0 0.0
        %4338 = vmatpush1.msra.mxu0 0.0
        %4339 = vmatprep.subr.mxu0 0.0
        %4340 = vmatpush1.msra.mxu0 0.0
        %4341 = vmatprep.subr.mxu0 0.0
        %4342 = vmatpush1.msra.mxu0 0.0
        %4343 = vmatprep.subr.mxu0 0.0
        %4344 = vmatpush1.msra.mxu0 0.0
        %4345 = vmatprep.subr.mxu0 0.0
        %4346 = vmatpush1.msra.mxu0 0.0
        %4347 = vmatprep.subr.mxu0 0.0
        %4348 = vmatpush1.msra.mxu0 0.0
        %4349 = vmatprep.subr.mxu0 0.0
        %4350 = vmatpush1.msra.mxu0 0.0
        %4351 = vmatprep.subr.mxu0 0.0
        %4352 = vmatpush1.msra.mxu0 0.0
        %4353 = vmatprep.subr.mxu0 0.0
        %4354 = vmatpush1.msra.mxu0 0.0
        %4355 = vmatprep.subr.mxu0 0.0
        %4356 = vmatpush1.msra.mxu0 0.0
        %4357 = vmatprep.subr.mxu0 0.0
        %4358 = vmatpush1.msra.mxu0 0.0
        %4359 = vmatprep.subr.mxu0 0.0
        %4360 = vmatpush1.msra.mxu0 0.0
        %4361 = vmatprep.subr.mxu0 0.0
        %4362 = vmatpush1.msra.mxu0 0.0
        %4363 = vmatprep.subr.mxu0 0.0
        %4364 = vmatpush1.msra.mxu0 0.0
        %4365 = vmatprep.subr.mxu0 0.0
        %4366 = vmatpush1.msra.mxu0 0.0
        %4367 = vmatprep.subr.mxu0 0.0
        %4368 = vmatpush1.msra.mxu0 0.0
        %4369 = vmatprep.subr.mxu0 0.0
        %4370 = vmatpush1.msra.mxu0 0.0
        %4371 = vmatprep.subr.mxu0 0.0
        %4372 = vmatpush1.msra.mxu0 0.0
        %4373 = vmatprep.subr.mxu0 0.0
        %4374 = vmatpush1.msra.mxu0 0.0
        %4375 = vmatprep.subr.mxu0 0.0
        %4376 = vmatpush1.msra.mxu0 0.0
        %4377 = vmatprep.mubr.f32.mxu0 0.0
        %4378 = vmatmul.mubr.f32.gmra.mrb[0].mxu0 %v4302
        %v4379 = vpop.f32.mrb[0].mxu0
        %v4380 = vadd.f32 0.0, %v4379
        %v4381 = vpop.f32.mrb[0].mxu0
        %4382 = vmatprep.mubr.f32.mxu0 0.0
        %4383 = vmatmul.mubr.f32.gmra.mrb[0].mxu0 %v4305
        %v4384 = vpop.f32.mrb[0].mxu0
        %v4385 = vadd.f32 0.0, %v4384
        %v4386 = vpop.f32.mrb[0].mxu0
        %4387 = vmatprep.mubr.f32.mxu0 0.0
        %4388 = vmatmul.mubr.f32.gmra.mrb[0].mxu0 %v4308
        %v4389 = vpop.f32.mrb[0].mxu0
        %v4390 = vadd.f32 0.0, %v4389
        %v4391 = vpop.f32.mrb[0].mxu0
        %4392 = vmatprep.mubr.f32.mxu0 0.0
        %4393 = vmatmul.mubr.f32.gmra.mrb[0].mxu0 %v4311
        %v4394 = vpop.f32.mrb[0].mxu0
        %v4395 = vadd.f32 0.0, %v4394
        %v4396 = vpop.f32.mrb[0].mxu0
        %4397 = vdwg.mxu0
        %v4398 = vadd.f32 %v2572, %v4380
        %v4399 = vadd.f32 %v2577, %v4385
        %v4400 = vadd.f32 %v2582, %v4390
        %v4401 = vadd.f32 %v2587, %v4395
        %v4402 = vlaneseq
        %v4403 = vshrl.u32 %v4402, 7
        %v4404 = vsub.s32 1, %v4403
        %v4405 = vrot.slane %v252, %v4404
        %v4406 = vadd.f32 %v4398, %v4405
        %v4407 = vadd.f32 %v4399, %v4405
        %v4408 = vadd.f32 %v4400, %v4405
        %v4409 = vadd.f32 %v4401, %v4405
        %v4410 = vadd.f32 %v2477, %v4406
        %v4411 = vadd.f32 %v2478, %v4407
        %v4412 = vadd.f32 %v2479, %v4408
        %v4413 = vadd.f32 %v2480, %v4409
        %v4414 = vsel %vm258, %v4410, 0.0
        %4415 = vadd.xlane.f32.xlu0 %v4414
        %v4416 = vpop.xlane.xlu0 %4415
        %v4417 = vsel %vm258, %v4411, 0.0
        %4418 = vadd.xlane.f32.xlu0 %v4417
        %v4419 = vpop.xlane.xlu0 %4418
        %v4420 = vsel %vm258, %v4412, 0.0
        %4421 = vadd.xlane.f32.xlu0 %v4420
        %v4422 = vpop.xlane.xlu0 %4421
        %v4423 = vsel %vm258, %v4413, 0.0
        %4424 = vadd.xlane.f32.xlu0 %v4423
        %v4425 = vpop.xlane.xlu0 %4424
        %v4426 = vmul.f32 %v4416, %v2424
        %v4427 = vmul.f32 %v4419, %v2424
        %v4428 = vmul.f32 %v4422, %v2424
        %v4429 = vmul.f32 %v4425, %v2424
        %v4430 = vsub.f32 %v4410, %v4426
        %v4431 = vsub.f32 %v4411, %v4427
        %v4432 = vsub.f32 %v4412, %v4428
        %v4433 = vsub.f32 %v4413, %v4429
        %v4434 = vmul.f32 %v4430, %v4430
        %v4435 = vmul.f32 %v4431, %v4431
        %v4436 = vmul.f32 %v4432, %v4432
        %v4437 = vmul.f32 %v4433, %v4433
        %v4438 = vsel %vm258, %v4434, 0.0
        %4439 = vadd.xlane.f32.xlu0 %v4438
        %v4440 = vpop.xlane.xlu0 %4439
        %v4441 = vsel %vm258, %v4435, 0.0
        %4442 = vadd.xlane.f32.xlu0 %v4441
        %v4443 = vpop.xlane.xlu0 %4442
        %v4444 = vsel %vm258, %v4436, 0.0
        %4445 = vadd.xlane.f32.xlu0 %v4444
        %v4446 = vpop.xlane.xlu0 %4445
        %v4447 = vsel %vm258, %v4437, 0.0
        %4448 = vadd.xlane.f32.xlu0 %v4447
        %v4449 = vpop.xlane.xlu0 %4448
        %v4450 = vmul.f32 %v4440, %v2424
        %v4451 = vmul.f32 %v4443, %v2424
        %v4452 = vmul.f32 %v4446, %v2424
        %v4453 = vmul.f32 %v4449, %v2424
        %v4454 = vadd.f32 %v4450, 1e-05
        %v4455 = vadd.f32 %v4451, 1e-05
        %v4456 = vadd.f32 %v4452, 1e-05
        %v4457 = vadd.f32 %v4453, 1e-05
        %v4458 = vrsqrt.pop %v4454
        %v4459 = vrsqrt.pop %v4455
        %v4460 = vrsqrt.pop %v4456
        %v4461 = vrsqrt.pop %v4457
        %v4462 = vmul.f32 %v4430, %v4458
        %v4463 = vmul.f32 %v4431, %v4459
        %v4464 = vmul.f32 %v4432, %v4460
        %v4465 = vmul.f32 %v4433, %v4461
        %v4466 = vlaneseq
        %v4467 = vshrl.u32 %v4466, 7
        %v4468 = vsub.s32 4, %v4467
        %v4469 = vrot.slane %v252, %v4468
        %v4470 = vmul.f32 %v4462, %v4469
        %v4471 = vmul.f32 %v4463, %v4469
        %v4472 = vmul.f32 %v4464, %v4469
        %v4473 = vmul.f32 %v4465, %v4469
        %v4474 = vlaneseq
        %v4475 = vshrl.u32 %v4474, 7
        %v4476 = vsub.s32 5, %v4475
        %v4477 = vrot.slane %v252, %v4476
        %v4478 = vadd.f32 %v4470, %v4477
        %v4479 = vadd.f32 %v4471, %v4477
        %v4480 = vadd.f32 %v4472, %v4477
        %v4481 = vadd.f32 %v4473, %v4477
        %v4482 = vld [vmem:[#allocation2 + $0x218] sm:$0xff]
        %v4483 = vld [vmem:[#allocation2 + $0x220] sm:$0xff]
        %v4484 = vld [vmem:[#allocation2 + $0x228] sm:$0xff]
        %v4485 = vld [vmem:[#allocation2 + $0x230] sm:$0xff]
        %v4486 = vlaneseq
        %v4487 = vshrl.u32 %v4486, 7
        %v4488 = vsub.s32 0, %v4487
        %v4489 = vrot.slane %v253, %v4488
        %v4491 = vsel %vm258, %v4478, 0
        %v4494 = vsel %vm258, %v4479, 0
        %v4497 = vsel %vm258, %v4480, 0
        %v4500 = vsel %vm258, %v4481, 0
        %4502 = vmatprep.subr.mxu0 0.0
        %4503 = vmatpush1.msra.mxu0 %v4482
        %4504 = vmatprep.subr.mxu0 0.0
        %4505 = vmatpush1.msra.mxu0 %v4483
        %4506 = vmatprep.subr.mxu0 0.0
        %4507 = vmatpush1.msra.mxu0 %v4484
        %4508 = vmatprep.subr.mxu0 0.0
        %4509 = vmatpush1.msra.mxu0 %v4485
        %4510 = vmatprep.subr.mxu0 0.0
        %4511 = vmatpush1.msra.mxu0 0.0
        %4512 = vmatprep.subr.mxu0 0.0
        %4513 = vmatpush1.msra.mxu0 0.0
        %4514 = vmatprep.subr.mxu0 0.0
        %4515 = vmatpush1.msra.mxu0 0.0
        %4516 = vmatprep.subr.mxu0 0.0
        %4517 = vmatpush1.msra.mxu0 0.0
        %4518 = vmatprep.subr.mxu0 0.0
        %4519 = vmatpush1.msra.mxu0 0.0
        %4520 = vmatprep.subr.mxu0 0.0
        %4521 = vmatpush1.msra.mxu0 0.0
        %4522 = vmatprep.subr.mxu0 0.0
        %4523 = vmatpush1.msra.mxu0 0.0
        %4524 = vmatprep.subr.mxu0 0.0
        %4525 = vmatpush1.msra.mxu0 0.0
        %4526 = vmatprep.subr.mxu0 0.0
        %4527 = vmatpush1.msra.mxu0 0.0
        %4528 = vmatprep.subr.mxu0 0.0
        %4529 = vmatpush1.msra.mxu0 0.0
        %4530 = vmatprep.subr.mxu0 0.0
        %4531 = vmatpush1.msra.mxu0 0.0
        %4532 = vmatprep.subr.mxu0 0.0
        %4533 = vmatpush1.msra.mxu0 0.0
        %4534 = vmatprep.subr.mxu0 0.0
        %4535 = vmatpush1.msra.mxu0 0.0
        %4536 = vmatprep.subr.mxu0 0.0
        %4537 = vmatpush1.msra.mxu0 0.0
        %4538 = vmatprep.subr.mxu0 0.0
        %4539 = vmatpush1.msra.mxu0 0.0
        %4540 = vmatprep.subr.mxu0 0.0
        %4541 = vmatpush1.msra.mxu0 0.0
        %4542 = vmatprep.subr.mxu0 0.0
        %4543 = vmatpush1.msra.mxu0 0.0
        %4544 = vmatprep.subr.mxu0 0.0
        %4545 = vmatpush1.msra.mxu0 0.0
        %4546 = vmatprep.subr.mxu0 0.0
        %4547 = vmatpush1.msra.mxu0 0.0
        %4548 = vmatprep.subr.mxu0 0.0
        %4549 = vmatpush1.msra.mxu0 0.0
        %4550 = vmatprep.subr.mxu0 0.0
        %4551 = vmatpush1.msra.mxu0 0.0
        %4552 = vmatprep.subr.mxu0 0.0
        %4553 = vmatpush1.msra.mxu0 0.0
        %4554 = vmatprep.subr.mxu0 0.0
        %4555 = vmatpush1.msra.mxu0 0.0
        %4556 = vmatprep.subr.mxu0 0.0
        %4557 = vmatpush1.msra.mxu0 0.0
        %4558 = vmatprep.subr.mxu0 0.0
        %4559 = vmatpush1.msra.mxu0 0.0
        %4560 = vmatprep.subr.mxu0 0.0
        %4561 = vmatpush1.msra.mxu0 0.0
        %4562 = vmatprep.subr.mxu0 0.0
        %4563 = vmatpush1.msra.mxu0 0.0
        %4564 = vmatprep.subr.mxu0 0.0
        %4565 = vmatpush1.msra.mxu0 0.0
        %4566 = vmatprep.mubr.f32.mxu0 0.0
        %4567 = vmatmul.mubr.f32.gmra.mrb[0].mxu0 %v4491
        %v4568 = vpop.f32.mrb[0].mxu0
        %v4569 = vadd.f32 %v4489, %v4568
        %v4570 = vpop.f32.mrb[0].mxu0
        %4571 = vmatprep.mubr.f32.mxu0 0.0
        %4572 = vmatmul.mubr.f32.gmra.mrb[0].mxu0 %v4494
        %v4573 = vpop.f32.mrb[0].mxu0
        %v4574 = vadd.f32 %v4489, %v4573
        %v4575 = vpop.f32.mrb[0].mxu0
        %4576 = vmatprep.mubr.f32.mxu0 0.0
        %4577 = vmatmul.mubr.f32.gmra.mrb[0].mxu0 %v4497
        %v4578 = vpop.f32.mrb[0].mxu0
        %v4579 = vadd.f32 %v4489, %v4578
        %v4580 = vpop.f32.mrb[0].mxu0
        %4581 = vmatprep.mubr.f32.mxu0 0.0
        %4582 = vmatmul.mubr.f32.gmra.mrb[0].mxu0 %v4500
        %v4583 = vpop.f32.mrb[0].mxu0
        %v4584 = vadd.f32 %v4489, %v4583
        %v4585 = vpop.f32.mrb[0].mxu0
        %4586 = vdwg.mxu0
        %v4587 = vadd.f32 %v4478, %v4569
        %v4588 = vadd.f32 %v4479, %v4574
        %v4589 = vadd.f32 %v4480, %v4579
        %v4590 = vadd.f32 %v4481, %v4584
        %v4591 = vsel %vm258, %v4587, 0.0
        %4592 = vadd.xlane.f32.xlu0 %v4591
        %v4593 = vpop.xlane.xlu0 %4592
        %v4594 = vsel %vm258, %v4588, 0.0
        %4595 = vadd.xlane.f32.xlu0 %v4594
        %v4596 = vpop.xlane.xlu0 %4595
        %v4597 = vsel %vm258, %v4589, 0.0
        %4598 = vadd.xlane.f32.xlu0 %v4597
        %v4599 = vpop.xlane.xlu0 %4598
        %v4600 = vsel %vm258, %v4590, 0.0
        %4601 = vadd.xlane.f32.xlu0 %v4600
        %v4602 = vpop.xlane.xlu0 %4601
        %v4603 = vmul.f32 %v4593, %v2424
        %v4604 = vmul.f32 %v4596, %v2424
        %v4605 = vmul.f32 %v4599, %v2424
        %v4606 = vmul.f32 %v4602, %v2424
        %v4607 = vsub.f32 %v4587, %v4603
        %v4608 = vsub.f32 %v4588, %v4604
        %v4609 = vsub.f32 %v4589, %v4605
        %v4610 = vsub.f32 %v4590, %v4606
        %v4611 = vmul.f32 %v4607, %v4607
        %v4612 = vmul.f32 %v4608, %v4608
        %v4613 = vmul.f32 %v4609, %v4609
        %v4614 = vmul.f32 %v4610, %v4610
        %v4615 = vsel %vm258, %v4611, 0.0
        %4616 = vadd.xlane.f32.xlu0 %v4615
        %v4617 = vpop.xlane.xlu0 %4616
        %v4618 = vsel %vm258, %v4612, 0.0
        %4619 = vadd.xlane.f32.xlu0 %v4618
        %v4620 = vpop.xlane.xlu0 %4619
        %v4621 = vsel %vm258, %v4613, 0.0
        %4622 = vadd.xlane.f32.xlu0 %v4621
        %v4623 = vpop.xlane.xlu0 %4622
        %v4624 = vsel %vm258, %v4614, 0.0
        %4625 = vadd.xlane.f32.xlu0 %v4624
        %v4626 = vpop.xlane.xlu0 %4625
        %v4627 = vmul.f32 %v4617, %v2424
        %v4628 = vmul.f32 %v4620, %v2424
        %v4629 = vmul.f32 %v4623, %v2424
        %v4630 = vmul.f32 %v4626, %v2424
        %v4631 = vadd.f32 %v4627, 1e-05
        %v4632 = vadd.f32 %v4628, 1e-05
        %v4633 = vadd.f32 %v4629, 1e-05
        %v4634 = vadd.f32 %v4630, 1e-05
        %v4635 = vrsqrt.pop %v4631
        %v4636 = vrsqrt.pop %v4632
        %v4637 = vrsqrt.pop %v4633
        %v4638 = vrsqrt.pop %v4634
        %v4639 = vmul.f32 %v4607, %v4635
        %v4640 = vmul.f32 %v4608, %v4636
        %v4641 = vmul.f32 %v4609, %v4637
        %v4642 = vmul.f32 %v4610, %v4638
        %v4643 = vlaneseq
        %v4644 = vshrl.u32 %v4643, 7
        %v4645 = vsub.s32 6, %v4644
        %v4646 = vrot.slane %v252, %v4645
        %v4647 = vmul.f32 %v4639, %v4646
        %v4648 = vmul.f32 %v4640, %v4646
        %v4649 = vmul.f32 %v4641, %v4646
        %v4650 = vmul.f32 %v4642, %v4646
        %v4651 = vlaneseq
        %v4652 = vshrl.u32 %v4651, 7
        %v4653 = vsub.s32 7, %v4652
        %v4654 = vrot.slane %v252, %v4653
        %v4655 = vadd.f32 %v4647, %v4654
        %v4656 = vadd.f32 %v4648, %v4654
        %v4657 = vadd.f32 %v4649, %v4654
        %v4658 = vadd.f32 %v4650, %v4654
        %4659 = vst.msk [vmem:[%s207] sm:$0xff] %vm258, %v4655
        %4660 = vst.msk [vmem:[%s207 + $0x8] sm:$0xff] %vm258, %v4656
        %4661 = vst.msk [vmem:[%s207 + $0x10] sm:$0xff] %vm258, %v4657
        %4662 = vst.msk [vmem:[%s207 + $0x18] sm:$0xff] %vm258, %v4658
        %s4663 = smul.u32 4, %s15
        %p4664 = scmp.lt.s32.totalorder %s4663, 7
        %s4665 = scalar_select %p4664, %s4663, 7
        %s4666 = smul.addr %s4665, 8
        %s4667 = scalar_lea.vmem %s3, %s4666
        // Predicated region
        $region37: #{decoder_layer_pallas.1} parent=31 // pred_check
          %p4668 = pneg %p106
        $region38: #{decoder_layer_pallas.1} parent=31 // pred_check_branch
          %4670 = sbr.rel (%p4668) target = $region40
        $region39: #{decoder_layer_pallas.1} parent=31 // pred_region
          %s4671 = smul.u32 4, %s15
        $region40: #{decoder_layer_pallas.1} parent=31 // pred_fallthru
          _
      $region32: #{decoder_layer_pallas.1} parent=5 // pred_fallthru
        _
      %p4672 = scmp.le.s32.totalorder 2, %s10
      // Predicated region
      $region41: #{decoder_layer_pallas.1} parent=5 // pred_check
        %p4673 = pneg %p4672
      $region42: #{decoder_layer_pallas.1} parent=5 // pred_check_branch
        %4675 = sbr.rel (%p4673) target = $region44
      $region43: #{decoder_layer_pallas.1} parent=5 // pred_region
        %s4676 = ssub.s32 %s10, 2
        // Predicated region
        $region45: #{decoder_layer_pallas.1} parent=43 // pred_check
          %p4677 = pneg %p112
        $region46: #{decoder_layer_pallas.1} parent=43 // pred_check_branch
          %4679 = sbr.rel (%p4677) target = $region48
        $region47: #{decoder_layer_pallas.1} parent=43 // pred_region
          %s4680 = smul.u32 4, %s16
          %p4681 = scmp.lt.s32.totalorder %s4680, 7
          %s4682 = scalar_select %p4681, %s4680, 7
          %s4683 = smul.addr %s4682, 8
          %s4684 = scalar_lea.vmem %s3, %s4683
        $region48: #{decoder_layer_pallas.1} parent=43 // pred_fallthru
          _
      $region44: #{decoder_layer_pallas.1} parent=5 // pred_fallthru
        _
    $region6: #{decoder_layer_pallas.1} parent=1 // loop_footer
      %s14 = sadd.s32 1, %s10
    $region7: #{decoder_layer_pallas.1} parent=1 // loop_footer_branch
      %9 = sbr.rel target = $region3
    $region8: #{decoder_layer_pallas.1} parent=1 // loop_exit
      _
    %4685 = vsyncpa [#allocation3], 1
    %s4686 = scalar_lea.sflag [#allocation3], 1
    %4687 = vsyncpa %s4686, 1

</llo_original>
